<compile_context>
chip_gen: v6e
topology: v6e:2x2x1
jax: 0.10.0
libtpu: 0.0.40
codegen_flags: <defaults>
</compile_context>

<pallas_src>
import functools

import jax
import jax.numpy as jnp
from jax.experimental import pallas as pl
from jax.experimental.pallas import tpu as pltpu

_LANE = 128


def _round_up(x, m):
    return (x + m - 1) // m * m


def _pick_chunk(seq, max_chunk=64):
    """Largest divisor of seq that is <= max_chunk (so the seq grid is exact)."""
    if seq <= max_chunk:
        return seq
    for t in range(max_chunk, 0, -1):
        if seq % t == 0:
            return t
    return 1


# -----------------------------------------------------------------------------
# Fused kernel.  Grid streams the sequence in chunks; h/c state persists in
# VMEM scratch across grid steps.
# Ref order: inputs  = x_chunk, h0, c0, (w_ih_t, w_hh_t, bias)*n_layers,
#                      fc_w_t, fc_b
#            outputs = sig_pad, h_n, c_n
#            scratch = h_scr, c_scr, act_scr (chunk acts), pre_scr (chunk proj)
# -----------------------------------------------------------------------------
def _sentiment_fused_kernel(*refs, n_layers, chunk, hidden):
    H = hidden
    x_ref, h0_ref, c0_ref = refs[0], refs[1], refs[2]
    layer_refs = refs[3:3 + 3 * n_layers]
    base = 3 + 3 * n_layers
    fcw_ref, fcb_ref = refs[base], refs[base + 1]
    sig_ref, hn_ref, cn_ref = refs[base + 2], refs[base + 3], refs[base + 4]
    h_scr, c_scr, act_scr, pre_scr = refs[base + 5:base + 9]

    step = pl.program_id(0)
    batch_p = h_scr.shape[1]

    @pl.when(step == 0)
    def _():
        h_scr[...] = h0_ref[...]
        c_scr[...] = c0_ref[...]

    for l in range(n_layers):                       # static unroll over layers
        w_ih = layer_refs[3 * l][...]               # (in_dim, 4H) bf16
        w_hh = layer_refs[3 * l + 1][...]           # (H, 4H)      bf16
        b = layer_refs[3 * l + 2][...]              # (1, 4H)      f32
        mm_dtype = w_hh.dtype

        # --- one big MXU matmul for the whole chunk's input projection -------
        if l == 0:
            xin = x_ref[...]                                    # (T, B, E) bf16
        else:
            xin = act_scr[...].astype(mm_dtype)                 # (T, B, H)
        in_dim = xin.shape[-1]
        pre = jnp.dot(xin.reshape(chunk * batch_p, in_dim), w_ih,
                      preferred_element_type=jnp.float32)
        pre_scr[...] = (pre + b).reshape(chunk, batch_p, 4 * H)  # bias folded in

        write_act = l < (n_layers - 1)

        # --- serialized recurrence over the chunk (fori_loop, small unroll) --
        def body(t, carry, _w_hh=w_hh, _write_act=write_act, _mm=mm_dtype):
            h, c = carry
            gates = pre_scr[t] + jnp.dot(h.astype(_mm), _w_hh,
                                         preferred_element_type=jnp.float32)
            # gate columns pre-permuted to [i, f, o, g] at init:
            ifo = jax.nn.sigmoid(gates[:, :3 * H])   # one EUP push for i,f,o
            g_g = jnp.tanh(gates[:, 3 * H:])
            i_g = ifo[:, 0 * H:1 * H]
            f_g = ifo[:, 1 * H:2 * H]
            o_g = ifo[:, 2 * H:3 * H]
            c = f_g * c + i_g * g_g
            h = o_g * jnp.tanh(c)
            if _write_act:                           # skip stores for top layer
                act_scr[t] = h
            return (h, c)

        h_f, c_f = jax.lax.fori_loop(0, chunk, body, (h_scr[l], c_scr[l]),
                                     unroll=min(chunk, 8))
        h_scr[l] = h_f
        c_scr[l] = c_f

    # --- finalize: head on the top layer's final hidden state -----------------
    @pl.when(step == pl.num_programs(0) - 1)
    def _():
        hn_ref[...] = h_scr[...]
        cn_ref[...] = c_scr[...]
        h_last = h_scr[n_layers - 1]
        sig_ref[...] = jax.nn.sigmoid(
            jnp.dot(h_last.astype(fcw_ref.dtype), fcw_ref[...],
                    preferred_element_type=jnp.float32) + fcb_ref[...])


# -----------------------------------------------------------------------------
# Forward pass (mirrors SentimentRNN.forward in eval mode).
# -----------------------------------------------------------------------------
@functools.partial(jax.jit, static_argnames=("output_size",))
def sentiment_rnn_forward(params, tokens, hidden, *, output_size=1):
    """tokens: (batch, seq) int32; hidden: (h0, c0) each (n_layers, batch, H)."""
    h0, c0 = hidden
    batch, seq = tokens.shape
    n_layers, _, H = h0.shape
    E = params["embed"].shape[1]
    fcw = params["fc_w_t_pad"]
    out_pad = fcw.shape[-1]
    mm_dtype = fcw.dtype

    # Embedding lookup (data-dependent gather; plain JAX glue) -> (seq, batch, E)
    # TODO(synk): move the gather in-kernel (scalar-prefetched tokens + per-step
    # row DMA) once seq*batch*E is large enough for the HBM round-trip to matter.
    x = jnp.take(params["embed"], tokens, axis=0)
    x = jnp.transpose(x, (1, 0, 2))

    # Pad batch to the sublane packing of the matmul dtype (16 rows for bf16).
    sub = 16 if mm_dtype.itemsize == 2 else 8
    batch_p = _round_up(max(batch, sub), sub)
    pb = batch_p - batch
    x_p = jnp.pad(x, ((0, 0), (0, pb), (0, 0))).astype(mm_dtype)
    h0_p = jnp.pad(h0, ((0, 0), (0, pb), (0, 0))).astype(jnp.float32)
    c0_p = jnp.pad(c0, ((0, 0), (0, pb), (0, 0))).astype(jnp.float32)

    chunk = _pick_chunk(seq)
    n_chunks = seq // chunk

    layer_inputs, layer_specs = [], []
    for lp in params["lstm"]:
        layer_inputs += [lp["w_ih_t"], lp["w_hh_t"], lp["bias"]]
        layer_specs += [
            pl.BlockSpec(lp["w_ih_t"].shape, lambda s: (0, 0)),   # resident
            pl.BlockSpec(lp["w_hh_t"].shape, lambda s: (0, 0)),   # resident
            pl.BlockSpec(lp["bias"].shape, lambda s: (0, 0)),     # resident
        ]

    kernel = functools.partial(_sentiment_fused_kernel,
                               n_layers=n_layers, chunk=chunk, hidden=H)

    out_shapes = (
        jax.ShapeDtypeStruct((batch_p, out_pad), jnp.float32),        # sigmoid(fc(h_last))
        jax.ShapeDtypeStruct((n_layers, batch_p, H), jnp.float32),    # h_n
        jax.ShapeDtypeStruct((n_layers, batch_p, H), jnp.float32),    # c_n
    )

    grid_spec = pltpu.PrefetchScalarGridSpec(
        num_scalar_prefetch=0,
        grid=(n_chunks,),
        in_specs=[
            pl.BlockSpec((chunk, batch_p, E), lambda s: (s, 0, 0)),   # streamed x chunk
            pl.BlockSpec((n_layers, batch_p, H), lambda s: (0, 0, 0)),  # h0 (resident)
            pl.BlockSpec((n_layers, batch_p, H), lambda s: (0, 0, 0)),  # c0 (resident)
        ] + layer_specs + [
            pl.BlockSpec((H, out_pad), lambda s: (0, 0)),             # fc W^T (lane-padded)
            pl.BlockSpec((1, out_pad), lambda s: (0, 0)),             # fc bias
        ],
        out_specs=[
            pl.BlockSpec((batch_p, out_pad), lambda s: (0, 0)),
            pl.BlockSpec((n_layers, batch_p, H), lambda s: (0, 0, 0)),
            pl.BlockSpec((n_layers, batch_p, H), lambda s: (0, 0, 0)),
        ],
        scratch_shapes=[
            pltpu.VMEM((n_layers, batch_p, H), jnp.float32),          # h state (persists)
            pltpu.VMEM((n_layers, batch_p, H), jnp.float32),          # c state (persists)
            pltpu.VMEM((chunk, batch_p, H), jnp.float32),             # inter-layer acts (1 chunk)
            pltpu.VMEM((chunk, batch_p, 4 * H), jnp.float32),         # precomputed input proj
        ],
    )

    # TODO(synk): on v7x, add a leading 'parallel' batch grid axis (>=2 sublane
    # blocks) to use the second TensorCore; single-buffer the resident weight
    # inputs via pipeline_mode once pl.Buffered is settled for this jax version.
    sig_p, h_n_p, c_n_p = pl.pallas_call(
        kernel,
        out_shape=out_shapes,
        grid_spec=grid_spec,
        compiler_params=pltpu.CompilerParams(
            dimension_semantics=("arbitrary",),
            vmem_limit_bytes=32 * 1024 * 1024),
    )(x_p, h0_p, c0_p, *layer_inputs, params["fc_w_t_pad"], params["fc_b_pad"])

    # PyTorch: sig(fc(r_out.view(-1,H))).view(batch,-1)[:, -1]
    #        == sigmoid(fc(h_last_timestep_of_top_layer))[:, output_size-1]
    sig_out = sig_p[:batch, output_size - 1]
    h_n = h_n_p[:, :batch]
    c_n = c_n_p[:, :batch]
    return sig_out, (h_n, c_n)


# -----------------------------------------------------------------------------
# Deterministic parameter init (shapes dictated by the nn.Module __init__).
# Gate rows generated in PyTorch [i, f, g, o] order, then permuted to
# [i, f, o, g] so the kernel runs one sigmoid over a contiguous 3H slice.
# -----------------------------------------------------------------------------
def init_params(key, vocab_size, output_size, embedding_dim, hidden_dim, n_layers,
                matmul_dtype=jnp.bfloat16):
    keys = jax.random.split(key, 3 + 4 * n_layers)
    params = {}
    params["embed"] = 0.1 * jax.random.normal(
        keys[0], (vocab_size, embedding_dim), jnp.float32)

    H = hidden_dim

    def reorder(w4h):  # rows [i, f, g, o] -> [i, f, o, g]
        i, f, g, o = jnp.split(w4h, 4, axis=0)
        return jnp.concatenate([i, f, o, g], axis=0)

    lstm = []
    kidx = 1
    for l in range(n_layers):
        in_dim = embedding_dim if l == 0 else hidden_dim
        w_ih = 0.1 * jax.random.normal(keys[kidx], (4 * H, in_dim), jnp.float32)
        w_hh = 0.1 * jax.random.normal(keys[kidx + 1], (4 * H, H), jnp.float32)
        b_ih = 0.1 * jax.random.normal(keys[kidx + 2], (4 * H,), jnp.float32)
        b_hh = 0.1 * jax.random.normal(keys[kidx + 3], (4 * H,), jnp.float32)
        kidx += 4
        lstm.append({
            "w_ih_t": reorder(w_ih).T.astype(matmul_dtype),      # (in_dim, 4H)
            "w_hh_t": reorder(w_hh).T.astype(matmul_dtype),      # (H, 4H)
            "bias": reorder((b_ih + b_hh).reshape(4 * H, 1)).reshape(1, 4 * H),
        })
    params["lstm"] = lstm

    fc_w = 0.1 * jax.random.normal(keys[kidx], (output_size, hidden_dim), jnp.float32)
    fc_b = 0.1 * jax.random.normal(keys[kidx + 1], (output_size,), jnp.float32)
    out_pad = _round_up(output_size, _LANE)
    params["fc_w_t_pad"] = jnp.pad(
        fc_w.T, ((0, 0), (0, out_pad - output_size))).astype(matmul_dtype)
    params["fc_b_pad"] = jnp.pad(fc_b.reshape(1, output_size),
                                 ((0, 0), (0, out_pad - output_size)))
    return params


if __name__ == "__main__":
    vocab_size, output_size = 50, 1
    embedding_dim, hidden_dim, n_layers = 32, 32, 2
    batch, seq = 2, 8

    key = jax.random.PRNGKey(0)
    pkey, tkey = jax.random.split(key)
    params = init_params(pkey, vocab_size, output_size,
                         embedding_dim, hidden_dim, n_layers)

    tokens = jax.random.randint(tkey, (batch, seq), 0, vocab_size, dtype=jnp.int32)
    # init_hidden: zeros of shape (n_layers, batch, hidden_dim)
    h0 = jnp.zeros((n_layers, batch, hidden_dim), jnp.float32)
    c0 = jnp.zeros((n_layers, batch, hidden_dim), jnp.float32)

    sig_out, (h_n, c_n) = sentiment_rnn_forward(
        params, tokens, (h0, c0), output_size=output_size)
    jax.block_until_ready((sig_out, h_n, c_n))

    assert sig_out.shape == (batch,)
    assert h_n.shape == (n_layers, batch, hidden_dim)
    assert c_n.shape == (n_layers, batch, hidden_dim)
    assert bool(jnp.all(jnp.isfinite(sig_out)))
    print("KERNEL_OK")
</pallas_src>

<mosaic_0001>
module attributes {stable_mosaic.version = 11 : i64} {
  func.func @_sentiment_fused_kernel(%arg0: i32, %arg1: memref<8x16x32xbf16, #tpu.memory_space<vmem>>, %arg2: memref<2x16x32xf32, #tpu.memory_space<vmem>>, %arg3: memref<2x16x32xf32, #tpu.memory_space<vmem>>, %arg4: memref<32x128xbf16, #tpu.memory_space<vmem>>, %arg5: memref<32x128xbf16, #tpu.memory_space<vmem>>, %arg6: memref<1x128xf32, #tpu.memory_space<vmem>>, %arg7: memref<32x128xbf16, #tpu.memory_space<vmem>>, %arg8: memref<32x128xbf16, #tpu.memory_space<vmem>>, %arg9: memref<1x128xf32, #tpu.memory_space<vmem>>, %arg10: memref<32x128xbf16, #tpu.memory_space<vmem>>, %arg11: memref<1x128xf32, #tpu.memory_space<vmem>>, %arg12: memref<16x128xf32, #tpu.memory_space<vmem>>, %arg13: memref<2x16x32xf32, #tpu.memory_space<vmem>>, %arg14: memref<2x16x32xf32, #tpu.memory_space<vmem>>, %arg15: memref<2x16x32xf32, #tpu.memory_space<vmem>>, %arg16: memref<2x16x32xf32, #tpu.memory_space<vmem>>, %arg17: memref<8x16x32xf32, #tpu.memory_space<vmem>>, %arg18: memref<8x16x128xf32, #tpu.memory_space<vmem>>) attributes {dimension_semantics = [#tpu.dimension_semantics<arbitrary>], iteration_bounds = array<i64: 1>, scalar_prefetch = 0 : i64, scratch_operands = 4 : i64, tpu.core_type = #tpu.core_type<tc>, window_params = [{transform_indices = @transform_0, window_bounds = array<i64: 8, 16, 32>}, {pipeline_mode = #tpu.pipeline_mode<synchronous>, transform_indices = @transform_1, window_bounds = array<i64: 2, 16, 32>}, {pipeline_mode = #tpu.pipeline_mode<synchronous>, transform_indices = @transform_2, window_bounds = array<i64: 2, 16, 32>}, {pipeline_mode = #tpu.pipeline_mode<synchronous>, transform_indices = @transform_3, window_bounds = array<i64: 32, 128>}, {pipeline_mode = #tpu.pipeline_mode<synchronous>, transform_indices = @transform_4, window_bounds = array<i64: 32, 128>}, {pipeline_mode = #tpu.pipeline_mode<synchronous>, transform_indices = @transform_5, window_bounds = array<i64: 1, 128>}, {pipeline_mode = #tpu.pipeline_mode<synchronous>, transform_indices = @transform_6, window_bounds = array<i64: 32, 128>}, {pipeline_mode = #tpu.pipeline_mode<synchronous>, transform_indices = @transform_7, window_bounds = array<i64: 32, 128>}, {pipeline_mode = #tpu.pipeline_mode<synchronous>, transform_indices = @transform_8, window_bounds = array<i64: 1, 128>}, {pipeline_mode = #tpu.pipeline_mode<synchronous>, transform_indices = @transform_9, window_bounds = array<i64: 32, 128>}, {pipeline_mode = #tpu.pipeline_mode<synchronous>, transform_indices = @transform_10, window_bounds = array<i64: 1, 128>}, {pipeline_mode = #tpu.pipeline_mode<synchronous>, transform_indices = @transform_11, window_bounds = array<i64: 16, 128>}, {pipeline_mode = #tpu.pipeline_mode<synchronous>, transform_indices = @transform_12, window_bounds = array<i64: 2, 16, 32>}, {pipeline_mode = #tpu.pipeline_mode<synchronous>, transform_indices = @transform_13, window_bounds = array<i64: 2, 16, 32>}]} {
    %c0_i32 = arith.constant 0 : i32
    %0 = arith.cmpi eq, %arg0, %c0_i32 : i32
    %1 = arith.extui %0 : i1 to i32
    %c0_i32_0 = arith.constant 0 : i32
    %2 = arith.cmpi ne, %1, %c0_i32_0 : i32
    scf.if %2 {
      %c0_140 = arith.constant 0 : index
      %c0_141 = arith.constant 0 : index
      %c0_142 = arith.constant 0 : index
      %431 = vector.load %arg2[%c0_140, %c0_141, %c0_142] : memref<2x16x32xf32, #tpu.memory_space<vmem>>, vector<2x16x32xf32>
      %c0_143 = arith.constant 0 : index
      %c0_144 = arith.constant 0 : index
      %c0_145 = arith.constant 0 : index
      %432 = vector.load %arg15[%c0_143, %c0_144, %c0_145] : memref<2x16x32xf32, #tpu.memory_space<vmem>>, vector<2x16x32xf32>
      tpu.vector_store %arg15[%c0_143, %c0_144, %c0_145], %431 {strides = array<i32>} : memref<2x16x32xf32, #tpu.memory_space<vmem>>, vector<2x16x32xf32>,
      %c0_146 = arith.constant 0 : index
      %c0_147 = arith.constant 0 : index
      %c0_148 = arith.constant 0 : index
      %433 = vector.load %arg3[%c0_146, %c0_147, %c0_148] : memref<2x16x32xf32, #tpu.memory_space<vmem>>, vector<2x16x32xf32>
      %c0_149 = arith.constant 0 : index
      %c0_150 = arith.constant 0 : index
      %c0_151 = arith.constant 0 : index
      %434 = vector.load %arg16[%c0_149, %c0_150, %c0_151] : memref<2x16x32xf32, #tpu.memory_space<vmem>>, vector<2x16x32xf32>
      tpu.vector_store %arg16[%c0_149, %c0_150, %c0_151], %433 {strides = array<i32>} : memref<2x16x32xf32, #tpu.memory_space<vmem>>, vector<2x16x32xf32>,
    } else {
    }
    %c0 = arith.constant 0 : index
    %c0_1 = arith.constant 0 : index
    %3 = vector.load %arg4[%c0, %c0_1] : memref<32x128xbf16, #tpu.memory_space<vmem>>, vector<32x128xbf16>
    %c0_2 = arith.constant 0 : index
    %c0_3 = arith.constant 0 : index
    %4 = vector.load %arg5[%c0_2, %c0_3] : memref<32x128xbf16, #tpu.memory_space<vmem>>, vector<32x128xbf16>
    %c0_4 = arith.constant 0 : index
    %c0_5 = arith.constant 0 : index
    %5 = vector.load %arg6[%c0_4, %c0_5] : memref<1x128xf32, #tpu.memory_space<vmem>>, vector<1x128xf32>
    %c0_6 = arith.constant 0 : index
    %c0_7 = arith.constant 0 : index
    %c0_8 = arith.constant 0 : index
    %6 = vector.load %arg1[%c0_6, %c0_7, %c0_8] : memref<8x16x32xbf16, #tpu.memory_space<vmem>>, vector<8x16x32xbf16>
    %7 = vector.shape_cast %6 : vector<8x16x32xbf16> to vector<128x32xbf16>
    %cst = arith.constant dense<0.000000e+00> : vector<128x128xf32>
    %8 = tpu.matmul %7, %3, %cst {dimension_numbers = #tpu.dot_dimension_numbers<[1], [0], [0], [1], [0, 0, 1, 1], [], []>} : vector<128x32xbf16>, vector<32x128xbf16>, vector<128x128xf32> -> vector<128x128xf32>
    %9 = vector.broadcast %5 : vector<1x128xf32> to vector<128x128xf32>
    %10 = arith.addf %8, %9 : vector<128x128xf32>
    %11 = vector.shape_cast %10 : vector<128x128xf32> to vector<8x16x128xf32>
    %c0_9 = arith.constant 0 : index
    %c0_10 = arith.constant 0 : index
    %c0_11 = arith.constant 0 : index
    %12 = vector.load %arg18[%c0_9, %c0_10, %c0_11] : memref<8x16x128xf32, #tpu.memory_space<vmem>>, vector<8x16x128xf32>
    tpu.vector_store %arg18[%c0_9, %c0_10, %c0_11], %11 {strides = array<i32>} : memref<8x16x128xf32, #tpu.memory_space<vmem>>, vector<8x16x128xf32>,
    %c0_12 = arith.constant 0 : index
    %c0_13 = arith.constant 0 : index
    %c0_14 = arith.constant 0 : index
    %13 = vector.load %arg15[%c0_12, %c0_13, %c0_14] : memref<2x16x32xf32, #tpu.memory_space<vmem>>, vector<1x16x32xf32>
    %14 = vector.shape_cast %13 : vector<1x16x32xf32> to vector<16x32xf32>
    %c0_15 = arith.constant 0 : index
    %c0_16 = arith.constant 0 : index
    %c0_17 = arith.constant 0 : index
    %15 = vector.load %arg16[%c0_15, %c0_16, %c0_17] : memref<2x16x32xf32, #tpu.memory_space<vmem>>, vector<1x16x32xf32>
    %16 = vector.shape_cast %15 : vector<1x16x32xf32> to vector<16x32xf32>
    %c0_i32_18 = arith.constant 0 : i32
    %17 = arith.index_cast %c0_i32_18 : i32 to index
    %c0_19 = arith.constant 0 : index
    %c0_20 = arith.constant 0 : index
    %18 = vector.load %arg18[%17, %c0_19, %c0_20] : memref<8x16x128xf32, #tpu.memory_space<vmem>>, vector<1x16x128xf32>
    %19 = vector.shape_cast %18 : vector<1x16x128xf32> to vector<16x128xf32>
    %20 = arith.truncf %14 : vector<16x32xf32> to vector<16x32xbf16>
    %cst_21 = arith.constant dense<0.000000e+00> : vector<16x128xf32>
    %21 = tpu.matmul %20, %4, %cst_21 {dimension_numbers = #tpu.dot_dimension_numbers<[1], [0], [0], [1], [0, 0, 1, 1], [], []>} : vector<16x32xbf16>, vector<32x128xbf16>, vector<16x128xf32> -> vector<16x128xf32>
    %22 = arith.addf %19, %21 : vector<16x128xf32>
    %23 = vector.extract_strided_slice %22 {offsets = [0, 0], sizes = [16, 96], strides = [1, 1]} : vector<16x128xf32> to vector<16x96xf32>
    %24 = arith.negf %23 : vector<16x96xf32>
    %25 = math.exp %24 : vector<16x96xf32>
    %cst_22 = arith.constant 1.000000e+00 : f32
    %26 = vector.broadcast %cst_22 : f32 to vector<16x96xf32>
    %27 = arith.addf %26, %25 : vector<16x96xf32>
    %28 = arith.divf %26, %27 : vector<16x96xf32>
    %29 = vector.extract_strided_slice %22 {offsets = [0, 96], sizes = [16, 32], strides = [1, 1]} : vector<16x128xf32> to vector<16x32xf32>
    %30 = math.tanh %29 : vector<16x32xf32>
    %31 = vector.extract_strided_slice %28 {offsets = [0, 0], sizes = [16, 32], strides = [1, 1]} : vector<16x96xf32> to vector<16x32xf32>
    %32 = vector.extract_strided_slice %28 {offsets = [0, 32], sizes = [16, 32], strides = [1, 1]} : vector<16x96xf32> to vector<16x32xf32>
    %33 = vector.extract_strided_slice %28 {offsets = [0, 64], sizes = [16, 32], strides = [1, 1]} : vector<16x96xf32> to vector<16x32xf32>
    %34 = arith.mulf %32, %16 : vector<16x32xf32>
    %35 = arith.mulf %31, %30 : vector<16x32xf32>
    %36 = arith.addf %34, %35 : vector<16x32xf32>
    %37 = math.tanh %36 : vector<16x32xf32>
    %38 = arith.mulf %33, %37 : vector<16x32xf32>
    %39 = arith.index_cast %c0_i32_18 : i32 to index
    %c0_23 = arith.constant 0 : index
    %c0_24 = arith.constant 0 : index
    %40 = vector.load %arg17[%39, %c0_23, %c0_24] : memref<8x16x32xf32, #tpu.memory_space<vmem>>, vector<1x16x32xf32>
    %41 = vector.shape_cast %40 : vector<1x16x32xf32> to vector<16x32xf32>
    %42 = vector.shape_cast %38 : vector<16x32xf32> to vector<1x16x32xf32>
    tpu.vector_store %arg17[%39, %c0_23, %c0_24], %42 {strides = array<i32>} : memref<8x16x32xf32, #tpu.memory_space<vmem>>, vector<1x16x32xf32>,
    %c1_i32 = arith.constant 1 : i32
    %43 = arith.index_cast %c1_i32 : i32 to index
    %c0_25 = arith.constant 0 : index
    %c0_26 = arith.constant 0 : index
    %44 = vector.load %arg18[%43, %c0_25, %c0_26] : memref<8x16x128xf32, #tpu.memory_space<vmem>>, vector<1x16x128xf32>
    %45 = vector.shape_cast %44 : vector<1x16x128xf32> to vector<16x128xf32>
    %46 = arith.truncf %38 : vector<16x32xf32> to vector<16x32xbf16>
    %cst_27 = arith.constant dense<0.000000e+00> : vector<16x128xf32>
    %47 = tpu.matmul %46, %4, %cst_27 {dimension_numbers = #tpu.dot_dimension_numbers<[1], [0], [0], [1], [0, 0, 1, 1], [], []>} : vector<16x32xbf16>, vector<32x128xbf16>, vector<16x128xf32> -> vector<16x128xf32>
    %48 = arith.addf %45, %47 : vector<16x128xf32>
    %49 = vector.extract_strided_slice %48 {offsets = [0, 0], sizes = [16, 96], strides = [1, 1]} : vector<16x128xf32> to vector<16x96xf32>
    %50 = arith.negf %49 : vector<16x96xf32>
    %51 = math.exp %50 : vector<16x96xf32>
    %cst_28 = arith.constant 1.000000e+00 : f32
    %52 = vector.broadcast %cst_28 : f32 to vector<16x96xf32>
    %53 = arith.addf %52, %51 : vector<16x96xf32>
    %54 = arith.divf %52, %53 : vector<16x96xf32>
    %55 = vector.extract_strided_slice %48 {offsets = [0, 96], sizes = [16, 32], strides = [1, 1]} : vector<16x128xf32> to vector<16x32xf32>
    %56 = math.tanh %55 : vector<16x32xf32>
    %57 = vector.extract_strided_slice %54 {offsets = [0, 0], sizes = [16, 32], strides = [1, 1]} : vector<16x96xf32> to vector<16x32xf32>
    %58 = vector.extract_strided_slice %54 {offsets = [0, 32], sizes = [16, 32], strides = [1, 1]} : vector<16x96xf32> to vector<16x32xf32>
    %59 = vector.extract_strided_slice %54 {offsets = [0, 64], sizes = [16, 32], strides = [1, 1]} : vector<16x96xf32> to vector<16x32xf32>
    %60 = arith.mulf %58, %36 : vector<16x32xf32>
    %61 = arith.mulf %57, %56 : vector<16x32xf32>
    %62 = arith.addf %60, %61 : vector<16x32xf32>
    %63 = math.tanh %62 : vector<16x32xf32>
    %64 = arith.mulf %59, %63 : vector<16x32xf32>
    %65 = arith.index_cast %c1_i32 : i32 to index
    %c0_29 = arith.constant 0 : index
    %c0_30 = arith.constant 0 : index
    %66 = vector.load %arg17[%65, %c0_29, %c0_30] : memref<8x16x32xf32, #tpu.memory_space<vmem>>, vector<1x16x32xf32>
    %67 = vector.shape_cast %66 : vector<1x16x32xf32> to vector<16x32xf32>
    %68 = vector.shape_cast %64 : vector<16x32xf32> to vector<1x16x32xf32>
    tpu.vector_store %arg17[%65, %c0_29, %c0_30], %68 {strides = array<i32>} : memref<8x16x32xf32, #tpu.memory_space<vmem>>, vector<1x16x32xf32>,
    %c2_i32 = arith.constant 2 : i32
    %69 = arith.index_cast %c2_i32 : i32 to index
    %c0_31 = arith.constant 0 : index
    %c0_32 = arith.constant 0 : index
    %70 = vector.load %arg18[%69, %c0_31, %c0_32] : memref<8x16x128xf32, #tpu.memory_space<vmem>>, vector<1x16x128xf32>
    %71 = vector.shape_cast %70 : vector<1x16x128xf32> to vector<16x128xf32>
    %72 = arith.truncf %64 : vector<16x32xf32> to vector<16x32xbf16>
    %cst_33 = arith.constant dense<0.000000e+00> : vector<16x128xf32>
    %73 = tpu.matmul %72, %4, %cst_33 {dimension_numbers = #tpu.dot_dimension_numbers<[1], [0], [0], [1], [0, 0, 1, 1], [], []>} : vector<16x32xbf16>, vector<32x128xbf16>, vector<16x128xf32> -> vector<16x128xf32>
    %74 = arith.addf %71, %73 : vector<16x128xf32>
    %75 = vector.extract_strided_slice %74 {offsets = [0, 0], sizes = [16, 96], strides = [1, 1]} : vector<16x128xf32> to vector<16x96xf32>
    %76 = arith.negf %75 : vector<16x96xf32>
    %77 = math.exp %76 : vector<16x96xf32>
    %cst_34 = arith.constant 1.000000e+00 : f32
    %78 = vector.broadcast %cst_34 : f32 to vector<16x96xf32>
    %79 = arith.addf %78, %77 : vector<16x96xf32>
    %80 = arith.divf %78, %79 : vector<16x96xf32>
    %81 = vector.extract_strided_slice %74 {offsets = [0, 96], sizes = [16, 32], strides = [1, 1]} : vector<16x128xf32> to vector<16x32xf32>
    %82 = math.tanh %81 : vector<16x32xf32>
    %83 = vector.extract_strided_slice %80 {offsets = [0, 0], sizes = [16, 32], strides = [1, 1]} : vector<16x96xf32> to vector<16x32xf32>
    %84 = vector.extract_strided_slice %80 {offsets = [0, 32], sizes = [16, 32], strides = [1, 1]} : vector<16x96xf32> to vector<16x32xf32>
    %85 = vector.extract_strided_slice %80 {offsets = [0, 64], sizes = [16, 32], strides = [1, 1]} : vector<16x96xf32> to vector<16x32xf32>
    %86 = arith.mulf %84, %62 : vector<16x32xf32>
    %87 = arith.mulf %83, %82 : vector<16x32xf32>
    %88 = arith.addf %86, %87 : vector<16x32xf32>
    %89 = math.tanh %88 : vector<16x32xf32>
    %90 = arith.mulf %85, %89 : vector<16x32xf32>
    %91 = arith.index_cast %c2_i32 : i32 to index
    %c0_35 = arith.constant 0 : index
    %c0_36 = arith.constant 0 : index
    %92 = vector.load %arg17[%91, %c0_35, %c0_36] : memref<8x16x32xf32, #tpu.memory_space<vmem>>, vector<1x16x32xf32>
    %93 = vector.shape_cast %92 : vector<1x16x32xf32> to vector<16x32xf32>
    %94 = vector.shape_cast %90 : vector<16x32xf32> to vector<1x16x32xf32>
    tpu.vector_store %arg17[%91, %c0_35, %c0_36], %94 {strides = array<i32>} : memref<8x16x32xf32, #tpu.memory_space<vmem>>, vector<1x16x32xf32>,
    %c3_i32 = arith.constant 3 : i32
    %95 = arith.index_cast %c3_i32 : i32 to index
    %c0_37 = arith.constant 0 : index
    %c0_38 = arith.constant 0 : index
    %96 = vector.load %arg18[%95, %c0_37, %c0_38] : memref<8x16x128xf32, #tpu.memory_space<vmem>>, vector<1x16x128xf32>
    %97 = vector.shape_cast %96 : vector<1x16x128xf32> to vector<16x128xf32>
    %98 = arith.truncf %90 : vector<16x32xf32> to vector<16x32xbf16>
    %cst_39 = arith.constant dense<0.000000e+00> : vector<16x128xf32>
    %99 = tpu.matmul %98, %4, %cst_39 {dimension_numbers = #tpu.dot_dimension_numbers<[1], [0], [0], [1], [0, 0, 1, 1], [], []>} : vector<16x32xbf16>, vector<32x128xbf16>, vector<16x128xf32> -> vector<16x128xf32>
    %100 = arith.addf %97, %99 : vector<16x128xf32>
    %101 = vector.extract_strided_slice %100 {offsets = [0, 0], sizes = [16, 96], strides = [1, 1]} : vector<16x128xf32> to vector<16x96xf32>
    %102 = arith.negf %101 : vector<16x96xf32>
    %103 = math.exp %102 : vector<16x96xf32>
    %cst_40 = arith.constant 1.000000e+00 : f32
    %104 = vector.broadcast %cst_40 : f32 to vector<16x96xf32>
    %105 = arith.addf %104, %103 : vector<16x96xf32>
    %106 = arith.divf %104, %105 : vector<16x96xf32>
    %107 = vector.extract_strided_slice %100 {offsets = [0, 96], sizes = [16, 32], strides = [1, 1]} : vector<16x128xf32> to vector<16x32xf32>
    %108 = math.tanh %107 : vector<16x32xf32>
    %109 = vector.extract_strided_slice %106 {offsets = [0, 0], sizes = [16, 32], strides = [1, 1]} : vector<16x96xf32> to vector<16x32xf32>
    %110 = vector.extract_strided_slice %106 {offsets = [0, 32], sizes = [16, 32], strides = [1, 1]} : vector<16x96xf32> to vector<16x32xf32>
    %111 = vector.extract_strided_slice %106 {offsets = [0, 64], sizes = [16, 32], strides = [1, 1]} : vector<16x96xf32> to vector<16x32xf32>
    %112 = arith.mulf %110, %88 : vector<16x32xf32>
    %113 = arith.mulf %109, %108 : vector<16x32xf32>
    %114 = arith.addf %112, %113 : vector<16x32xf32>
    %115 = math.tanh %114 : vector<16x32xf32>
    %116 = arith.mulf %111, %115 : vector<16x32xf32>
    %117 = arith.index_cast %c3_i32 : i32 to index
    %c0_41 = arith.constant 0 : index
    %c0_42 = arith.constant 0 : index
    %118 = vector.load %arg17[%117, %c0_41, %c0_42] : memref<8x16x32xf32, #tpu.memory_space<vmem>>, vector<1x16x32xf32>
    %119 = vector.shape_cast %118 : vector<1x16x32xf32> to vector<16x32xf32>
    %120 = vector.shape_cast %116 : vector<16x32xf32> to vector<1x16x32xf32>
    tpu.vector_store %arg17[%117, %c0_41, %c0_42], %120 {strides = array<i32>} : memref<8x16x32xf32, #tpu.memory_space<vmem>>, vector<1x16x32xf32>,
    %c4_i32 = arith.constant 4 : i32
    %121 = arith.index_cast %c4_i32 : i32 to index
    %c0_43 = arith.constant 0 : index
    %c0_44 = arith.constant 0 : index
    %122 = vector.load %arg18[%121, %c0_43, %c0_44] : memref<8x16x128xf32, #tpu.memory_space<vmem>>, vector<1x16x128xf32>
    %123 = vector.shape_cast %122 : vector<1x16x128xf32> to vector<16x128xf32>
    %124 = arith.truncf %116 : vector<16x32xf32> to vector<16x32xbf16>
    %cst_45 = arith.constant dense<0.000000e+00> : vector<16x128xf32>
    %125 = tpu.matmul %124, %4, %cst_45 {dimension_numbers = #tpu.dot_dimension_numbers<[1], [0], [0], [1], [0, 0, 1, 1], [], []>} : vector<16x32xbf16>, vector<32x128xbf16>, vector<16x128xf32> -> vector<16x128xf32>
    %126 = arith.addf %123, %125 : vector<16x128xf32>
    %127 = vector.extract_strided_slice %126 {offsets = [0, 0], sizes = [16, 96], strides = [1, 1]} : vector<16x128xf32> to vector<16x96xf32>
    %128 = arith.negf %127 : vector<16x96xf32>
    %129 = math.exp %128 : vector<16x96xf32>
    %cst_46 = arith.constant 1.000000e+00 : f32
    %130 = vector.broadcast %cst_46 : f32 to vector<16x96xf32>
    %131 = arith.addf %130, %129 : vector<16x96xf32>
    %132 = arith.divf %130, %131 : vector<16x96xf32>
    %133 = vector.extract_strided_slice %126 {offsets = [0, 96], sizes = [16, 32], strides = [1, 1]} : vector<16x128xf32> to vector<16x32xf32>
    %134 = math.tanh %133 : vector<16x32xf32>
    %135 = vector.extract_strided_slice %132 {offsets = [0, 0], sizes = [16, 32], strides = [1, 1]} : vector<16x96xf32> to vector<16x32xf32>
    %136 = vector.extract_strided_slice %132 {offsets = [0, 32], sizes = [16, 32], strides = [1, 1]} : vector<16x96xf32> to vector<16x32xf32>
    %137 = vector.extract_strided_slice %132 {offsets = [0, 64], sizes = [16, 32], strides = [1, 1]} : vector<16x96xf32> to vector<16x32xf32>
    %138 = arith.mulf %136, %114 : vector<16x32xf32>
    %139 = arith.mulf %135, %134 : vector<16x32xf32>
    %140 = arith.addf %138, %139 : vector<16x32xf32>
    %141 = math.tanh %140 : vector<16x32xf32>
    %142 = arith.mulf %137, %141 : vector<16x32xf32>
    %143 = arith.index_cast %c4_i32 : i32 to index
    %c0_47 = arith.constant 0 : index
    %c0_48 = arith.constant 0 : index
    %144 = vector.load %arg17[%143, %c0_47, %c0_48] : memref<8x16x32xf32, #tpu.memory_space<vmem>>, vector<1x16x32xf32>
    %145 = vector.shape_cast %144 : vector<1x16x32xf32> to vector<16x32xf32>
    %146 = vector.shape_cast %142 : vector<16x32xf32> to vector<1x16x32xf32>
    tpu.vector_store %arg17[%143, %c0_47, %c0_48], %146 {strides = array<i32>} : memref<8x16x32xf32, #tpu.memory_space<vmem>>, vector<1x16x32xf32>,
    %c5_i32 = arith.constant 5 : i32
    %147 = arith.index_cast %c5_i32 : i32 to index
    %c0_49 = arith.constant 0 : index
    %c0_50 = arith.constant 0 : index
    %148 = vector.load %arg18[%147, %c0_49, %c0_50] : memref<8x16x128xf32, #tpu.memory_space<vmem>>, vector<1x16x128xf32>
    %149 = vector.shape_cast %148 : vector<1x16x128xf32> to vector<16x128xf32>
    %150 = arith.truncf %142 : vector<16x32xf32> to vector<16x32xbf16>
    %cst_51 = arith.constant dense<0.000000e+00> : vector<16x128xf32>
    %151 = tpu.matmul %150, %4, %cst_51 {dimension_numbers = #tpu.dot_dimension_numbers<[1], [0], [0], [1], [0, 0, 1, 1], [], []>} : vector<16x32xbf16>, vector<32x128xbf16>, vector<16x128xf32> -> vector<16x128xf32>
    %152 = arith.addf %149, %151 : vector<16x128xf32>
    %153 = vector.extract_strided_slice %152 {offsets = [0, 0], sizes = [16, 96], strides = [1, 1]} : vector<16x128xf32> to vector<16x96xf32>
    %154 = arith.negf %153 : vector<16x96xf32>
    %155 = math.exp %154 : vector<16x96xf32>
    %cst_52 = arith.constant 1.000000e+00 : f32
    %156 = vector.broadcast %cst_52 : f32 to vector<16x96xf32>
    %157 = arith.addf %156, %155 : vector<16x96xf32>
    %158 = arith.divf %156, %157 : vector<16x96xf32>
    %159 = vector.extract_strided_slice %152 {offsets = [0, 96], sizes = [16, 32], strides = [1, 1]} : vector<16x128xf32> to vector<16x32xf32>
    %160 = math.tanh %159 : vector<16x32xf32>
    %161 = vector.extract_strided_slice %158 {offsets = [0, 0], sizes = [16, 32], strides = [1, 1]} : vector<16x96xf32> to vector<16x32xf32>
    %162 = vector.extract_strided_slice %158 {offsets = [0, 32], sizes = [16, 32], strides = [1, 1]} : vector<16x96xf32> to vector<16x32xf32>
    %163 = vector.extract_strided_slice %158 {offsets = [0, 64], sizes = [16, 32], strides = [1, 1]} : vector<16x96xf32> to vector<16x32xf32>
    %164 = arith.mulf %162, %140 : vector<16x32xf32>
    %165 = arith.mulf %161, %160 : vector<16x32xf32>
    %166 = arith.addf %164, %165 : vector<16x32xf32>
    %167 = math.tanh %166 : vector<16x32xf32>
    %168 = arith.mulf %163, %167 : vector<16x32xf32>
    %169 = arith.index_cast %c5_i32 : i32 to index
    %c0_53 = arith.constant 0 : index
    %c0_54 = arith.constant 0 : index
    %170 = vector.load %arg17[%169, %c0_53, %c0_54] : memref<8x16x32xf32, #tpu.memory_space<vmem>>, vector<1x16x32xf32>
    %171 = vector.shape_cast %170 : vector<1x16x32xf32> to vector<16x32xf32>
    %172 = vector.shape_cast %168 : vector<16x32xf32> to vector<1x16x32xf32>
    tpu.vector_store %arg17[%169, %c0_53, %c0_54], %172 {strides = array<i32>} : memref<8x16x32xf32, #tpu.memory_space<vmem>>, vector<1x16x32xf32>,
    %c6_i32 = arith.constant 6 : i32
    %173 = arith.index_cast %c6_i32 : i32 to index
    %c0_55 = arith.constant 0 : index
    %c0_56 = arith.constant 0 : index
    %174 = vector.load %arg18[%173, %c0_55, %c0_56] : memref<8x16x128xf32, #tpu.memory_space<vmem>>, vector<1x16x128xf32>
    %175 = vector.shape_cast %174 : vector<1x16x128xf32> to vector<16x128xf32>
    %176 = arith.truncf %168 : vector<16x32xf32> to vector<16x32xbf16>
    %cst_57 = arith.constant dense<0.000000e+00> : vector<16x128xf32>
    %177 = tpu.matmul %176, %4, %cst_57 {dimension_numbers = #tpu.dot_dimension_numbers<[1], [0], [0], [1], [0, 0, 1, 1], [], []>} : vector<16x32xbf16>, vector<32x128xbf16>, vector<16x128xf32> -> vector<16x128xf32>
    %178 = arith.addf %175, %177 : vector<16x128xf32>
    %179 = vector.extract_strided_slice %178 {offsets = [0, 0], sizes = [16, 96], strides = [1, 1]} : vector<16x128xf32> to vector<16x96xf32>
    %180 = arith.negf %179 : vector<16x96xf32>
    %181 = math.exp %180 : vector<16x96xf32>
    %cst_58 = arith.constant 1.000000e+00 : f32
    %182 = vector.broadcast %cst_58 : f32 to vector<16x96xf32>
    %183 = arith.addf %182, %181 : vector<16x96xf32>
    %184 = arith.divf %182, %183 : vector<16x96xf32>
    %185 = vector.extract_strided_slice %178 {offsets = [0, 96], sizes = [16, 32], strides = [1, 1]} : vector<16x128xf32> to vector<16x32xf32>
    %186 = math.tanh %185 : vector<16x32xf32>
    %187 = vector.extract_strided_slice %184 {offsets = [0, 0], sizes = [16, 32], strides = [1, 1]} : vector<16x96xf32> to vector<16x32xf32>
    %188 = vector.extract_strided_slice %184 {offsets = [0, 32], sizes = [16, 32], strides = [1, 1]} : vector<16x96xf32> to vector<16x32xf32>
    %189 = vector.extract_strided_slice %184 {offsets = [0, 64], sizes = [16, 32], strides = [1, 1]} : vector<16x96xf32> to vector<16x32xf32>
    %190 = arith.mulf %188, %166 : vector<16x32xf32>
    %191 = arith.mulf %187, %186 : vector<16x32xf32>
    %192 = arith.addf %190, %191 : vector<16x32xf32>
    %193 = math.tanh %192 : vector<16x32xf32>
    %194 = arith.mulf %189, %193 : vector<16x32xf32>
    %195 = arith.index_cast %c6_i32 : i32 to index
    %c0_59 = arith.constant 0 : index
    %c0_60 = arith.constant 0 : index
    %196 = vector.load %arg17[%195, %c0_59, %c0_60] : memref<8x16x32xf32, #tpu.memory_space<vmem>>, vector<1x16x32xf32>
    %197 = vector.shape_cast %196 : vector<1x16x32xf32> to vector<16x32xf32>
    %198 = vector.shape_cast %194 : vector<16x32xf32> to vector<1x16x32xf32>
    tpu.vector_store %arg17[%195, %c0_59, %c0_60], %198 {strides = array<i32>} : memref<8x16x32xf32, #tpu.memory_space<vmem>>, vector<1x16x32xf32>,
    %c7_i32 = arith.constant 7 : i32
    %199 = arith.index_cast %c7_i32 : i32 to index
    %c0_61 = arith.constant 0 : index
    %c0_62 = arith.constant 0 : index
    %200 = vector.load %arg18[%199, %c0_61, %c0_62] : memref<8x16x128xf32, #tpu.memory_space<vmem>>, vector<1x16x128xf32>
    %201 = vector.shape_cast %200 : vector<1x16x128xf32> to vector<16x128xf32>
    %202 = arith.truncf %194 : vector<16x32xf32> to vector<16x32xbf16>
    %cst_63 = arith.constant dense<0.000000e+00> : vector<16x128xf32>
    %203 = tpu.matmul %202, %4, %cst_63 {dimension_numbers = #tpu.dot_dimension_numbers<[1], [0], [0], [1], [0, 0, 1, 1], [], []>} : vector<16x32xbf16>, vector<32x128xbf16>, vector<16x128xf32> -> vector<16x128xf32>
    %204 = arith.addf %201, %203 : vector<16x128xf32>
    %205 = vector.extract_strided_slice %204 {offsets = [0, 0], sizes = [16, 96], strides = [1, 1]} : vector<16x128xf32> to vector<16x96xf32>
    %206 = arith.negf %205 : vector<16x96xf32>
    %207 = math.exp %206 : vector<16x96xf32>
    %cst_64 = arith.constant 1.000000e+00 : f32
    %208 = vector.broadcast %cst_64 : f32 to vector<16x96xf32>
    %209 = arith.addf %208, %207 : vector<16x96xf32>
    %210 = arith.divf %208, %209 : vector<16x96xf32>
    %211 = vector.extract_strided_slice %204 {offsets = [0, 96], sizes = [16, 32], strides = [1, 1]} : vector<16x128xf32> to vector<16x32xf32>
    %212 = math.tanh %211 : vector<16x32xf32>
    %213 = vector.extract_strided_slice %210 {offsets = [0, 0], sizes = [16, 32], strides = [1, 1]} : vector<16x96xf32> to vector<16x32xf32>
    %214 = vector.extract_strided_slice %210 {offsets = [0, 32], sizes = [16, 32], strides = [1, 1]} : vector<16x96xf32> to vector<16x32xf32>
    %215 = vector.extract_strided_slice %210 {offsets = [0, 64], sizes = [16, 32], strides = [1, 1]} : vector<16x96xf32> to vector<16x32xf32>
    %216 = arith.mulf %214, %192 : vector<16x32xf32>
    %217 = arith.mulf %213, %212 : vector<16x32xf32>
    %218 = arith.addf %216, %217 : vector<16x32xf32>
    %219 = math.tanh %218 : vector<16x32xf32>
    %220 = arith.mulf %215, %219 : vector<16x32xf32>
    %221 = arith.index_cast %c7_i32 : i32 to index
    %c0_65 = arith.constant 0 : index
    %c0_66 = arith.constant 0 : index
    %222 = vector.load %arg17[%221, %c0_65, %c0_66] : memref<8x16x32xf32, #tpu.memory_space<vmem>>, vector<1x16x32xf32>
    %223 = vector.shape_cast %222 : vector<1x16x32xf32> to vector<16x32xf32>
    %224 = vector.shape_cast %220 : vector<16x32xf32> to vector<1x16x32xf32>
    tpu.vector_store %arg17[%221, %c0_65, %c0_66], %224 {strides = array<i32>} : memref<8x16x32xf32, #tpu.memory_space<vmem>>, vector<1x16x32xf32>,
    %c8_i32 = arith.constant 8 : i32
    %c0_67 = arith.constant 0 : index
    %c0_68 = arith.constant 0 : index
    %c0_69 = arith.constant 0 : index
    %225 = vector.load %arg15[%c0_67, %c0_68, %c0_69] : memref<2x16x32xf32, #tpu.memory_space<vmem>>, vector<1x16x32xf32>
    %226 = vector.shape_cast %225 : vector<1x16x32xf32> to vector<16x32xf32>
    %227 = vector.shape_cast %220 : vector<16x32xf32> to vector<1x16x32xf32>
    tpu.vector_store %arg15[%c0_67, %c0_68, %c0_69], %227 {strides = array<i32>} : memref<2x16x32xf32, #tpu.memory_space<vmem>>, vector<1x16x32xf32>,
    %c0_70 = arith.constant 0 : index
    %c0_71 = arith.constant 0 : index
    %c0_72 = arith.constant 0 : index
    %228 = vector.load %arg16[%c0_70, %c0_71, %c0_72] : memref<2x16x32xf32, #tpu.memory_space<vmem>>, vector<1x16x32xf32>
    %229 = vector.shape_cast %228 : vector<1x16x32xf32> to vector<16x32xf32>
    %230 = vector.shape_cast %218 : vector<16x32xf32> to vector<1x16x32xf32>
    tpu.vector_store %arg16[%c0_70, %c0_71, %c0_72], %230 {strides = array<i32>} : memref<2x16x32xf32, #tpu.memory_space<vmem>>, vector<1x16x32xf32>,
    %c0_73 = arith.constant 0 : index
    %c0_74 = arith.constant 0 : index
    %231 = vector.load %arg7[%c0_73, %c0_74] : memref<32x128xbf16, #tpu.memory_space<vmem>>, vector<32x128xbf16>
    %c0_75 = arith.constant 0 : index
    %c0_76 = arith.constant 0 : index
    %232 = vector.load %arg8[%c0_75, %c0_76] : memref<32x128xbf16, #tpu.memory_space<vmem>>, vector<32x128xbf16>
    %c0_77 = arith.constant 0 : index
    %c0_78 = arith.constant 0 : index
    %233 = vector.load %arg9[%c0_77, %c0_78] : memref<1x128xf32, #tpu.memory_space<vmem>>, vector<1x128xf32>
    %c0_79 = arith.constant 0 : index
    %c0_80 = arith.constant 0 : index
    %c0_81 = arith.constant 0 : index
    %234 = vector.load %arg17[%c0_79, %c0_80, %c0_81] : memref<8x16x32xf32, #tpu.memory_space<vmem>>, vector<8x16x32xf32>
    %235 = arith.truncf %234 : vector<8x16x32xf32> to vector<8x16x32xbf16>
    %236 = vector.shape_cast %235 : vector<8x16x32xbf16> to vector<128x32xbf16>
    %cst_82 = arith.constant dense<0.000000e+00> : vector<128x128xf32>
    %237 = tpu.matmul %236, %231, %cst_82 {dimension_numbers = #tpu.dot_dimension_numbers<[1], [0], [0], [1], [0, 0, 1, 1], [], []>} : vector<128x32xbf16>, vector<32x128xbf16>, vector<128x128xf32> -> vector<128x128xf32>
    %238 = vector.broadcast %233 : vector<1x128xf32> to vector<128x128xf32>
    %239 = arith.addf %237, %238 : vector<128x128xf32>
    %240 = vector.shape_cast %239 : vector<128x128xf32> to vector<8x16x128xf32>
    %c0_83 = arith.constant 0 : index
    %c0_84 = arith.constant 0 : index
    %c0_85 = arith.constant 0 : index
    %241 = vector.load %arg18[%c0_83, %c0_84, %c0_85] : memref<8x16x128xf32, #tpu.memory_space<vmem>>, vector<8x16x128xf32>
    tpu.vector_store %arg18[%c0_83, %c0_84, %c0_85], %240 {strides = array<i32>} : memref<8x16x128xf32, #tpu.memory_space<vmem>>, vector<8x16x128xf32>,
    %c1 = arith.constant 1 : index
    %c0_86 = arith.constant 0 : index
    %c0_87 = arith.constant 0 : index
    %242 = vector.load %arg15[%c1, %c0_86, %c0_87] : memref<2x16x32xf32, #tpu.memory_space<vmem>>, vector<1x16x32xf32>
    %243 = vector.shape_cast %242 : vector<1x16x32xf32> to vector<16x32xf32>
    %c1_88 = arith.constant 1 : index
    %c0_89 = arith.constant 0 : index
    %c0_90 = arith.constant 0 : index
    %244 = vector.load %arg16[%c1_88, %c0_89, %c0_90] : memref<2x16x32xf32, #tpu.memory_space<vmem>>, vector<1x16x32xf32>
    %245 = vector.shape_cast %244 : vector<1x16x32xf32> to vector<16x32xf32>
    %c0_i32_91 = arith.constant 0 : i32
    %246 = arith.index_cast %c0_i32_91 : i32 to index
    %c0_92 = arith.constant 0 : index
    %c0_93 = arith.constant 0 : index
    %247 = vector.load %arg18[%246, %c0_92, %c0_93] : memref<8x16x128xf32, #tpu.memory_space<vmem>>, vector<1x16x128xf32>
    %248 = vector.shape_cast %247 : vector<1x16x128xf32> to vector<16x128xf32>
    %249 = arith.truncf %243 : vector<16x32xf32> to vector<16x32xbf16>
    %cst_94 = arith.constant dense<0.000000e+00> : vector<16x128xf32>
    %250 = tpu.matmul %249, %232, %cst_94 {dimension_numbers = #tpu.dot_dimension_numbers<[1], [0], [0], [1], [0, 0, 1, 1], [], []>} : vector<16x32xbf16>, vector<32x128xbf16>, vector<16x128xf32> -> vector<16x128xf32>
    %251 = arith.addf %248, %250 : vector<16x128xf32>
    %252 = vector.extract_strided_slice %251 {offsets = [0, 0], sizes = [16, 96], strides = [1, 1]} : vector<16x128xf32> to vector<16x96xf32>
    %253 = arith.negf %252 : vector<16x96xf32>
    %254 = math.exp %253 : vector<16x96xf32>
    %cst_95 = arith.constant 1.000000e+00 : f32
    %255 = vector.broadcast %cst_95 : f32 to vector<16x96xf32>
    %256 = arith.addf %255, %254 : vector<16x96xf32>
    %257 = arith.divf %255, %256 : vector<16x96xf32>
    %258 = vector.extract_strided_slice %251 {offsets = [0, 96], sizes = [16, 32], strides = [1, 1]} : vector<16x128xf32> to vector<16x32xf32>
    %259 = math.tanh %258 : vector<16x32xf32>
    %260 = vector.extract_strided_slice %257 {offsets = [0, 0], sizes = [16, 32], strides = [1, 1]} : vector<16x96xf32> to vector<16x32xf32>
    %261 = vector.extract_strided_slice %257 {offsets = [0, 32], sizes = [16, 32], strides = [1, 1]} : vector<16x96xf32> to vector<16x32xf32>
    %262 = vector.extract_strided_slice %257 {offsets = [0, 64], sizes = [16, 32], strides = [1, 1]} : vector<16x96xf32> to vector<16x32xf32>
    %263 = arith.mulf %261, %245 : vector<16x32xf32>
    %264 = arith.mulf %260, %259 : vector<16x32xf32>
    %265 = arith.addf %263, %264 : vector<16x32xf32>
    %266 = math.tanh %265 : vector<16x32xf32>
    %267 = arith.mulf %262, %266 : vector<16x32xf32>
    %c1_i32_96 = arith.constant 1 : i32
    %268 = arith.index_cast %c1_i32_96 : i32 to index
    %c0_97 = arith.constant 0 : index
    %c0_98 = arith.constant 0 : index
    %269 = vector.load %arg18[%268, %c0_97, %c0_98] : memref<8x16x128xf32, #tpu.memory_space<vmem>>, vector<1x16x128xf32>
    %270 = vector.shape_cast %269 : vector<1x16x128xf32> to vector<16x128xf32>
    %271 = arith.truncf %267 : vector<16x32xf32> to vector<16x32xbf16>
    %cst_99 = arith.constant dense<0.000000e+00> : vector<16x128xf32>
    %272 = tpu.matmul %271, %232, %cst_99 {dimension_numbers = #tpu.dot_dimension_numbers<[1], [0], [0], [1], [0, 0, 1, 1], [], []>} : vector<16x32xbf16>, vector<32x128xbf16>, vector<16x128xf32> -> vector<16x128xf32>
    %273 = arith.addf %270, %272 : vector<16x128xf32>
    %274 = vector.extract_strided_slice %273 {offsets = [0, 0], sizes = [16, 96], strides = [1, 1]} : vector<16x128xf32> to vector<16x96xf32>
    %275 = arith.negf %274 : vector<16x96xf32>
    %276 = math.exp %275 : vector<16x96xf32>
    %cst_100 = arith.constant 1.000000e+00 : f32
    %277 = vector.broadcast %cst_100 : f32 to vector<16x96xf32>
    %278 = arith.addf %277, %276 : vector<16x96xf32>
    %279 = arith.divf %277, %278 : vector<16x96xf32>
    %280 = vector.extract_strided_slice %273 {offsets = [0, 96], sizes = [16, 32], strides = [1, 1]} : vector<16x128xf32> to vector<16x32xf32>
    %281 = math.tanh %280 : vector<16x32xf32>
    %282 = vector.extract_strided_slice %279 {offsets = [0, 0], sizes = [16, 32], strides = [1, 1]} : vector<16x96xf32> to vector<16x32xf32>
    %283 = vector.extract_strided_slice %279 {offsets = [0, 32], sizes = [16, 32], strides = [1, 1]} : vector<16x96xf32> to vector<16x32xf32>
    %284 = vector.extract_strided_slice %279 {offsets = [0, 64], sizes = [16, 32], strides = [1, 1]} : vector<16x96xf32> to vector<16x32xf32>
    %285 = arith.mulf %283, %265 : vector<16x32xf32>
    %286 = arith.mulf %282, %281 : vector<16x32xf32>
    %287 = arith.addf %285, %286 : vector<16x32xf32>
    %288 = math.tanh %287 : vector<16x32xf32>
    %289 = arith.mulf %284, %288 : vector<16x32xf32>
    %c2_i32_101 = arith.constant 2 : i32
    %290 = arith.index_cast %c2_i32_101 : i32 to index
    %c0_102 = arith.constant 0 : index
    %c0_103 = arith.constant 0 : index
    %291 = vector.load %arg18[%290, %c0_102, %c0_103] : memref<8x16x128xf32, #tpu.memory_space<vmem>>, vector<1x16x128xf32>
    %292 = vector.shape_cast %291 : vector<1x16x128xf32> to vector<16x128xf32>
    %293 = arith.truncf %289 : vector<16x32xf32> to vector<16x32xbf16>
    %cst_104 = arith.constant dense<0.000000e+00> : vector<16x128xf32>
    %294 = tpu.matmul %293, %232, %cst_104 {dimension_numbers = #tpu.dot_dimension_numbers<[1], [0], [0], [1], [0, 0, 1, 1], [], []>} : vector<16x32xbf16>, vector<32x128xbf16>, vector<16x128xf32> -> vector<16x128xf32>
    %295 = arith.addf %292, %294 : vector<16x128xf32>
    %296 = vector.extract_strided_slice %295 {offsets = [0, 0], sizes = [16, 96], strides = [1, 1]} : vector<16x128xf32> to vector<16x96xf32>
    %297 = arith.negf %296 : vector<16x96xf32>
    %298 = math.exp %297 : vector<16x96xf32>
    %cst_105 = arith.constant 1.000000e+00 : f32
    %299 = vector.broadcast %cst_105 : f32 to vector<16x96xf32>
    %300 = arith.addf %299, %298 : vector<16x96xf32>
    %301 = arith.divf %299, %300 : vector<16x96xf32>
    %302 = vector.extract_strided_slice %295 {offsets = [0, 96], sizes = [16, 32], strides = [1, 1]} : vector<16x128xf32> to vector<16x32xf32>
    %303 = math.tanh %302 : vector<16x32xf32>
    %304 = vector.extract_strided_slice %301 {offsets = [0, 0], sizes = [16, 32], strides = [1, 1]} : vector<16x96xf32> to vector<16x32xf32>
    %305 = vector.extract_strided_slice %301 {offsets = [0, 32], sizes = [16, 32], strides = [1, 1]} : vector<16x96xf32> to vector<16x32xf32>
    %306 = vector.extract_strided_slice %301 {offsets = [0, 64], sizes = [16, 32], strides = [1, 1]} : vector<16x96xf32> to vector<16x32xf32>
    %307 = arith.mulf %305, %287 : vector<16x32xf32>
    %308 = arith.mulf %304, %303 : vector<16x32xf32>
    %309 = arith.addf %307, %308 : vector<16x32xf32>
    %310 = math.tanh %309 : vector<16x32xf32>
    %311 = arith.mulf %306, %310 : vector<16x32xf32>
    %c3_i32_106 = arith.constant 3 : i32
    %312 = arith.index_cast %c3_i32_106 : i32 to index
    %c0_107 = arith.constant 0 : index
    %c0_108 = arith.constant 0 : index
    %313 = vector.load %arg18[%312, %c0_107, %c0_108] : memref<8x16x128xf32, #tpu.memory_space<vmem>>, vector<1x16x128xf32>
    %314 = vector.shape_cast %313 : vector<1x16x128xf32> to vector<16x128xf32>
    %315 = arith.truncf %311 : vector<16x32xf32> to vector<16x32xbf16>
    %cst_109 = arith.constant dense<0.000000e+00> : vector<16x128xf32>
    %316 = tpu.matmul %315, %232, %cst_109 {dimension_numbers = #tpu.dot_dimension_numbers<[1], [0], [0], [1], [0, 0, 1, 1], [], []>} : vector<16x32xbf16>, vector<32x128xbf16>, vector<16x128xf32> -> vector<16x128xf32>
    %317 = arith.addf %314, %316 : vector<16x128xf32>
    %318 = vector.extract_strided_slice %317 {offsets = [0, 0], sizes = [16, 96], strides = [1, 1]} : vector<16x128xf32> to vector<16x96xf32>
    %319 = arith.negf %318 : vector<16x96xf32>
    %320 = math.exp %319 : vector<16x96xf32>
    %cst_110 = arith.constant 1.000000e+00 : f32
    %321 = vector.broadcast %cst_110 : f32 to vector<16x96xf32>
    %322 = arith.addf %321, %320 : vector<16x96xf32>
    %323 = arith.divf %321, %322 : vector<16x96xf32>
    %324 = vector.extract_strided_slice %317 {offsets = [0, 96], sizes = [16, 32], strides = [1, 1]} : vector<16x128xf32> to vector<16x32xf32>
    %325 = math.tanh %324 : vector<16x32xf32>
    %326 = vector.extract_strided_slice %323 {offsets = [0, 0], sizes = [16, 32], strides = [1, 1]} : vector<16x96xf32> to vector<16x32xf32>
    %327 = vector.extract_strided_slice %323 {offsets = [0, 32], sizes = [16, 32], strides = [1, 1]} : vector<16x96xf32> to vector<16x32xf32>
    %328 = vector.extract_strided_slice %323 {offsets = [0, 64], sizes = [16, 32], strides = [1, 1]} : vector<16x96xf32> to vector<16x32xf32>
    %329 = arith.mulf %327, %309 : vector<16x32xf32>
    %330 = arith.mulf %326, %325 : vector<16x32xf32>
    %331 = arith.addf %329, %330 : vector<16x32xf32>
    %332 = math.tanh %331 : vector<16x32xf32>
    %333 = arith.mulf %328, %332 : vector<16x32xf32>
    %c4_i32_111 = arith.constant 4 : i32
    %334 = arith.index_cast %c4_i32_111 : i32 to index
    %c0_112 = arith.constant 0 : index
    %c0_113 = arith.constant 0 : index
    %335 = vector.load %arg18[%334, %c0_112, %c0_113] : memref<8x16x128xf32, #tpu.memory_space<vmem>>, vector<1x16x128xf32>
    %336 = vector.shape_cast %335 : vector<1x16x128xf32> to vector<16x128xf32>
    %337 = arith.truncf %333 : vector<16x32xf32> to vector<16x32xbf16>
    %cst_114 = arith.constant dense<0.000000e+00> : vector<16x128xf32>
    %338 = tpu.matmul %337, %232, %cst_114 {dimension_numbers = #tpu.dot_dimension_numbers<[1], [0], [0], [1], [0, 0, 1, 1], [], []>} : vector<16x32xbf16>, vector<32x128xbf16>, vector<16x128xf32> -> vector<16x128xf32>
    %339 = arith.addf %336, %338 : vector<16x128xf32>
    %340 = vector.extract_strided_slice %339 {offsets = [0, 0], sizes = [16, 96], strides = [1, 1]} : vector<16x128xf32> to vector<16x96xf32>
    %341 = arith.negf %340 : vector<16x96xf32>
    %342 = math.exp %341 : vector<16x96xf32>
    %cst_115 = arith.constant 1.000000e+00 : f32
    %343 = vector.broadcast %cst_115 : f32 to vector<16x96xf32>
    %344 = arith.addf %343, %342 : vector<16x96xf32>
    %345 = arith.divf %343, %344 : vector<16x96xf32>
    %346 = vector.extract_strided_slice %339 {offsets = [0, 96], sizes = [16, 32], strides = [1, 1]} : vector<16x128xf32> to vector<16x32xf32>
    %347 = math.tanh %346 : vector<16x32xf32>
    %348 = vector.extract_strided_slice %345 {offsets = [0, 0], sizes = [16, 32], strides = [1, 1]} : vector<16x96xf32> to vector<16x32xf32>
    %349 = vector.extract_strided_slice %345 {offsets = [0, 32], sizes = [16, 32], strides = [1, 1]} : vector<16x96xf32> to vector<16x32xf32>
    %350 = vector.extract_strided_slice %345 {offsets = [0, 64], sizes = [16, 32], strides = [1, 1]} : vector<16x96xf32> to vector<16x32xf32>
    %351 = arith.mulf %349, %331 : vector<16x32xf32>
    %352 = arith.mulf %348, %347 : vector<16x32xf32>
    %353 = arith.addf %351, %352 : vector<16x32xf32>
    %354 = math.tanh %353 : vector<16x32xf32>
    %355 = arith.mulf %350, %354 : vector<16x32xf32>
    %c5_i32_116 = arith.constant 5 : i32
    %356 = arith.index_cast %c5_i32_116 : i32 to index
    %c0_117 = arith.constant 0 : index
    %c0_118 = arith.constant 0 : index
    %357 = vector.load %arg18[%356, %c0_117, %c0_118] : memref<8x16x128xf32, #tpu.memory_space<vmem>>, vector<1x16x128xf32>
    %358 = vector.shape_cast %357 : vector<1x16x128xf32> to vector<16x128xf32>
    %359 = arith.truncf %355 : vector<16x32xf32> to vector<16x32xbf16>
    %cst_119 = arith.constant dense<0.000000e+00> : vector<16x128xf32>
    %360 = tpu.matmul %359, %232, %cst_119 {dimension_numbers = #tpu.dot_dimension_numbers<[1], [0], [0], [1], [0, 0, 1, 1], [], []>} : vector<16x32xbf16>, vector<32x128xbf16>, vector<16x128xf32> -> vector<16x128xf32>
    %361 = arith.addf %358, %360 : vector<16x128xf32>
    %362 = vector.extract_strided_slice %361 {offsets = [0, 0], sizes = [16, 96], strides = [1, 1]} : vector<16x128xf32> to vector<16x96xf32>
    %363 = arith.negf %362 : vector<16x96xf32>
    %364 = math.exp %363 : vector<16x96xf32>
    %cst_120 = arith.constant 1.000000e+00 : f32
    %365 = vector.broadcast %cst_120 : f32 to vector<16x96xf32>
    %366 = arith.addf %365, %364 : vector<16x96xf32>
    %367 = arith.divf %365, %366 : vector<16x96xf32>
    %368 = vector.extract_strided_slice %361 {offsets = [0, 96], sizes = [16, 32], strides = [1, 1]} : vector<16x128xf32> to vector<16x32xf32>
    %369 = math.tanh %368 : vector<16x32xf32>
    %370 = vector.extract_strided_slice %367 {offsets = [0, 0], sizes = [16, 32], strides = [1, 1]} : vector<16x96xf32> to vector<16x32xf32>
    %371 = vector.extract_strided_slice %367 {offsets = [0, 32], sizes = [16, 32], strides = [1, 1]} : vector<16x96xf32> to vector<16x32xf32>
    %372 = vector.extract_strided_slice %367 {offsets = [0, 64], sizes = [16, 32], strides = [1, 1]} : vector<16x96xf32> to vector<16x32xf32>
    %373 = arith.mulf %371, %353 : vector<16x32xf32>
    %374 = arith.mulf %370, %369 : vector<16x32xf32>
    %375 = arith.addf %373, %374 : vector<16x32xf32>
    %376 = math.tanh %375 : vector<16x32xf32>
    %377 = arith.mulf %372, %376 : vector<16x32xf32>
    %c6_i32_121 = arith.constant 6 : i32
    %378 = arith.index_cast %c6_i32_121 : i32 to index
    %c0_122 = arith.constant 0 : index
    %c0_123 = arith.constant 0 : index
    %379 = vector.load %arg18[%378, %c0_122, %c0_123] : memref<8x16x128xf32, #tpu.memory_space<vmem>>, vector<1x16x128xf32>
    %380 = vector.shape_cast %379 : vector<1x16x128xf32> to vector<16x128xf32>
    %381 = arith.truncf %377 : vector<16x32xf32> to vector<16x32xbf16>
    %cst_124 = arith.constant dense<0.000000e+00> : vector<16x128xf32>
    %382 = tpu.matmul %381, %232, %cst_124 {dimension_numbers = #tpu.dot_dimension_numbers<[1], [0], [0], [1], [0, 0, 1, 1], [], []>} : vector<16x32xbf16>, vector<32x128xbf16>, vector<16x128xf32> -> vector<16x128xf32>
    %383 = arith.addf %380, %382 : vector<16x128xf32>
    %384 = vector.extract_strided_slice %383 {offsets = [0, 0], sizes = [16, 96], strides = [1, 1]} : vector<16x128xf32> to vector<16x96xf32>
    %385 = arith.negf %384 : vector<16x96xf32>
    %386 = math.exp %385 : vector<16x96xf32>
    %cst_125 = arith.constant 1.000000e+00 : f32
    %387 = vector.broadcast %cst_125 : f32 to vector<16x96xf32>
    %388 = arith.addf %387, %386 : vector<16x96xf32>
    %389 = arith.divf %387, %388 : vector<16x96xf32>
    %390 = vector.extract_strided_slice %383 {offsets = [0, 96], sizes = [16, 32], strides = [1, 1]} : vector<16x128xf32> to vector<16x32xf32>
    %391 = math.tanh %390 : vector<16x32xf32>
    %392 = vector.extract_strided_slice %389 {offsets = [0, 0], sizes = [16, 32], strides = [1, 1]} : vector<16x96xf32> to vector<16x32xf32>
    %393 = vector.extract_strided_slice %389 {offsets = [0, 32], sizes = [16, 32], strides = [1, 1]} : vector<16x96xf32> to vector<16x32xf32>
    %394 = vector.extract_strided_slice %389 {offsets = [0, 64], sizes = [16, 32], strides = [1, 1]} : vector<16x96xf32> to vector<16x32xf32>
    %395 = arith.mulf %393, %375 : vector<16x32xf32>
    %396 = arith.mulf %392, %391 : vector<16x32xf32>
    %397 = arith.addf %395, %396 : vector<16x32xf32>
    %398 = math.tanh %397 : vector<16x32xf32>
    %399 = arith.mulf %394, %398 : vector<16x32xf32>
    %c7_i32_126 = arith.constant 7 : i32
    %400 = arith.index_cast %c7_i32_126 : i32 to index
    %c0_127 = arith.constant 0 : index
    %c0_128 = arith.constant 0 : index
    %401 = vector.load %arg18[%400, %c0_127, %c0_128] : memref<8x16x128xf32, #tpu.memory_space<vmem>>, vector<1x16x128xf32>
    %402 = vector.shape_cast %401 : vector<1x16x128xf32> to vector<16x128xf32>
    %403 = arith.truncf %399 : vector<16x32xf32> to vector<16x32xbf16>
    %cst_129 = arith.constant dense<0.000000e+00> : vector<16x128xf32>
    %404 = tpu.matmul %403, %232, %cst_129 {dimension_numbers = #tpu.dot_dimension_numbers<[1], [0], [0], [1], [0, 0, 1, 1], [], []>} : vector<16x32xbf16>, vector<32x128xbf16>, vector<16x128xf32> -> vector<16x128xf32>
    %405 = arith.addf %402, %404 : vector<16x128xf32>
    %406 = vector.extract_strided_slice %405 {offsets = [0, 0], sizes = [16, 96], strides = [1, 1]} : vector<16x128xf32> to vector<16x96xf32>
    %407 = arith.negf %406 : vector<16x96xf32>
    %408 = math.exp %407 : vector<16x96xf32>
    %cst_130 = arith.constant 1.000000e+00 : f32
    %409 = vector.broadcast %cst_130 : f32 to vector<16x96xf32>
    %410 = arith.addf %409, %408 : vector<16x96xf32>
    %411 = arith.divf %409, %410 : vector<16x96xf32>
    %412 = vector.extract_strided_slice %405 {offsets = [0, 96], sizes = [16, 32], strides = [1, 1]} : vector<16x128xf32> to vector<16x32xf32>
    %413 = math.tanh %412 : vector<16x32xf32>
    %414 = vector.extract_strided_slice %411 {offsets = [0, 0], sizes = [16, 32], strides = [1, 1]} : vector<16x96xf32> to vector<16x32xf32>
    %415 = vector.extract_strided_slice %411 {offsets = [0, 32], sizes = [16, 32], strides = [1, 1]} : vector<16x96xf32> to vector<16x32xf32>
    %416 = vector.extract_strided_slice %411 {offsets = [0, 64], sizes = [16, 32], strides = [1, 1]} : vector<16x96xf32> to vector<16x32xf32>
    %417 = arith.mulf %415, %397 : vector<16x32xf32>
    %418 = arith.mulf %414, %413 : vector<16x32xf32>
    %419 = arith.addf %417, %418 : vector<16x32xf32>
    %420 = math.tanh %419 : vector<16x32xf32>
    %421 = arith.mulf %416, %420 : vector<16x32xf32>
    %c8_i32_131 = arith.constant 8 : i32
    %c1_132 = arith.constant 1 : index
    %c0_133 = arith.constant 0 : index
    %c0_134 = arith.constant 0 : index
    %422 = vector.load %arg15[%c1_132, %c0_133, %c0_134] : memref<2x16x32xf32, #tpu.memory_space<vmem>>, vector<1x16x32xf32>
    %423 = vector.shape_cast %422 : vector<1x16x32xf32> to vector<16x32xf32>
    %424 = vector.shape_cast %421 : vector<16x32xf32> to vector<1x16x32xf32>
    tpu.vector_store %arg15[%c1_132, %c0_133, %c0_134], %424 {strides = array<i32>} : memref<2x16x32xf32, #tpu.memory_space<vmem>>, vector<1x16x32xf32>,
    %c1_135 = arith.constant 1 : index
    %c0_136 = arith.constant 0 : index
    %c0_137 = arith.constant 0 : index
    %425 = vector.load %arg16[%c1_135, %c0_136, %c0_137] : memref<2x16x32xf32, #tpu.memory_space<vmem>>, vector<1x16x32xf32>
    %426 = vector.shape_cast %425 : vector<1x16x32xf32> to vector<16x32xf32>
    %427 = vector.shape_cast %419 : vector<16x32xf32> to vector<1x16x32xf32>
    tpu.vector_store %arg16[%c1_135, %c0_136, %c0_137], %427 {strides = array<i32>} : memref<2x16x32xf32, #tpu.memory_space<vmem>>, vector<1x16x32xf32>,
    %c0_i32_138 = arith.constant 0 : i32
    %428 = arith.cmpi eq, %arg0, %c0_i32_138 : i32
    %429 = arith.extui %428 : i1 to i32
    %c0_i32_139 = arith.constant 0 : i32
    %430 = arith.cmpi ne, %429, %c0_i32_139 : i32
    scf.if %430 {
      %c0_140 = arith.constant 0 : index
      %c0_141 = arith.constant 0 : index
      %c0_142 = arith.constant 0 : index
      %431 = vector.load %arg15[%c0_140, %c0_141, %c0_142] : memref<2x16x32xf32, #tpu.memory_space<vmem>>, vector<2x16x32xf32>
      %c0_143 = arith.constant 0 : index
      %c0_144 = arith.constant 0 : index
      %c0_145 = arith.constant 0 : index
      %432 = vector.load %arg13[%c0_143, %c0_144, %c0_145] : memref<2x16x32xf32, #tpu.memory_space<vmem>>, vector<2x16x32xf32>
      tpu.vector_store %arg13[%c0_143, %c0_144, %c0_145], %431 {strides = array<i32>} : memref<2x16x32xf32, #tpu.memory_space<vmem>>, vector<2x16x32xf32>,
      %c0_146 = arith.constant 0 : index
      %c0_147 = arith.constant 0 : index
      %c0_148 = arith.constant 0 : index
      %433 = vector.load %arg16[%c0_146, %c0_147, %c0_148] : memref<2x16x32xf32, #tpu.memory_space<vmem>>, vector<2x16x32xf32>
      %c0_149 = arith.constant 0 : index
      %c0_150 = arith.constant 0 : index
      %c0_151 = arith.constant 0 : index
      %434 = vector.load %arg14[%c0_149, %c0_150, %c0_151] : memref<2x16x32xf32, #tpu.memory_space<vmem>>, vector<2x16x32xf32>
      tpu.vector_store %arg14[%c0_149, %c0_150, %c0_151], %433 {strides = array<i32>} : memref<2x16x32xf32, #tpu.memory_space<vmem>>, vector<2x16x32xf32>,
      %c1_152 = arith.constant 1 : index
      %c0_153 = arith.constant 0 : index
      %c0_154 = arith.constant 0 : index
      %435 = vector.load %arg15[%c1_152, %c0_153, %c0_154] : memref<2x16x32xf32, #tpu.memory_space<vmem>>, vector<1x16x32xf32>
      %436 = vector.shape_cast %435 : vector<1x16x32xf32> to vector<16x32xf32>
      %437 = arith.truncf %436 : vector<16x32xf32> to vector<16x32xbf16>
      %c0_155 = arith.constant 0 : index
      %c0_156 = arith.constant 0 : index
      %438 = vector.load %arg10[%c0_155, %c0_156] : memref<32x128xbf16, #tpu.memory_space<vmem>>, vector<32x128xbf16>
      %cst_157 = arith.constant dense<0.000000e+00> : vector<16x128xf32>
      %439 = tpu.matmul %437, %438, %cst_157 {dimension_numbers = #tpu.dot_dimension_numbers<[1], [0], [0], [1], [0, 0, 1, 1], [], []>} : vector<16x32xbf16>, vector<32x128xbf16>, vector<16x128xf32> -> vector<16x128xf32>
      %c0_158 = arith.constant 0 : index
      %c0_159 = arith.constant 0 : index
      %440 = vector.load %arg11[%c0_158, %c0_159] : memref<1x128xf32, #tpu.memory_space<vmem>>, vector<1x128xf32>
      %441 = vector.broadcast %440 : vector<1x128xf32> to vector<16x128xf32>
      %442 = arith.addf %439, %441 : vector<16x128xf32>
      %443 = arith.negf %442 : vector<16x128xf32>
      %444 = math.exp %443 : vector<16x128xf32>
      %cst_160 = arith.constant 1.000000e+00 : f32
      %445 = vector.broadcast %cst_160 : f32 to vector<16x128xf32>
      %446 = arith.addf %445, %444 : vector<16x128xf32>
      %447 = arith.divf %445, %446 : vector<16x128xf32>
      %c0_161 = arith.constant 0 : index
      %c0_162 = arith.constant 0 : index
      %448 = vector.load %arg12[%c0_161, %c0_162] : memref<16x128xf32, #tpu.memory_space<vmem>>, vector<16x128xf32>
      tpu.vector_store %arg12[%c0_161, %c0_162], %447 {strides = array<i32>} : memref<16x128xf32, #tpu.memory_space<vmem>>, vector<16x128xf32>,
    } else {
    }
    return
  }
  func.func @transform_0(%arg0: i32) -> (i32, i32, i32) {
    %c0_i32 = arith.constant 0 : i32
    %c0_i32_0 = arith.constant 0 : i32
    %c0_i32_1 = arith.constant 0 : i32
    return %arg0, %c0_i32, %c0_i32_0 : i32, i32, i32
  }
  func.func @transform_1(%arg0: i32) -> (i32, i32, i32) {
    %c0_i32 = arith.constant 0 : i32
    %c0_i32_0 = arith.constant 0 : i32
    %c0_i32_1 = arith.constant 0 : i32
    %c0_i32_2 = arith.constant 0 : i32
    return %c0_i32, %c0_i32_0, %c0_i32_1 : i32, i32, i32
  }
  func.func @transform_2(%arg0: i32) -> (i32, i32, i32) {
    %c0_i32 = arith.constant 0 : i32
    %c0_i32_0 = arith.constant 0 : i32
    %c0_i32_1 = arith.constant 0 : i32
    %c0_i32_2 = arith.constant 0 : i32
    return %c0_i32, %c0_i32_0, %c0_i32_1 : i32, i32, i32
  }
  func.func @transform_3(%arg0: i32) -> (i32, i32) {
    %c0_i32 = arith.constant 0 : i32
    %c0_i32_0 = arith.constant 0 : i32
    %c0_i32_1 = arith.constant 0 : i32
    return %c0_i32, %c0_i32_0 : i32, i32
  }
  func.func @transform_4(%arg0: i32) -> (i32, i32) {
    %c0_i32 = arith.constant 0 : i32
    %c0_i32_0 = arith.constant 0 : i32
    %c0_i32_1 = arith.constant 0 : i32
    return %c0_i32, %c0_i32_0 : i32, i32
  }
  func.func @transform_5(%arg0: i32) -> (i32, i32) {
    %c0_i32 = arith.constant 0 : i32
    %c0_i32_0 = arith.constant 0 : i32
    %c0_i32_1 = arith.constant 0 : i32
    return %c0_i32, %c0_i32_0 : i32, i32
  }
  func.func @transform_6(%arg0: i32) -> (i32, i32) {
    %c0_i32 = arith.constant 0 : i32
    %c0_i32_0 = arith.constant 0 : i32
    %c0_i32_1 = arith.constant 0 : i32
    return %c0_i32, %c0_i32_0 : i32, i32
  }
  func.func @transform_7(%arg0: i32) -> (i32, i32) {
    %c0_i32 = arith.constant 0 : i32
    %c0_i32_0 = arith.constant 0 : i32
    %c0_i32_1 = arith.constant 0 : i32
    return %c0_i32, %c0_i32_0 : i32, i32
  }
  func.func @transform_8(%arg0: i32) -> (i32, i32) {
    %c0_i32 = arith.constant 0 : i32
    %c0_i32_0 = arith.constant 0 : i32
    %c0_i32_1 = arith.constant 0 : i32
    return %c0_i32, %c0_i32_0 : i32, i32
  }
  func.func @transform_9(%arg0: i32) -> (i32, i32) {
    %c0_i32 = arith.constant 0 : i32
    %c0_i32_0 = arith.constant 0 : i32
    %c0_i32_1 = arith.constant 0 : i32
    return %c0_i32, %c0_i32_0 : i32, i32
  }
  func.func @transform_10(%arg0: i32) -> (i32, i32) {
    %c0_i32 = arith.constant 0 : i32
    %c0_i32_0 = arith.constant 0 : i32
    %c0_i32_1 = arith.constant 0 : i32
    return %c0_i32, %c0_i32_0 : i32, i32
  }
  func.func @transform_11(%arg0: i32) -> (i32, i32) {
    %c0_i32 = arith.constant 0 : i32
    %c0_i32_0 = arith.constant 0 : i32
    %c0_i32_1 = arith.constant 0 : i32
    return %c0_i32, %c0_i32_0 : i32, i32
  }
  func.func @transform_12(%arg0: i32) -> (i32, i32, i32) {
    %c0_i32 = arith.constant 0 : i32
    %c0_i32_0 = arith.constant 0 : i32
    %c0_i32_1 = arith.constant 0 : i32
    %c0_i32_2 = arith.constant 0 : i32
    return %c0_i32, %c0_i32_0, %c0_i32_1 : i32, i32, i32
  }
  func.func @transform_13(%arg0: i32) -> (i32, i32, i32) {
    %c0_i32 = arith.constant 0 : i32
    %c0_i32_0 = arith.constant 0 : i32
    %c0_i32_1 = arith.constant 0 : i32
    %c0_i32_2 = arith.constant 0 : i32
    return %c0_i32, %c0_i32_0, %c0_i32_1 : i32, i32, i32
  }
}

</mosaic_0001>

<llo_original>
// kernel: sentiment_rnn_forward.1
$region0: #{sentiment_rnn_forward.1}
  #allocation0 [shape = 'u32[]', space=smem, size = 0x4, offset = 0x4, fixed_abs, tag = 'smem constant byte address 0x4 - core index']
  #allocation1 [shape = 'u32[144,128]{1,0:T(1,128)}', space=vmem, size = 0x12000, scoped, tag = 'internal scratch']
  #allocation2 [shape = 'f32[2,16,32]{2,1,0:T(8,128)}', space=vmem, size = 0x4000, scoped, tag = 'scratch operand']
  #allocation3 [shape = 'f32[2,16,32]{2,1,0:T(8,128)}', space=vmem, size = 0x4000, scoped, tag = 'scratch operand']
  #allocation4 [shape = 'f32[8,16,32]{2,1,0:T(8,128)}', space=vmem, size = 0x10000, scoped, tag = 'scratch operand']
  #allocation5 [shape = 'f32[8,16,128]{2,1,0:T(8,128)}', space=vmem, size = 0x10000, scoped, tag = 'scratch operand']
  %s0 = inlined_call_operand.vmem [shape: bf16[8,16,32], index: 0, kind: input, shape index: {}]
  %s1 = inlined_call_operand.vmem [shape: f32[2,16,32], index: 1, kind: input, shape index: {}]
  %s2 = inlined_call_operand.vmem [shape: f32[2,16,32], index: 2, kind: input, shape index: {}]
  %s3 = inlined_call_operand.vmem [shape: bf16[32,128], index: 3, kind: input, shape index: {}]
  %s4 = inlined_call_operand.vmem [shape: bf16[32,128], index: 4, kind: input, shape index: {}]
  %s5 = inlined_call_operand.vmem [shape: f32[1,128], index: 5, kind: input, shape index: {}]
  %s6 = inlined_call_operand.vmem [shape: bf16[32,128], index: 6, kind: input, shape index: {}]
  %s7 = inlined_call_operand.vmem [shape: bf16[32,128], index: 7, kind: input, shape index: {}]
  %s8 = inlined_call_operand.vmem [shape: f32[1,128], index: 8, kind: input, shape index: {}]
  %s9 = inlined_call_operand.vmem [shape: bf16[32,128], index: 9, kind: input, shape index: {}]
  %s10 = inlined_call_operand.vmem [shape: f32[1,128], index: 10, kind: input, shape index: {}]
  %s11 = inlined_call_operand.vmem [shape: f32[16,128], index: 11, kind: output, shape index: {0}]
  %s12 = inlined_call_operand.vmem [shape: f32[2,16,32], index: 12, kind: output, shape index: {1}]
  %s13 = inlined_call_operand.vmem [shape: f32[2,16,32], index: 13, kind: output, shape index: {2}]
  %14 = xla_tuple %s11, %s12, %s13
  %s15 = sld [smem:[#allocation0]]
  $region78: #{sentiment_rnn_forward.1} parent=0
    _
  %s17 = ssub.s32 1, %s15
  %s18 = scalar_select 0, %s17, %s15
  // Predicated region
  $region2: #{sentiment_rnn_forward.1} parent=0 // pred_check
    _
  $region3: #{sentiment_rnn_forward.1} parent=0 // pred_check_branch
    %20 = sbr.rel (0) target = $region5
  $region4: #{sentiment_rnn_forward.1} parent=0 // pred_region
    _
  $region5: #{sentiment_rnn_forward.1} parent=0 // pred_fallthru
    _
  // Predicated region
  $region6: #{sentiment_rnn_forward.1} parent=0 // pred_check
    _
  $region7: #{sentiment_rnn_forward.1} parent=0 // pred_check_branch
    %22 = sbr.rel (0) target = $region9
  $region8: #{sentiment_rnn_forward.1} parent=0 // pred_region
    _
  $region9: #{sentiment_rnn_forward.1} parent=0 // pred_fallthru
    _
  // Predicated region
  $region10: #{sentiment_rnn_forward.1} parent=0 // pred_check
    _
  $region11: #{sentiment_rnn_forward.1} parent=0 // pred_check_branch
    %24 = sbr.rel (0) target = $region13
  $region12: #{sentiment_rnn_forward.1} parent=0 // pred_region
    _
  $region13: #{sentiment_rnn_forward.1} parent=0 // pred_fallthru
    _
  // Predicated region
  $region14: #{sentiment_rnn_forward.1} parent=0 // pred_check
    _
  $region15: #{sentiment_rnn_forward.1} parent=0 // pred_check_branch
    %26 = sbr.rel (0) target = $region17
  $region16: #{sentiment_rnn_forward.1} parent=0 // pred_region
    _
  $region17: #{sentiment_rnn_forward.1} parent=0 // pred_fallthru
    _
  // Predicated region
  $region18: #{sentiment_rnn_forward.1} parent=0 // pred_check
    _
  $region19: #{sentiment_rnn_forward.1} parent=0 // pred_check_branch
    %28 = sbr.rel (0) target = $region21
  $region20: #{sentiment_rnn_forward.1} parent=0 // pred_region
    _
  $region21: #{sentiment_rnn_forward.1} parent=0 // pred_fallthru
    _
  // Predicated region
  $region22: #{sentiment_rnn_forward.1} parent=0 // pred_check
    _
  $region23: #{sentiment_rnn_forward.1} parent=0 // pred_check_branch
    %30 = sbr.rel (0) target = $region25
  $region24: #{sentiment_rnn_forward.1} parent=0 // pred_region
    _
  $region25: #{sentiment_rnn_forward.1} parent=0 // pred_fallthru
    _
  // Predicated region
  $region26: #{sentiment_rnn_forward.1} parent=0 // pred_check
    _
  $region27: #{sentiment_rnn_forward.1} parent=0 // pred_check_branch
    %32 = sbr.rel (0) target = $region29
  $region28: #{sentiment_rnn_forward.1} parent=0 // pred_region
    _
  $region29: #{sentiment_rnn_forward.1} parent=0 // pred_fallthru
    _
  // Predicated region
  $region30: #{sentiment_rnn_forward.1} parent=0 // pred_check
    _
  $region31: #{sentiment_rnn_forward.1} parent=0 // pred_check_branch
    %34 = sbr.rel (0) target = $region33
  $region32: #{sentiment_rnn_forward.1} parent=0 // pred_region
    _
  $region33: #{sentiment_rnn_forward.1} parent=0 // pred_fallthru
    _
  // Predicated region
  $region34: #{sentiment_rnn_forward.1} parent=0 // pred_check
    _
  $region35: #{sentiment_rnn_forward.1} parent=0 // pred_check_branch
    %36 = sbr.rel (0) target = $region37
  $region36: #{sentiment_rnn_forward.1} parent=0 // pred_region
    _
  $region37: #{sentiment_rnn_forward.1} parent=0 // pred_fallthru
    _
  // Predicated region
  $region38: #{sentiment_rnn_forward.1} parent=0 // pred_check
    _
  $region39: #{sentiment_rnn_forward.1} parent=0 // pred_check_branch
    %38 = sbr.rel (0) target = $region41
  $region40: #{sentiment_rnn_forward.1} parent=0 // pred_region
    _
  $region41: #{sentiment_rnn_forward.1} parent=0 // pred_fallthru
    _
  // Predicated region
  $region42: #{sentiment_rnn_forward.1} parent=0 // pred_check
    _
  $region43: #{sentiment_rnn_forward.1} parent=0 // pred_check_branch
    %40 = sbr.rel (0) target = $region45
  $region44: #{sentiment_rnn_forward.1} parent=0 // pred_region
    _
  $region45: #{sentiment_rnn_forward.1} parent=0 // pred_fallthru
    _
  %p42 = scmp.eq.s32.totalorder 0, 0
  // Predicated region
  $region46: #{sentiment_rnn_forward.1} parent=0 // pred_check
    %p43 = pneg %p42
  $region47: #{sentiment_rnn_forward.1} parent=0 // pred_check_branch
    %45 = sbr.rel (%p43) target = $region49
  $region48: #{sentiment_rnn_forward.1} parent=0 // pred_region
    %v46 = vld [vmem:[%s1] sm:$0xff]
    %v47 = vld [vmem:[%s1 + $0x8] sm:$0xff]
    %v48 = vld [vmem:[%s1 + $0x10] sm:$0xff]
    %v49 = vld [vmem:[%s1 + $0x18] sm:$0xff]
    %vm50 = vcmask 261120
    %51 = vst.msk [vmem:[#allocation2] sm:$0xff] %vm50, %v46
    %52 = vst.msk [vmem:[#allocation2 + $0x8] sm:$0xff] %vm50, %v47
    %53 = vst.msk [vmem:[#allocation2 + $0x10] sm:$0xff] %vm50, %v48
    %54 = vst.msk [vmem:[#allocation2 + $0x18] sm:$0xff] %vm50, %v49
    %v55 = vld [vmem:[%s2] sm:$0xff]
    %v56 = vld [vmem:[%s2 + $0x8] sm:$0xff]
    %v57 = vld [vmem:[%s2 + $0x10] sm:$0xff]
    %v58 = vld [vmem:[%s2 + $0x18] sm:$0xff]
    %59 = vst.msk [vmem:[#allocation3] sm:$0xff] %vm50, %v55
    %60 = vst.msk [vmem:[#allocation3 + $0x8] sm:$0xff] %vm50, %v56
    %61 = vst.msk [vmem:[#allocation3 + $0x10] sm:$0xff] %vm50, %v57
    %62 = vst.msk [vmem:[#allocation3 + $0x18] sm:$0xff] %vm50, %v58
  $region49: #{sentiment_rnn_forward.1} parent=0 // pred_fallthru
    _
  %v63 = vld [vmem:[%s3] sm:$0xf]
  %v64 = vld [vmem:[%s3 + $0x4] sm:$0xf]
  %v65 = vld [vmem:[%s3 + $0x8] sm:$0xf]
  %v66 = vld [vmem:[%s3 + $0xc] sm:$0xf]
  %v67 = vld [vmem:[%s4] sm:$0xf]
  %v68 = vld [vmem:[%s4 + $0x4] sm:$0xf]
  %v69 = vld [vmem:[%s4 + $0x8] sm:$0xf]
  %v70 = vld [vmem:[%s4 + $0xc] sm:$0xf]
  %v71 = vld [vmem:[%s5] sm:$0x1]
  %v72 = vld [vmem:[%s0] sm:$0xf]
  %v73 = vld [vmem:[%s0 + $0x4] sm:$0xf]
  %v74 = vld [vmem:[%s0 + $0x8] sm:$0xf]
  %v75 = vld [vmem:[%s0 + $0xc] sm:$0xf]
  %v76 = vld [vmem:[%s0 + $0x10] sm:$0xf]
  %v77 = vld [vmem:[%s0 + $0x14] sm:$0xf]
  %v78 = vld [vmem:[%s0 + $0x18] sm:$0xf]
  %v79 = vld [vmem:[%s0 + $0x1c] sm:$0xf]
  %v80 = vld [vmem:[%s0 + $0x20] sm:$0xf]
  %v81 = vld [vmem:[%s0 + $0x24] sm:$0xf]
  %v82 = vld [vmem:[%s0 + $0x28] sm:$0xf]
  %v83 = vld [vmem:[%s0 + $0x2c] sm:$0xf]
  %v84 = vld [vmem:[%s0 + $0x30] sm:$0xf]
  %v85 = vld [vmem:[%s0 + $0x34] sm:$0xf]
  %v86 = vld [vmem:[%s0 + $0x38] sm:$0xf]
  %v87 = vld [vmem:[%s0 + $0x3c] sm:$0xf]
  %v89 = vlaneseq
  %v90 = vshrl.u32 %v89, 7
  %v91 = vsub.s32 0, %v90
  %v92 = vrot.slane %v71, %v91
  %v110 = vunpack.c.l.b16 %v72
  %v111 = vunpack.c.l.b16 %v73
  %v112 = vunpack.c.l.b16 %v74
  %v113 = vunpack.c.l.b16 %v75
  %v114 = vunpack.c.l.b16 %v76
  %v115 = vunpack.c.l.b16 %v77
  %v116 = vunpack.c.l.b16 %v78
  %v117 = vunpack.c.l.b16 %v79
  %v118 = vunpack.c.l.b16 %v80
  %v119 = vunpack.c.l.b16 %v81
  %v120 = vunpack.c.l.b16 %v82
  %v121 = vunpack.c.l.b16 %v83
  %v122 = vunpack.c.l.b16 %v84
  %v123 = vunpack.c.l.b16 %v85
  %v124 = vunpack.c.l.b16 %v86
  %v125 = vunpack.c.l.b16 %v87
  %v126 = vpack.c.b16 %v111, %v110
  %v127 = vpack.c.b16 %v113, %v112
  %v128 = vpack.c.b16 %v115, %v114
  %v129 = vpack.c.b16 %v117, %v116
  %v130 = vpack.c.b16 %v119, %v118
  %v131 = vpack.c.b16 %v121, %v120
  %v132 = vpack.c.b16 %v123, %v122
  %v133 = vpack.c.b16 %v125, %v124
  %v138 = vunpack.c.l.b16 %v63
  %v139 = vunpack.c.l.b16 %v64
  %v140 = vunpack.c.l.b16 %v65
  %v141 = vunpack.c.l.b16 %v66
  %v142 = vpack.c.b16 %v139, %v138
  %v143 = vpack.c.b16 %v141, %v140
  %vm146 = vcmask 261120
  %v148 = vsel %vm146, %v126, 0
  %v151 = vsel %vm146, %v127, 0
  %v154 = vsel %vm146, %v128, 0
  %v157 = vsel %vm146, %v129, 0
  %v160 = vsel %vm146, %v130, 0
  %v163 = vsel %vm146, %v131, 0
  %v166 = vsel %vm146, %v132, 0
  %v169 = vsel %vm146, %v133, 0
  %171 = vmatprep.subr.bf16.mxu0 0
  %172 = vmatpush1.bf16.msra.mxu0 0
  %173 = vmatprep.subr.bf16.mxu0 0
  %174 = vmatpush1.bf16.msra.mxu0 0
  %175 = vmatprep.subr.bf16.mxu0 0
  %176 = vmatpush1.bf16.msra.mxu0 0
  %177 = vmatprep.subr.bf16.mxu0 0
  %178 = vmatpush1.bf16.msra.mxu0 0
  %179 = vmatprep.subr.bf16.mxu0 0
  %180 = vmatpush1.bf16.msra.mxu0 0
  %181 = vmatprep.subr.bf16.mxu0 0
  %182 = vmatpush1.bf16.msra.mxu0 0
  %183 = vmatprep.subr.bf16.mxu0 0
  %184 = vmatpush1.bf16.msra.mxu0 %v143
  %185 = vmatprep.subr.bf16.mxu0 0
  %186 = vmatpush1.bf16.msra.mxu0 %v142
  %187 = vmatprep.subr.bf16.mxu0 0
  %188 = vmatpush2.bf16.msra.mxu0 0
  %189 = vmatprep.subr.bf16.mxu0 0
  %190 = vmatpush2.bf16.msra.mxu0 0
  %191 = vmatprep.subr.bf16.mxu0 0
  %192 = vmatpush2.bf16.msra.mxu0 0
  %193 = vmatprep.subr.bf16.mxu0 0
  %194 = vmatpush2.bf16.msra.mxu0 0
  %195 = vmatprep.subr.bf16.mxu0 0
  %196 = vmatpush2.bf16.msra.mxu0 0
  %197 = vmatprep.subr.bf16.mxu0 0
  %198 = vmatpush2.bf16.msra.mxu0 0
  %199 = vmatprep.subr.bf16.mxu0 0
  %200 = vmatpush2.bf16.msra.mxu0 0
  %201 = vmatprep.subr.bf16.mxu0 0
  %202 = vmatpush2.bf16.msra.mxu0 0
  %203 = vmatprep.mubr.bf16.mxu0 0
  %204 = vmatmul.mubr.bf16.gmra.mxu0 %v148
  %v205 = vpop.f32.mrf.mxu0
  %v206 = vadd.f32 %v92, %v205
  %v207 = vpop.f32.mrf.mxu0
  %v208 = vpop.f32.mrf.mxu0
  %v209 = vadd.f32 %v92, %v208
  %v210 = vpop.f32.mrf.mxu0
  %211 = vmatprep.mubr.bf16.mxu0 0
  %212 = vmatmul.mubr.bf16.gmra.mxu0 %v151
  %v213 = vpop.f32.mrf.mxu0
  %v214 = vadd.f32 %v92, %v213
  %v215 = vpop.f32.mrf.mxu0
  %v216 = vpop.f32.mrf.mxu0
  %v217 = vadd.f32 %v92, %v216
  %v218 = vpop.f32.mrf.mxu0
  %219 = vmatprep.mubr.bf16.mxu0 0
  %220 = vmatmul.mubr.bf16.gmra.mxu0 %v154
  %v221 = vpop.f32.mrf.mxu0
  %v222 = vadd.f32 %v92, %v221
  %v223 = vpop.f32.mrf.mxu0
  %v224 = vpop.f32.mrf.mxu0
  %v225 = vadd.f32 %v92, %v224
  %v226 = vpop.f32.mrf.mxu0
  %227 = vmatprep.mubr.bf16.mxu0 0
  %228 = vmatmul.mubr.bf16.gmra.mxu0 %v157
  %v229 = vpop.f32.mrf.mxu0
  %v230 = vadd.f32 %v92, %v229
  %v231 = vpop.f32.mrf.mxu0
  %v232 = vpop.f32.mrf.mxu0
  %v233 = vadd.f32 %v92, %v232
  %v234 = vpop.f32.mrf.mxu0
  %235 = vmatprep.mubr.bf16.mxu0 0
  %236 = vmatmul.mubr.bf16.gmra.mxu0 %v160
  %v237 = vpop.f32.mrf.mxu0
  %v238 = vadd.f32 %v92, %v237
  %v239 = vpop.f32.mrf.mxu0
  %v240 = vpop.f32.mrf.mxu0
  %v241 = vadd.f32 %v92, %v240
  %v242 = vpop.f32.mrf.mxu0
  %243 = vmatprep.mubr.bf16.mxu0 0
  %244 = vmatmul.mubr.bf16.gmra.mxu0 %v163
  %v245 = vpop.f32.mrf.mxu0
  %v246 = vadd.f32 %v92, %v245
  %v247 = vpop.f32.mrf.mxu0
  %v248 = vpop.f32.mrf.mxu0
  %v249 = vadd.f32 %v92, %v248
  %v250 = vpop.f32.mrf.mxu0
  %251 = vmatprep.mubr.bf16.mxu0 0
  %252 = vmatmul.mubr.bf16.gmra.mxu0 %v166
  %v253 = vpop.f32.mrf.mxu0
  %v254 = vadd.f32 %v92, %v253
  %v255 = vpop.f32.mrf.mxu0
  %v256 = vpop.f32.mrf.mxu0
  %v257 = vadd.f32 %v92, %v256
  %v258 = vpop.f32.mrf.mxu0
  %259 = vmatprep.mubr.bf16.mxu0 0
  %260 = vmatmul.mubr.bf16.gmra.mxu0 %v169
  %v261 = vpop.f32.mrf.mxu0
  %v262 = vadd.f32 %v92, %v261
  %v263 = vpop.f32.mrf.mxu0
  %v264 = vpop.f32.mrf.mxu0
  %v265 = vadd.f32 %v92, %v264
  %v266 = vpop.f32.mrf.mxu0
  %267 = vdwg.mxu0
  %268 = vst [vmem:[#allocation5] sm:$0xff] %v206
  %269 = vst [vmem:[#allocation5 + $0x8] sm:$0xff] %v209
  %270 = vst [vmem:[#allocation5 + $0x10] sm:$0xff] %v214
  %271 = vst [vmem:[#allocation5 + $0x18] sm:$0xff] %v217
  %272 = vst [vmem:[#allocation5 + $0x20] sm:$0xff] %v222
  %273 = vst [vmem:[#allocation5 + $0x28] sm:$0xff] %v225
  %274 = vst [vmem:[#allocation5 + $0x30] sm:$0xff] %v230
  %275 = vst [vmem:[#allocation5 + $0x38] sm:$0xff] %v233
  %276 = vst [vmem:[#allocation5 + $0x40] sm:$0xff] %v238
  %277 = vst [vmem:[#allocation5 + $0x48] sm:$0xff] %v241
  %278 = vst [vmem:[#allocation5 + $0x50] sm:$0xff] %v246
  %279 = vst [vmem:[#allocation5 + $0x58] sm:$0xff] %v249
  %280 = vst [vmem:[#allocation5 + $0x60] sm:$0xff] %v254
  %281 = vst [vmem:[#allocation5 + $0x68] sm:$0xff] %v257
  %282 = vst [vmem:[#allocation5 + $0x70] sm:$0xff] %v262
  %283 = vst [vmem:[#allocation5 + $0x78] sm:$0xff] %v265
  %v284 = vld [vmem:[#allocation2] sm:$0xff]
  %v285 = vld [vmem:[#allocation2 + $0x8] sm:$0xff]
  %v286 = vld [vmem:[#allocation3] sm:$0xff]
  %v287 = vld [vmem:[#allocation3 + $0x8] sm:$0xff]
  %v288 = vld [vmem:[#allocation5] sm:$0xff]
  %v289 = vld [vmem:[#allocation5 + $0x8] sm:$0xff]
  %v290 = vpack.c.bf16 %v285, %v284
  %v295 = vunpack.c.l.b16 %v67
  %v296 = vunpack.c.l.b16 %v68
  %v297 = vunpack.c.l.b16 %v69
  %v298 = vunpack.c.l.b16 %v70
  %v299 = vpack.c.b16 %v296, %v295
  %v300 = vpack.c.b16 %v298, %v297
  %v304 = vsel %vm146, %v290, 0
  %306 = vmatprep.subr.bf16.mxu0 0
  %307 = vmatpush1.bf16.msra.mxu0 0
  %308 = vmatprep.subr.bf16.mxu0 0
  %309 = vmatpush1.bf16.msra.mxu0 0
  %310 = vmatprep.subr.bf16.mxu0 0
  %311 = vmatpush1.bf16.msra.mxu0 0
  %312 = vmatprep.subr.bf16.mxu0 0
  %313 = vmatpush1.bf16.msra.mxu0 0
  %314 = vmatprep.subr.bf16.mxu0 0
  %315 = vmatpush1.bf16.msra.mxu0 0
  %316 = vmatprep.subr.bf16.mxu0 0
  %317 = vmatpush1.bf16.msra.mxu0 0
  %318 = vmatprep.subr.bf16.mxu0 0
  %319 = vmatpush1.bf16.msra.mxu0 %v300
  %320 = vmatprep.subr.bf16.mxu0 0
  %321 = vmatpush1.bf16.msra.mxu0 %v299
  %322 = vmatprep.subr.bf16.mxu0 0
  %323 = vmatpush2.bf16.msra.mxu0 0
  %324 = vmatprep.subr.bf16.mxu0 0
  %325 = vmatpush2.bf16.msra.mxu0 0
  %326 = vmatprep.subr.bf16.mxu0 0
  %327 = vmatpush2.bf16.msra.mxu0 0
  %328 = vmatprep.subr.bf16.mxu0 0
  %329 = vmatpush2.bf16.msra.mxu0 0
  %330 = vmatprep.subr.bf16.mxu0 0
  %331 = vmatpush2.bf16.msra.mxu0 0
  %332 = vmatprep.subr.bf16.mxu0 0
  %333 = vmatpush2.bf16.msra.mxu0 0
  %334 = vmatprep.subr.bf16.mxu0 0
  %335 = vmatpush2.bf16.msra.mxu0 0
  %336 = vmatprep.subr.bf16.mxu0 0
  %337 = vmatpush2.bf16.msra.mxu0 0
  %338 = vmatprep.mubr.bf16.mxu0 0
  %339 = vmatmul.mubr.bf16.gmra.mxu0 %v304
  %v340 = vpop.f32.mrf.mxu0
  %v341 = vadd.f32 0.0, %v340
  %v342 = vpop.f32.mrf.mxu0
  %v343 = vpop.f32.mrf.mxu0
  %v344 = vadd.f32 0.0, %v343
  %v345 = vpop.f32.mrf.mxu0
  %346 = vdwg.mxu0
  %v347 = vadd.f32 %v288, %v341
  %v348 = vadd.f32 %v289, %v344
  %v349 = vxor.u32 %v347, 2147483648
  %v350 = vxor.u32 %v348, 2147483648
  %v351 = vmul.f32 %v349, 1.442695
  %v352 = vpow.pop %v351
  %v353 = vmul.f32 %v350, 1.442695
  %v354 = vpow.pop %v353
  %v355 = vadd.f32 %v352, 1.0
  %v356 = vadd.f32 %v354, 1.0
  %v357 = vrcp.pop %v355
  %v358 = vmul.f32 1.0, %v357
  %v359 = vrcp.pop %v356
  %v360 = vmul.f32 1.0, %v359
  %v361 = vtanh.pop %v347
  %v362 = vtanh.pop %v348
  %365 = vrot.lane.b32.xlu0 %v286, 32
  %v366 = vpop.permute.xlu0 %365
  %367 = vrot.lane.b32.xlu0 %v287, 32
  %v368 = vpop.permute.xlu0 %367
  %v371 = vmul.f32 %v358, %v366
  %v372 = vmul.f32 %v360, %v368
  %375 = vrot.lane.b32.xlu0 %v361, 32
  %v376 = vpop.permute.xlu0 %375
  %377 = vrot.lane.b32.xlu0 %v362, 32
  %v378 = vpop.permute.xlu0 %377
  %v381 = vmul.f32 %v358, %v376
  %v382 = vmul.f32 %v360, %v378
  %385 = vrot.lane.b32.xlu0 %v381, 32
  %v386 = vpop.permute.xlu0 %385
  %387 = vrot.lane.b32.xlu0 %v382, 32
  %v388 = vpop.permute.xlu0 %387
  %v391 = vadd.f32 %v371, %v386
  %v392 = vadd.f32 %v372, %v388
  %v393 = vtanh.pop %v391
  %v394 = vtanh.pop %v392
  %397 = vrot.lane.b32.xlu0 %v393, 32
  %v398 = vpop.permute.xlu0 %397
  %399 = vrot.lane.b32.xlu0 %v394, 32
  %v400 = vpop.permute.xlu0 %399
  %v403 = vmul.f32 %v358, %v398
  %v404 = vmul.f32 %v360, %v400
  %407 = vrot.lane.b32.xlu0 %v403, 64
  %v408 = vpop.permute.xlu0 %407
  %409 = vrot.lane.b32.xlu0 %v404, 64
  %v410 = vpop.permute.xlu0 %409
  %413 = vst.msk [vmem:[#allocation4] sm:$0xff] %vm146, %v408
  %414 = vst.msk [vmem:[#allocation4 + $0x8] sm:$0xff] %vm146, %v410
  %s415 = scalar_lea.vmem [#allocation5], 16
  %v416 = vld [vmem:[%s415] sm:$0xff]
  %v417 = vld [vmem:[%s415 + $0x8] sm:$0xff]
  %v418 = vpack.c.bf16 %v404, %v403
  %420 = vrot.lane.b32.xlu0 %v418, 64
  %v421 = vpop.permute.xlu0 %420
  %v423 = vsel %vm146, %v421, 0
  %425 = vmatprep.subr.bf16.mxu0 0
  %426 = vmatpush1.bf16.msra.mxu0 0
  %427 = vmatprep.subr.bf16.mxu0 0
  %428 = vmatpush1.bf16.msra.mxu0 0
  %429 = vmatprep.subr.bf16.mxu0 0
  %430 = vmatpush1.bf16.msra.mxu0 0
  %431 = vmatprep.subr.bf16.mxu0 0
  %432 = vmatpush1.bf16.msra.mxu0 0
  %433 = vmatprep.subr.bf16.mxu0 0
  %434 = vmatpush1.bf16.msra.mxu0 0
  %435 = vmatprep.subr.bf16.mxu0 0
  %436 = vmatpush1.bf16.msra.mxu0 0
  %437 = vmatprep.subr.bf16.mxu0 0
  %438 = vmatpush1.bf16.msra.mxu0 %v300
  %439 = vmatprep.subr.bf16.mxu0 0
  %440 = vmatpush1.bf16.msra.mxu0 %v299
  %441 = vmatprep.subr.bf16.mxu0 0
  %442 = vmatpush2.bf16.msra.mxu0 0
  %443 = vmatprep.subr.bf16.mxu0 0
  %444 = vmatpush2.bf16.msra.mxu0 0
  %445 = vmatprep.subr.bf16.mxu0 0
  %446 = vmatpush2.bf16.msra.mxu0 0
  %447 = vmatprep.subr.bf16.mxu0 0
  %448 = vmatpush2.bf16.msra.mxu0 0
  %449 = vmatprep.subr.bf16.mxu0 0
  %450 = vmatpush2.bf16.msra.mxu0 0
  %451 = vmatprep.subr.bf16.mxu0 0
  %452 = vmatpush2.bf16.msra.mxu0 0
  %453 = vmatprep.subr.bf16.mxu0 0
  %454 = vmatpush2.bf16.msra.mxu0 0
  %455 = vmatprep.subr.bf16.mxu0 0
  %456 = vmatpush2.bf16.msra.mxu0 0
  %457 = vmatprep.mubr.bf16.mxu0 0
  %458 = vmatmul.mubr.bf16.gmra.mxu0 %v423
  %v459 = vpop.f32.mrf.mxu0
  %v460 = vadd.f32 0.0, %v459
  %v461 = vpop.f32.mrf.mxu0
  %v462 = vpop.f32.mrf.mxu0
  %v463 = vadd.f32 0.0, %v462
  %v464 = vpop.f32.mrf.mxu0
  %465 = vdwg.mxu0
  %v466 = vadd.f32 %v416, %v460
  %v467 = vadd.f32 %v417, %v463
  %v468 = vxor.u32 %v466, 2147483648
  %v469 = vxor.u32 %v467, 2147483648
  %v470 = vmul.f32 %v468, 1.442695
  %v471 = vpow.pop %v470
  %v472 = vmul.f32 %v469, 1.442695
  %v473 = vpow.pop %v472
  %v474 = vadd.f32 %v471, 1.0
  %v475 = vadd.f32 %v473, 1.0
  %v476 = vrcp.pop %v474
  %v477 = vmul.f32 1.0, %v476
  %v478 = vrcp.pop %v475
  %v479 = vmul.f32 1.0, %v478
  %v480 = vtanh.pop %v466
  %v481 = vtanh.pop %v467
  %v482 = vmul.f32 %v477, %v391
  %v483 = vmul.f32 %v479, %v392
  %486 = vrot.lane.b32.xlu0 %v480, 32
  %v487 = vpop.permute.xlu0 %486
  %488 = vrot.lane.b32.xlu0 %v481, 32
  %v489 = vpop.permute.xlu0 %488
  %v492 = vmul.f32 %v477, %v487
  %v493 = vmul.f32 %v479, %v489
  %496 = vrot.lane.b32.xlu0 %v492, 32
  %v497 = vpop.permute.xlu0 %496
  %498 = vrot.lane.b32.xlu0 %v493, 32
  %v499 = vpop.permute.xlu0 %498
  %v502 = vadd.f32 %v482, %v497
  %v503 = vadd.f32 %v483, %v499
  %v504 = vtanh.pop %v502
  %v505 = vtanh.pop %v503
  %508 = vrot.lane.b32.xlu0 %v504, 32
  %v509 = vpop.permute.xlu0 %508
  %510 = vrot.lane.b32.xlu0 %v505, 32
  %v511 = vpop.permute.xlu0 %510
  %v514 = vmul.f32 %v477, %v509
  %v515 = vmul.f32 %v479, %v511
  %518 = vrot.lane.b32.xlu0 %v514, 64
  %v519 = vpop.permute.xlu0 %518
  %520 = vrot.lane.b32.xlu0 %v515, 64
  %v521 = vpop.permute.xlu0 %520
  %s524 = scalar_lea.vmem [#allocation4], 16
  %525 = vst.msk [vmem:[%s524] sm:$0xff] %vm146, %v519
  %526 = vst.msk [vmem:[%s524 + $0x8] sm:$0xff] %vm146, %v521
  %s527 = scalar_lea.vmem [#allocation5], 32
  %v528 = vld [vmem:[%s527] sm:$0xff]
  %v529 = vld [vmem:[%s527 + $0x8] sm:$0xff]
  %v530 = vpack.c.bf16 %v515, %v514
  %532 = vrot.lane.b32.xlu0 %v530, 64
  %v533 = vpop.permute.xlu0 %532
  %v535 = vsel %vm146, %v533, 0
  %537 = vmatprep.subr.bf16.mxu0 0
  %538 = vmatpush1.bf16.msra.mxu0 0
  %539 = vmatprep.subr.bf16.mxu0 0
  %540 = vmatpush1.bf16.msra.mxu0 0
  %541 = vmatprep.subr.bf16.mxu0 0
  %542 = vmatpush1.bf16.msra.mxu0 0
  %543 = vmatprep.subr.bf16.mxu0 0
  %544 = vmatpush1.bf16.msra.mxu0 0
  %545 = vmatprep.subr.bf16.mxu0 0
  %546 = vmatpush1.bf16.msra.mxu0 0
  %547 = vmatprep.subr.bf16.mxu0 0
  %548 = vmatpush1.bf16.msra.mxu0 0
  %549 = vmatprep.subr.bf16.mxu0 0
  %550 = vmatpush1.bf16.msra.mxu0 %v300
  %551 = vmatprep.subr.bf16.mxu0 0
  %552 = vmatpush1.bf16.msra.mxu0 %v299
  %553 = vmatprep.subr.bf16.mxu0 0
  %554 = vmatpush2.bf16.msra.mxu0 0
  %555 = vmatprep.subr.bf16.mxu0 0
  %556 = vmatpush2.bf16.msra.mxu0 0
  %557 = vmatprep.subr.bf16.mxu0 0
  %558 = vmatpush2.bf16.msra.mxu0 0
  %559 = vmatprep.subr.bf16.mxu0 0
  %560 = vmatpush2.bf16.msra.mxu0 0
  %561 = vmatprep.subr.bf16.mxu0 0
  %562 = vmatpush2.bf16.msra.mxu0 0
  %563 = vmatprep.subr.bf16.mxu0 0
  %564 = vmatpush2.bf16.msra.mxu0 0
  %565 = vmatprep.subr.bf16.mxu0 0
  %566 = vmatpush2.bf16.msra.mxu0 0
  %567 = vmatprep.subr.bf16.mxu0 0
  %568 = vmatpush2.bf16.msra.mxu0 0
  %569 = vmatprep.mubr.bf16.mxu0 0
  %570 = vmatmul.mubr.bf16.gmra.mxu0 %v535
  %v571 = vpop.f32.mrf.mxu0
  %v572 = vadd.f32 0.0, %v571
  %v573 = vpop.f32.mrf.mxu0
  %v574 = vpop.f32.mrf.mxu0
  %v575 = vadd.f32 0.0, %v574
  %v576 = vpop.f32.mrf.mxu0
  %577 = vdwg.mxu0
  %v578 = vadd.f32 %v528, %v572
  %v579 = vadd.f32 %v529, %v575
  %v580 = vxor.u32 %v578, 2147483648
  %v581 = vxor.u32 %v579, 2147483648
  %v582 = vmul.f32 %v580, 1.442695
  %v583 = vpow.pop %v582
  %v584 = vmul.f32 %v581, 1.442695
  %v585 = vpow.pop %v584
  %v586 = vadd.f32 %v583, 1.0
  %v587 = vadd.f32 %v585, 1.0
  %v588 = vrcp.pop %v586
  %v589 = vmul.f32 1.0, %v588
  %v590 = vrcp.pop %v587
  %v591 = vmul.f32 1.0, %v590
  %v592 = vtanh.pop %v578
  %v593 = vtanh.pop %v579
  %v594 = vmul.f32 %v589, %v502
  %v595 = vmul.f32 %v591, %v503
  %598 = vrot.lane.b32.xlu0 %v592, 32
  %v599 = vpop.permute.xlu0 %598
  %600 = vrot.lane.b32.xlu0 %v593, 32
  %v601 = vpop.permute.xlu0 %600
  %v604 = vmul.f32 %v589, %v599
  %v605 = vmul.f32 %v591, %v601
  %608 = vrot.lane.b32.xlu0 %v604, 32
  %v609 = vpop.permute.xlu0 %608
  %610 = vrot.lane.b32.xlu0 %v605, 32
  %v611 = vpop.permute.xlu0 %610
  %v614 = vadd.f32 %v594, %v609
  %v615 = vadd.f32 %v595, %v611
  %v616 = vtanh.pop %v614
  %v617 = vtanh.pop %v615
  %620 = vrot.lane.b32.xlu0 %v616, 32
  %v621 = vpop.permute.xlu0 %620
  %622 = vrot.lane.b32.xlu0 %v617, 32
  %v623 = vpop.permute.xlu0 %622
  %v626 = vmul.f32 %v589, %v621
  %v627 = vmul.f32 %v591, %v623
  %630 = vrot.lane.b32.xlu0 %v626, 64
  %v631 = vpop.permute.xlu0 %630
  %632 = vrot.lane.b32.xlu0 %v627, 64
  %v633 = vpop.permute.xlu0 %632
  %s636 = scalar_lea.vmem [#allocation4], 32
  %637 = vst.msk [vmem:[%s636] sm:$0xff] %vm146, %v631
  %638 = vst.msk [vmem:[%s636 + $0x8] sm:$0xff] %vm146, %v633
  %s639 = scalar_lea.vmem [#allocation5], 48
  %v640 = vld [vmem:[%s639] sm:$0xff]
  %v641 = vld [vmem:[%s639 + $0x8] sm:$0xff]
  %v642 = vpack.c.bf16 %v627, %v626
  %644 = vrot.lane.b32.xlu0 %v642, 64
  %v645 = vpop.permute.xlu0 %644
  %v647 = vsel %vm146, %v645, 0
  %649 = vmatprep.subr.bf16.mxu0 0
  %650 = vmatpush1.bf16.msra.mxu0 0
  %651 = vmatprep.subr.bf16.mxu0 0
  %652 = vmatpush1.bf16.msra.mxu0 0
  %653 = vmatprep.subr.bf16.mxu0 0
  %654 = vmatpush1.bf16.msra.mxu0 0
  %655 = vmatprep.subr.bf16.mxu0 0
  %656 = vmatpush1.bf16.msra.mxu0 0
  %657 = vmatprep.subr.bf16.mxu0 0
  %658 = vmatpush1.bf16.msra.mxu0 0
  %659 = vmatprep.subr.bf16.mxu0 0
  %660 = vmatpush1.bf16.msra.mxu0 0
  %661 = vmatprep.subr.bf16.mxu0 0
  %662 = vmatpush1.bf16.msra.mxu0 %v300
  %663 = vmatprep.subr.bf16.mxu0 0
  %664 = vmatpush1.bf16.msra.mxu0 %v299
  %665 = vmatprep.subr.bf16.mxu0 0
  %666 = vmatpush2.bf16.msra.mxu0 0
  %667 = vmatprep.subr.bf16.mxu0 0
  %668 = vmatpush2.bf16.msra.mxu0 0
  %669 = vmatprep.subr.bf16.mxu0 0
  %670 = vmatpush2.bf16.msra.mxu0 0
  %671 = vmatprep.subr.bf16.mxu0 0
  %672 = vmatpush2.bf16.msra.mxu0 0
  %673 = vmatprep.subr.bf16.mxu0 0
  %674 = vmatpush2.bf16.msra.mxu0 0
  %675 = vmatprep.subr.bf16.mxu0 0
  %676 = vmatpush2.bf16.msra.mxu0 0
  %677 = vmatprep.subr.bf16.mxu0 0
  %678 = vmatpush2.bf16.msra.mxu0 0
  %679 = vmatprep.subr.bf16.mxu0 0
  %680 = vmatpush2.bf16.msra.mxu0 0
  %681 = vmatprep.mubr.bf16.mxu0 0
  %682 = vmatmul.mubr.bf16.gmra.mxu0 %v647
  %v683 = vpop.f32.mrf.mxu0
  %v684 = vadd.f32 0.0, %v683
  %v685 = vpop.f32.mrf.mxu0
  %v686 = vpop.f32.mrf.mxu0
  %v687 = vadd.f32 0.0, %v686
  %v688 = vpop.f32.mrf.mxu0
  %689 = vdwg.mxu0
  %v690 = vadd.f32 %v640, %v684
  %v691 = vadd.f32 %v641, %v687
  %v692 = vxor.u32 %v690, 2147483648
  %v693 = vxor.u32 %v691, 2147483648
  %v694 = vmul.f32 %v692, 1.442695
  %v695 = vpow.pop %v694
  %v696 = vmul.f32 %v693, 1.442695
  %v697 = vpow.pop %v696
  %v698 = vadd.f32 %v695, 1.0
  %v699 = vadd.f32 %v697, 1.0
  %v700 = vrcp.pop %v698
  %v701 = vmul.f32 1.0, %v700
  %v702 = vrcp.pop %v699
  %v703 = vmul.f32 1.0, %v702
  %v704 = vtanh.pop %v690
  %v705 = vtanh.pop %v691
  %v706 = vmul.f32 %v701, %v614
  %v707 = vmul.f32 %v703, %v615
  %710 = vrot.lane.b32.xlu0 %v704, 32
  %v711 = vpop.permute.xlu0 %710
  %712 = vrot.lane.b32.xlu0 %v705, 32
  %v713 = vpop.permute.xlu0 %712
  %v716 = vmul.f32 %v701, %v711
  %v717 = vmul.f32 %v703, %v713
  %720 = vrot.lane.b32.xlu0 %v716, 32
  %v721 = vpop.permute.xlu0 %720
  %722 = vrot.lane.b32.xlu0 %v717, 32
  %v723 = vpop.permute.xlu0 %722
  %v726 = vadd.f32 %v706, %v721
  %v727 = vadd.f32 %v707, %v723
  %v728 = vtanh.pop %v726
  %v729 = vtanh.pop %v727
  %732 = vrot.lane.b32.xlu0 %v728, 32
  %v733 = vpop.permute.xlu0 %732
  %734 = vrot.lane.b32.xlu0 %v729, 32
  %v735 = vpop.permute.xlu0 %734
  %v738 = vmul.f32 %v701, %v733
  %v739 = vmul.f32 %v703, %v735
  %742 = vrot.lane.b32.xlu0 %v738, 64
  %v743 = vpop.permute.xlu0 %742
  %744 = vrot.lane.b32.xlu0 %v739, 64
  %v745 = vpop.permute.xlu0 %744
  %s748 = scalar_lea.vmem [#allocation4], 48
  %749 = vst.msk [vmem:[%s748] sm:$0xff] %vm146, %v743
  %750 = vst.msk [vmem:[%s748 + $0x8] sm:$0xff] %vm146, %v745
  %s751 = scalar_lea.vmem [#allocation5], 64
  %v752 = vld [vmem:[%s751] sm:$0xff]
  %v753 = vld [vmem:[%s751 + $0x8] sm:$0xff]
  %v754 = vpack.c.bf16 %v739, %v738
  %756 = vrot.lane.b32.xlu0 %v754, 64
  %v757 = vpop.permute.xlu0 %756
  %v759 = vsel %vm146, %v757, 0
  %761 = vmatprep.subr.bf16.mxu0 0
  %762 = vmatpush1.bf16.msra.mxu0 0
  %763 = vmatprep.subr.bf16.mxu0 0
  %764 = vmatpush1.bf16.msra.mxu0 0
  %765 = vmatprep.subr.bf16.mxu0 0
  %766 = vmatpush1.bf16.msra.mxu0 0
  %767 = vmatprep.subr.bf16.mxu0 0
  %768 = vmatpush1.bf16.msra.mxu0 0
  %769 = vmatprep.subr.bf16.mxu0 0
  %770 = vmatpush1.bf16.msra.mxu0 0
  %771 = vmatprep.subr.bf16.mxu0 0
  %772 = vmatpush1.bf16.msra.mxu0 0
  %773 = vmatprep.subr.bf16.mxu0 0
  %774 = vmatpush1.bf16.msra.mxu0 %v300
  %775 = vmatprep.subr.bf16.mxu0 0
  %776 = vmatpush1.bf16.msra.mxu0 %v299
  %777 = vmatprep.subr.bf16.mxu0 0
  %778 = vmatpush2.bf16.msra.mxu0 0
  %779 = vmatprep.subr.bf16.mxu0 0
  %780 = vmatpush2.bf16.msra.mxu0 0
  %781 = vmatprep.subr.bf16.mxu0 0
  %782 = vmatpush2.bf16.msra.mxu0 0
  %783 = vmatprep.subr.bf16.mxu0 0
  %784 = vmatpush2.bf16.msra.mxu0 0
  %785 = vmatprep.subr.bf16.mxu0 0
  %786 = vmatpush2.bf16.msra.mxu0 0
  %787 = vmatprep.subr.bf16.mxu0 0
  %788 = vmatpush2.bf16.msra.mxu0 0
  %789 = vmatprep.subr.bf16.mxu0 0
  %790 = vmatpush2.bf16.msra.mxu0 0
  %791 = vmatprep.subr.bf16.mxu0 0
  %792 = vmatpush2.bf16.msra.mxu0 0
  %793 = vmatprep.mubr.bf16.mxu0 0
  %794 = vmatmul.mubr.bf16.gmra.mxu0 %v759
  %v795 = vpop.f32.mrf.mxu0
  %v796 = vadd.f32 0.0, %v795
  %v797 = vpop.f32.mrf.mxu0
  %v798 = vpop.f32.mrf.mxu0
  %v799 = vadd.f32 0.0, %v798
  %v800 = vpop.f32.mrf.mxu0
  %801 = vdwg.mxu0
  %v802 = vadd.f32 %v752, %v796
  %v803 = vadd.f32 %v753, %v799
  %v804 = vxor.u32 %v802, 2147483648
  %v805 = vxor.u32 %v803, 2147483648
  %v806 = vmul.f32 %v804, 1.442695
  %v807 = vpow.pop %v806
  %v808 = vmul.f32 %v805, 1.442695
  %v809 = vpow.pop %v808
  %v810 = vadd.f32 %v807, 1.0
  %v811 = vadd.f32 %v809, 1.0
  %v812 = vrcp.pop %v810
  %v813 = vmul.f32 1.0, %v812
  %v814 = vrcp.pop %v811
  %v815 = vmul.f32 1.0, %v814
  %v816 = vtanh.pop %v802
  %v817 = vtanh.pop %v803
  %v818 = vmul.f32 %v813, %v726
  %v819 = vmul.f32 %v815, %v727
  %822 = vrot.lane.b32.xlu0 %v816, 32
  %v823 = vpop.permute.xlu0 %822
  %824 = vrot.lane.b32.xlu0 %v817, 32
  %v825 = vpop.permute.xlu0 %824
  %v828 = vmul.f32 %v813, %v823
  %v829 = vmul.f32 %v815, %v825
  %832 = vrot.lane.b32.xlu0 %v828, 32
  %v833 = vpop.permute.xlu0 %832
  %834 = vrot.lane.b32.xlu0 %v829, 32
  %v835 = vpop.permute.xlu0 %834
  %v838 = vadd.f32 %v818, %v833
  %v839 = vadd.f32 %v819, %v835
  %v840 = vtanh.pop %v838
  %v841 = vtanh.pop %v839
  %844 = vrot.lane.b32.xlu0 %v840, 32
  %v845 = vpop.permute.xlu0 %844
  %846 = vrot.lane.b32.xlu0 %v841, 32
  %v847 = vpop.permute.xlu0 %846
  %v850 = vmul.f32 %v813, %v845
  %v851 = vmul.f32 %v815, %v847
  %854 = vrot.lane.b32.xlu0 %v850, 64
  %v855 = vpop.permute.xlu0 %854
  %856 = vrot.lane.b32.xlu0 %v851, 64
  %v857 = vpop.permute.xlu0 %856
  %s860 = scalar_lea.vmem [#allocation4], 64
  %861 = vst.msk [vmem:[%s860] sm:$0xff] %vm146, %v855
  %862 = vst.msk [vmem:[%s860 + $0x8] sm:$0xff] %vm146, %v857
  %s863 = scalar_lea.vmem [#allocation5], 80
  %v864 = vld [vmem:[%s863] sm:$0xff]
  %v865 = vld [vmem:[%s863 + $0x8] sm:$0xff]
  %v866 = vpack.c.bf16 %v851, %v850
  %868 = vrot.lane.b32.xlu0 %v866, 64
  %v869 = vpop.permute.xlu0 %868
  %v871 = vsel %vm146, %v869, 0
  %873 = vmatprep.subr.bf16.mxu0 0
  %874 = vmatpush1.bf16.msra.mxu0 0
  %875 = vmatprep.subr.bf16.mxu0 0
  %876 = vmatpush1.bf16.msra.mxu0 0
  %877 = vmatprep.subr.bf16.mxu0 0
  %878 = vmatpush1.bf16.msra.mxu0 0
  %879 = vmatprep.subr.bf16.mxu0 0
  %880 = vmatpush1.bf16.msra.mxu0 0
  %881 = vmatprep.subr.bf16.mxu0 0
  %882 = vmatpush1.bf16.msra.mxu0 0
  %883 = vmatprep.subr.bf16.mxu0 0
  %884 = vmatpush1.bf16.msra.mxu0 0
  %885 = vmatprep.subr.bf16.mxu0 0
  %886 = vmatpush1.bf16.msra.mxu0 %v300
  %887 = vmatprep.subr.bf16.mxu0 0
  %888 = vmatpush1.bf16.msra.mxu0 %v299
  %889 = vmatprep.subr.bf16.mxu0 0
  %890 = vmatpush2.bf16.msra.mxu0 0
  %891 = vmatprep.subr.bf16.mxu0 0
  %892 = vmatpush2.bf16.msra.mxu0 0
  %893 = vmatprep.subr.bf16.mxu0 0
  %894 = vmatpush2.bf16.msra.mxu0 0
  %895 = vmatprep.subr.bf16.mxu0 0
  %896 = vmatpush2.bf16.msra.mxu0 0
  %897 = vmatprep.subr.bf16.mxu0 0
  %898 = vmatpush2.bf16.msra.mxu0 0
  %899 = vmatprep.subr.bf16.mxu0 0
  %900 = vmatpush2.bf16.msra.mxu0 0
  %901 = vmatprep.subr.bf16.mxu0 0
  %902 = vmatpush2.bf16.msra.mxu0 0
  %903 = vmatprep.subr.bf16.mxu0 0
  %904 = vmatpush2.bf16.msra.mxu0 0
  %905 = vmatprep.mubr.bf16.mxu0 0
  %906 = vmatmul.mubr.bf16.gmra.mxu0 %v871
  %v907 = vpop.f32.mrf.mxu0
  %v908 = vadd.f32 0.0, %v907
  %v909 = vpop.f32.mrf.mxu0
  %v910 = vpop.f32.mrf.mxu0
  %v911 = vadd.f32 0.0, %v910
  %v912 = vpop.f32.mrf.mxu0
  %913 = vdwg.mxu0
  %v914 = vadd.f32 %v864, %v908
  %v915 = vadd.f32 %v865, %v911
  %v916 = vxor.u32 %v914, 2147483648
  %v917 = vxor.u32 %v915, 2147483648
  %v918 = vmul.f32 %v916, 1.442695
  %v919 = vpow.pop %v918
  %v920 = vmul.f32 %v917, 1.442695
  %v921 = vpow.pop %v920
  %v922 = vadd.f32 %v919, 1.0
  %v923 = vadd.f32 %v921, 1.0
  %v924 = vrcp.pop %v922
  %v925 = vmul.f32 1.0, %v924
  %v926 = vrcp.pop %v923
  %v927 = vmul.f32 1.0, %v926
  %v928 = vtanh.pop %v914
  %v929 = vtanh.pop %v915
  %v930 = vmul.f32 %v925, %v838
  %v931 = vmul.f32 %v927, %v839
  %934 = vrot.lane.b32.xlu0 %v928, 32
  %v935 = vpop.permute.xlu0 %934
  %936 = vrot.lane.b32.xlu0 %v929, 32
  %v937 = vpop.permute.xlu0 %936
  %v940 = vmul.f32 %v925, %v935
  %v941 = vmul.f32 %v927, %v937
  %944 = vrot.lane.b32.xlu0 %v940, 32
  %v945 = vpop.permute.xlu0 %944
  %946 = vrot.lane.b32.xlu0 %v941, 32
  %v947 = vpop.permute.xlu0 %946
  %v950 = vadd.f32 %v930, %v945
  %v951 = vadd.f32 %v931, %v947
  %v952 = vtanh.pop %v950
  %v953 = vtanh.pop %v951
  %956 = vrot.lane.b32.xlu0 %v952, 32
  %v957 = vpop.permute.xlu0 %956
  %958 = vrot.lane.b32.xlu0 %v953, 32
  %v959 = vpop.permute.xlu0 %958
  %v962 = vmul.f32 %v925, %v957
  %v963 = vmul.f32 %v927, %v959
  %966 = vrot.lane.b32.xlu0 %v962, 64
  %v967 = vpop.permute.xlu0 %966
  %968 = vrot.lane.b32.xlu0 %v963, 64
  %v969 = vpop.permute.xlu0 %968
  %s972 = scalar_lea.vmem [#allocation4], 80
  %973 = vst.msk [vmem:[%s972] sm:$0xff] %vm146, %v967
  %974 = vst.msk [vmem:[%s972 + $0x8] sm:$0xff] %vm146, %v969
  %s975 = scalar_lea.vmem [#allocation5], 96
  %v976 = vld [vmem:[%s975] sm:$0xff]
  %v977 = vld [vmem:[%s975 + $0x8] sm:$0xff]
  %v978 = vpack.c.bf16 %v963, %v962
  %980 = vrot.lane.b32.xlu0 %v978, 64
  %v981 = vpop.permute.xlu0 %980
  %v983 = vsel %vm146, %v981, 0
  %985 = vmatprep.subr.bf16.mxu0 0
  %986 = vmatpush1.bf16.msra.mxu0 0
  %987 = vmatprep.subr.bf16.mxu0 0
  %988 = vmatpush1.bf16.msra.mxu0 0
  %989 = vmatprep.subr.bf16.mxu0 0
  %990 = vmatpush1.bf16.msra.mxu0 0
  %991 = vmatprep.subr.bf16.mxu0 0
  %992 = vmatpush1.bf16.msra.mxu0 0
  %993 = vmatprep.subr.bf16.mxu0 0
  %994 = vmatpush1.bf16.msra.mxu0 0
  %995 = vmatprep.subr.bf16.mxu0 0
  %996 = vmatpush1.bf16.msra.mxu0 0
  %997 = vmatprep.subr.bf16.mxu0 0
  %998 = vmatpush1.bf16.msra.mxu0 %v300
  %999 = vmatprep.subr.bf16.mxu0 0
  %1000 = vmatpush1.bf16.msra.mxu0 %v299
  %1001 = vmatprep.subr.bf16.mxu0 0
  %1002 = vmatpush2.bf16.msra.mxu0 0
  %1003 = vmatprep.subr.bf16.mxu0 0
  %1004 = vmatpush2.bf16.msra.mxu0 0
  %1005 = vmatprep.subr.bf16.mxu0 0
  %1006 = vmatpush2.bf16.msra.mxu0 0
  %1007 = vmatprep.subr.bf16.mxu0 0
  %1008 = vmatpush2.bf16.msra.mxu0 0
  %1009 = vmatprep.subr.bf16.mxu0 0
  %1010 = vmatpush2.bf16.msra.mxu0 0
  %1011 = vmatprep.subr.bf16.mxu0 0
  %1012 = vmatpush2.bf16.msra.mxu0 0
  %1013 = vmatprep.subr.bf16.mxu0 0
  %1014 = vmatpush2.bf16.msra.mxu0 0
  %1015 = vmatprep.subr.bf16.mxu0 0
  %1016 = vmatpush2.bf16.msra.mxu0 0
  %1017 = vmatprep.mubr.bf16.mxu0 0
  %1018 = vmatmul.mubr.bf16.gmra.mxu0 %v983
  %v1019 = vpop.f32.mrf.mxu0
  %v1020 = vadd.f32 0.0, %v1019
  %v1021 = vpop.f32.mrf.mxu0
  %v1022 = vpop.f32.mrf.mxu0
  %v1023 = vadd.f32 0.0, %v1022
  %v1024 = vpop.f32.mrf.mxu0
  %1025 = vdwg.mxu0
  %v1026 = vadd.f32 %v976, %v1020
  %v1027 = vadd.f32 %v977, %v1023
  %v1028 = vxor.u32 %v1026, 2147483648
  %v1029 = vxor.u32 %v1027, 2147483648
  %v1030 = vmul.f32 %v1028, 1.442695
  %v1031 = vpow.pop %v1030
  %v1032 = vmul.f32 %v1029, 1.442695
  %v1033 = vpow.pop %v1032
  %v1034 = vadd.f32 %v1031, 1.0
  %v1035 = vadd.f32 %v1033, 1.0
  %v1036 = vrcp.pop %v1034
  %v1037 = vmul.f32 1.0, %v1036
  %v1038 = vrcp.pop %v1035
  %v1039 = vmul.f32 1.0, %v1038
  %v1040 = vtanh.pop %v1026
  %v1041 = vtanh.pop %v1027
  %v1042 = vmul.f32 %v1037, %v950
  %v1043 = vmul.f32 %v1039, %v951
  %1046 = vrot.lane.b32.xlu0 %v1040, 32
  %v1047 = vpop.permute.xlu0 %1046
  %1048 = vrot.lane.b32.xlu0 %v1041, 32
  %v1049 = vpop.permute.xlu0 %1048
  %v1052 = vmul.f32 %v1037, %v1047
  %v1053 = vmul.f32 %v1039, %v1049
  %1056 = vrot.lane.b32.xlu0 %v1052, 32
  %v1057 = vpop.permute.xlu0 %1056
  %1058 = vrot.lane.b32.xlu0 %v1053, 32
  %v1059 = vpop.permute.xlu0 %1058
  %v1062 = vadd.f32 %v1042, %v1057
  %v1063 = vadd.f32 %v1043, %v1059
  %v1064 = vtanh.pop %v1062
  %v1065 = vtanh.pop %v1063
  %1068 = vrot.lane.b32.xlu0 %v1064, 32
  %v1069 = vpop.permute.xlu0 %1068
  %1070 = vrot.lane.b32.xlu0 %v1065, 32
  %v1071 = vpop.permute.xlu0 %1070
  %v1074 = vmul.f32 %v1037, %v1069
  %v1075 = vmul.f32 %v1039, %v1071
  %1078 = vrot.lane.b32.xlu0 %v1074, 64
  %v1079 = vpop.permute.xlu0 %1078
  %1080 = vrot.lane.b32.xlu0 %v1075, 64
  %v1081 = vpop.permute.xlu0 %1080
  %s1084 = scalar_lea.vmem [#allocation4], 96
  %1085 = vst.msk [vmem:[%s1084] sm:$0xff] %vm146, %v1079
  %1086 = vst.msk [vmem:[%s1084 + $0x8] sm:$0xff] %vm146, %v1081
  %s1087 = scalar_lea.vmem [#allocation5], 112
  %v1088 = vld [vmem:[%s1087] sm:$0xff]
  %v1089 = vld [vmem:[%s1087 + $0x8] sm:$0xff]
  %v1090 = vpack.c.bf16 %v1075, %v1074
  %1092 = vrot.lane.b32.xlu0 %v1090, 64
  %v1093 = vpop.permute.xlu0 %1092
  %v1095 = vsel %vm146, %v1093, 0
  %1097 = vmatprep.subr.bf16.mxu0 0
  %1098 = vmatpush1.bf16.msra.mxu0 0
  %1099 = vmatprep.subr.bf16.mxu0 0
  %1100 = vmatpush1.bf16.msra.mxu0 0
  %1101 = vmatprep.subr.bf16.mxu0 0
  %1102 = vmatpush1.bf16.msra.mxu0 0
  %1103 = vmatprep.subr.bf16.mxu0 0
  %1104 = vmatpush1.bf16.msra.mxu0 0
  %1105 = vmatprep.subr.bf16.mxu0 0
  %1106 = vmatpush1.bf16.msra.mxu0 0
  %1107 = vmatprep.subr.bf16.mxu0 0
  %1108 = vmatpush1.bf16.msra.mxu0 0
  %1109 = vmatprep.subr.bf16.mxu0 0
  %1110 = vmatpush1.bf16.msra.mxu0 %v300
  %1111 = vmatprep.subr.bf16.mxu0 0
  %1112 = vmatpush1.bf16.msra.mxu0 %v299
  %1113 = vmatprep.subr.bf16.mxu0 0
  %1114 = vmatpush2.bf16.msra.mxu0 0
  %1115 = vmatprep.subr.bf16.mxu0 0
  %1116 = vmatpush2.bf16.msra.mxu0 0
  %1117 = vmatprep.subr.bf16.mxu0 0
  %1118 = vmatpush2.bf16.msra.mxu0 0
  %1119 = vmatprep.subr.bf16.mxu0 0
  %1120 = vmatpush2.bf16.msra.mxu0 0
  %1121 = vmatprep.subr.bf16.mxu0 0
  %1122 = vmatpush2.bf16.msra.mxu0 0
  %1123 = vmatprep.subr.bf16.mxu0 0
  %1124 = vmatpush2.bf16.msra.mxu0 0
  %1125 = vmatprep.subr.bf16.mxu0 0
  %1126 = vmatpush2.bf16.msra.mxu0 0
  %1127 = vmatprep.subr.bf16.mxu0 0
  %1128 = vmatpush2.bf16.msra.mxu0 0
  %1129 = vmatprep.mubr.bf16.mxu0 0
  %1130 = vmatmul.mubr.bf16.gmra.mxu0 %v1095
  %v1131 = vpop.f32.mrf.mxu0
  %v1132 = vadd.f32 0.0, %v1131
  %v1133 = vpop.f32.mrf.mxu0
  %v1134 = vpop.f32.mrf.mxu0
  %v1135 = vadd.f32 0.0, %v1134
  %v1136 = vpop.f32.mrf.mxu0
  %1137 = vdwg.mxu0
  %v1138 = vadd.f32 %v1088, %v1132
  %v1139 = vadd.f32 %v1089, %v1135
  %v1140 = vxor.u32 %v1138, 2147483648
  %v1141 = vxor.u32 %v1139, 2147483648
  %v1142 = vmul.f32 %v1140, 1.442695
  %v1143 = vpow.pop %v1142
  %v1144 = vmul.f32 %v1141, 1.442695
  %v1145 = vpow.pop %v1144
  %v1146 = vadd.f32 %v1143, 1.0
  %v1147 = vadd.f32 %v1145, 1.0
  %v1148 = vrcp.pop %v1146
  %v1149 = vmul.f32 1.0, %v1148
  %v1150 = vrcp.pop %v1147
  %v1151 = vmul.f32 1.0, %v1150
  %v1152 = vtanh.pop %v1138
  %v1153 = vtanh.pop %v1139
  %v1154 = vmul.f32 %v1149, %v1062
  %v1155 = vmul.f32 %v1151, %v1063
  %1158 = vrot.lane.b32.xlu0 %v1152, 32
  %v1159 = vpop.permute.xlu0 %1158
  %1160 = vrot.lane.b32.xlu0 %v1153, 32
  %v1161 = vpop.permute.xlu0 %1160
  %v1164 = vmul.f32 %v1149, %v1159
  %v1165 = vmul.f32 %v1151, %v1161
  %1168 = vrot.lane.b32.xlu0 %v1164, 32
  %v1169 = vpop.permute.xlu0 %1168
  %1170 = vrot.lane.b32.xlu0 %v1165, 32
  %v1171 = vpop.permute.xlu0 %1170
  %v1174 = vadd.f32 %v1154, %v1169
  %v1175 = vadd.f32 %v1155, %v1171
  %v1176 = vtanh.pop %v1174
  %v1177 = vtanh.pop %v1175
  %1180 = vrot.lane.b32.xlu0 %v1176, 32
  %v1181 = vpop.permute.xlu0 %1180
  %1182 = vrot.lane.b32.xlu0 %v1177, 32
  %v1183 = vpop.permute.xlu0 %1182
  %v1186 = vmul.f32 %v1149, %v1181
  %v1187 = vmul.f32 %v1151, %v1183
  %1190 = vrot.lane.b32.xlu0 %v1186, 64
  %v1191 = vpop.permute.xlu0 %1190
  %1192 = vrot.lane.b32.xlu0 %v1187, 64
  %v1193 = vpop.permute.xlu0 %1192
  %s1196 = scalar_lea.vmem [#allocation4], 112
  %1197 = vst.msk [vmem:[%s1196] sm:$0xff] %vm146, %v1191
  %1198 = vst.msk [vmem:[%s1196 + $0x8] sm:$0xff] %vm146, %v1193
  %1199 = vst.msk [vmem:[#allocation2] sm:$0xff] %vm146, %v1191
  %1200 = vst.msk [vmem:[#allocation2 + $0x8] sm:$0xff] %vm146, %v1193
  %1203 = vrot.lane.b32.xlu0 %v1174, 96
  %v1204 = vpop.permute.xlu0 %1203
  %1205 = vrot.lane.b32.xlu0 %v1175, 96
  %v1206 = vpop.permute.xlu0 %1205
  %1209 = vst.msk [vmem:[#allocation3] sm:$0xff] %vm146, %v1204
  %1210 = vst.msk [vmem:[#allocation3 + $0x8] sm:$0xff] %vm146, %v1206
  %v1211 = vld [vmem:[%s6] sm:$0xf]
  %v1212 = vld [vmem:[%s6 + $0x4] sm:$0xf]
  %v1213 = vld [vmem:[%s6 + $0x8] sm:$0xf]
  %v1214 = vld [vmem:[%s6 + $0xc] sm:$0xf]
  %v1215 = vld [vmem:[%s7] sm:$0xf]
  %v1216 = vld [vmem:[%s7 + $0x4] sm:$0xf]
  %v1217 = vld [vmem:[%s7 + $0x8] sm:$0xf]
  %v1218 = vld [vmem:[%s7 + $0xc] sm:$0xf]
  %v1219 = vld [vmem:[%s8] sm:$0x1]
  %v1220 = vld [vmem:[#allocation4] sm:$0xff]
  %v1221 = vld [vmem:[#allocation4 + $0x8] sm:$0xff]
  %v1222 = vld [vmem:[#allocation4 + $0x10] sm:$0xff]
  %v1223 = vld [vmem:[#allocation4 + $0x18] sm:$0xff]
  %v1224 = vld [vmem:[#allocation4 + $0x20] sm:$0xff]
  %v1225 = vld [vmem:[#allocation4 + $0x28] sm:$0xff]
  %v1226 = vld [vmem:[#allocation4 + $0x30] sm:$0xff]
  %v1227 = vld [vmem:[#allocation4 + $0x38] sm:$0xff]
  %v1228 = vld [vmem:[#allocation4 + $0x40] sm:$0xff]
  %v1229 = vld [vmem:[#allocation4 + $0x48] sm:$0xff]
  %v1230 = vld [vmem:[#allocation4 + $0x50] sm:$0xff]
  %v1231 = vld [vmem:[#allocation4 + $0x58] sm:$0xff]
  %v1232 = vld [vmem:[#allocation4 + $0x60] sm:$0xff]
  %v1233 = vld [vmem:[#allocation4 + $0x68] sm:$0xff]
  %v1234 = vld [vmem:[#allocation4 + $0x70] sm:$0xff]
  %v1235 = vld [vmem:[#allocation4 + $0x78] sm:$0xff]
  %v1236 = vpack.c.bf16 %v1221, %v1220
  %v1237 = vpack.c.bf16 %v1223, %v1222
  %v1238 = vpack.c.bf16 %v1225, %v1224
  %v1239 = vpack.c.bf16 %v1227, %v1226
  %v1240 = vpack.c.bf16 %v1229, %v1228
  %v1241 = vpack.c.bf16 %v1231, %v1230
  %v1242 = vpack.c.bf16 %v1233, %v1232
  %v1243 = vpack.c.bf16 %v1235, %v1234
  %v1245 = vlaneseq
  %v1246 = vshrl.u32 %v1245, 7
  %v1247 = vsub.s32 0, %v1246
  %v1248 = vrot.slane %v1219, %v1247
  %v1254 = vunpack.c.l.b16 %v1211
  %v1255 = vunpack.c.l.b16 %v1212
  %v1256 = vunpack.c.l.b16 %v1213
  %v1257 = vunpack.c.l.b16 %v1214
  %v1258 = vpack.c.b16 %v1255, %v1254
  %v1259 = vpack.c.b16 %v1257, %v1256
  %v1263 = vsel %vm146, %v1236, 0
  %v1266 = vsel %vm146, %v1237, 0
  %v1269 = vsel %vm146, %v1238, 0
  %v1272 = vsel %vm146, %v1239, 0
  %v1275 = vsel %vm146, %v1240, 0
  %v1278 = vsel %vm146, %v1241, 0
  %v1281 = vsel %vm146, %v1242, 0
  %v1284 = vsel %vm146, %v1243, 0
  %1286 = vmatprep.subr.bf16.mxu0 0
  %1287 = vmatpush1.bf16.msra.mxu0 0
  %1288 = vmatprep.subr.bf16.mxu0 0
  %1289 = vmatpush1.bf16.msra.mxu0 0
  %1290 = vmatprep.subr.bf16.mxu0 0
  %1291 = vmatpush1.bf16.msra.mxu0 0
  %1292 = vmatprep.subr.bf16.mxu0 0
  %1293 = vmatpush1.bf16.msra.mxu0 0
  %1294 = vmatprep.subr.bf16.mxu0 0
  %1295 = vmatpush1.bf16.msra.mxu0 0
  %1296 = vmatprep.subr.bf16.mxu0 0
  %1297 = vmatpush1.bf16.msra.mxu0 0
  %1298 = vmatprep.subr.bf16.mxu0 0
  %1299 = vmatpush1.bf16.msra.mxu0 %v1259
  %1300 = vmatprep.subr.bf16.mxu0 0
  %1301 = vmatpush1.bf16.msra.mxu0 %v1258
  %1302 = vmatprep.subr.bf16.mxu0 0
  %1303 = vmatpush2.bf16.msra.mxu0 0
  %1304 = vmatprep.subr.bf16.mxu0 0
  %1305 = vmatpush2.bf16.msra.mxu0 0
  %1306 = vmatprep.subr.bf16.mxu0 0
  %1307 = vmatpush2.bf16.msra.mxu0 0
  %1308 = vmatprep.subr.bf16.mxu0 0
  %1309 = vmatpush2.bf16.msra.mxu0 0
  %1310 = vmatprep.subr.bf16.mxu0 0
  %1311 = vmatpush2.bf16.msra.mxu0 0
  %1312 = vmatprep.subr.bf16.mxu0 0
  %1313 = vmatpush2.bf16.msra.mxu0 0
  %1314 = vmatprep.subr.bf16.mxu0 0
  %1315 = vmatpush2.bf16.msra.mxu0 0
  %1316 = vmatprep.subr.bf16.mxu0 0
  %1317 = vmatpush2.bf16.msra.mxu0 0
  %1318 = vmatprep.mubr.bf16.mxu0 0
  %1319 = vmatmul.mubr.bf16.gmra.mxu0 %v1263
  %v1320 = vpop.f32.mrf.mxu0
  %v1321 = vadd.f32 %v1248, %v1320
  %v1322 = vpop.f32.mrf.mxu0
  %v1323 = vpop.f32.mrf.mxu0
  %v1324 = vadd.f32 %v1248, %v1323
  %v1325 = vpop.f32.mrf.mxu0
  %1326 = vmatprep.mubr.bf16.mxu0 0
  %1327 = vmatmul.mubr.bf16.gmra.mxu0 %v1266
  %v1328 = vpop.f32.mrf.mxu0
  %v1329 = vadd.f32 %v1248, %v1328
  %v1330 = vpop.f32.mrf.mxu0
  %v1331 = vpop.f32.mrf.mxu0
  %v1332 = vadd.f32 %v1248, %v1331
  %v1333 = vpop.f32.mrf.mxu0
  %1334 = vmatprep.mubr.bf16.mxu0 0
  %1335 = vmatmul.mubr.bf16.gmra.mxu0 %v1269
  %v1336 = vpop.f32.mrf.mxu0
  %v1337 = vadd.f32 %v1248, %v1336
  %v1338 = vpop.f32.mrf.mxu0
  %v1339 = vpop.f32.mrf.mxu0
  %v1340 = vadd.f32 %v1248, %v1339
  %v1341 = vpop.f32.mrf.mxu0
  %1342 = vmatprep.mubr.bf16.mxu0 0
  %1343 = vmatmul.mubr.bf16.gmra.mxu0 %v1272
  %v1344 = vpop.f32.mrf.mxu0
  %v1345 = vadd.f32 %v1248, %v1344
  %v1346 = vpop.f32.mrf.mxu0
  %v1347 = vpop.f32.mrf.mxu0
  %v1348 = vadd.f32 %v1248, %v1347
  %v1349 = vpop.f32.mrf.mxu0
  %1350 = vmatprep.mubr.bf16.mxu0 0
  %1351 = vmatmul.mubr.bf16.gmra.mxu0 %v1275
  %v1352 = vpop.f32.mrf.mxu0
  %v1353 = vadd.f32 %v1248, %v1352
  %v1354 = vpop.f32.mrf.mxu0
  %v1355 = vpop.f32.mrf.mxu0
  %v1356 = vadd.f32 %v1248, %v1355
  %v1357 = vpop.f32.mrf.mxu0
  %1358 = vmatprep.mubr.bf16.mxu0 0
  %1359 = vmatmul.mubr.bf16.gmra.mxu0 %v1278
  %v1360 = vpop.f32.mrf.mxu0
  %v1361 = vadd.f32 %v1248, %v1360
  %v1362 = vpop.f32.mrf.mxu0
  %v1363 = vpop.f32.mrf.mxu0
  %v1364 = vadd.f32 %v1248, %v1363
  %v1365 = vpop.f32.mrf.mxu0
  %1366 = vmatprep.mubr.bf16.mxu0 0
  %1367 = vmatmul.mubr.bf16.gmra.mxu0 %v1281
  %v1368 = vpop.f32.mrf.mxu0
  %v1369 = vadd.f32 %v1248, %v1368
  %v1370 = vpop.f32.mrf.mxu0
  %v1371 = vpop.f32.mrf.mxu0
  %v1372 = vadd.f32 %v1248, %v1371
  %v1373 = vpop.f32.mrf.mxu0
  %1374 = vmatprep.mubr.bf16.mxu0 0
  %1375 = vmatmul.mubr.bf16.gmra.mxu0 %v1284
  %v1376 = vpop.f32.mrf.mxu0
  %v1377 = vadd.f32 %v1248, %v1376
  %v1378 = vpop.f32.mrf.mxu0
  %v1379 = vpop.f32.mrf.mxu0
  %v1380 = vadd.f32 %v1248, %v1379
  %v1381 = vpop.f32.mrf.mxu0
  %1382 = vdwg.mxu0
  %1383 = vst [vmem:[#allocation5] sm:$0xff] %v1321
  %1384 = vst [vmem:[#allocation5 + $0x8] sm:$0xff] %v1324
  %1385 = vst [vmem:[#allocation5 + $0x10] sm:$0xff] %v1329
  %1386 = vst [vmem:[#allocation5 + $0x18] sm:$0xff] %v1332
  %1387 = vst [vmem:[#allocation5 + $0x20] sm:$0xff] %v1337
  %1388 = vst [vmem:[#allocation5 + $0x28] sm:$0xff] %v1340
  %1389 = vst [vmem:[#allocation5 + $0x30] sm:$0xff] %v1345
  %1390 = vst [vmem:[#allocation5 + $0x38] sm:$0xff] %v1348
  %1391 = vst [vmem:[#allocation5 + $0x40] sm:$0xff] %v1353
  %1392 = vst [vmem:[#allocation5 + $0x48] sm:$0xff] %v1356
  %1393 = vst [vmem:[#allocation5 + $0x50] sm:$0xff] %v1361
  %1394 = vst [vmem:[#allocation5 + $0x58] sm:$0xff] %v1364
  %1395 = vst [vmem:[#allocation5 + $0x60] sm:$0xff] %v1369
  %1396 = vst [vmem:[#allocation5 + $0x68] sm:$0xff] %v1372
  %1397 = vst [vmem:[#allocation5 + $0x70] sm:$0xff] %v1377
  %1398 = vst [vmem:[#allocation5 + $0x78] sm:$0xff] %v1380
  %s1399 = scalar_lea.vmem [#allocation2], 16
  %v1400 = vld [vmem:[%s1399] sm:$0xff]
  %v1401 = vld [vmem:[%s1399 + $0x8] sm:$0xff]
  %s1402 = scalar_lea.vmem [#allocation3], 16
  %v1403 = vld [vmem:[%s1402] sm:$0xff]
  %v1404 = vld [vmem:[%s1402 + $0x8] sm:$0xff]
  %v1405 = vld [vmem:[#allocation5] sm:$0xff]
  %v1406 = vld [vmem:[#allocation5 + $0x8] sm:$0xff]
  %v1407 = vpack.c.bf16 %v1401, %v1400
  %v1412 = vunpack.c.l.b16 %v1215
  %v1413 = vunpack.c.l.b16 %v1216
  %v1414 = vunpack.c.l.b16 %v1217
  %v1415 = vunpack.c.l.b16 %v1218
  %v1416 = vpack.c.b16 %v1413, %v1412
  %v1417 = vpack.c.b16 %v1415, %v1414
  %v1421 = vsel %vm146, %v1407, 0
  %1423 = vmatprep.subr.bf16.mxu0 0
  %1424 = vmatpush1.bf16.msra.mxu0 0
  %1425 = vmatprep.subr.bf16.mxu0 0
  %1426 = vmatpush1.bf16.msra.mxu0 0
  %1427 = vmatprep.subr.bf16.mxu0 0
  %1428 = vmatpush1.bf16.msra.mxu0 0
  %1429 = vmatprep.subr.bf16.mxu0 0
  %1430 = vmatpush1.bf16.msra.mxu0 0
  %1431 = vmatprep.subr.bf16.mxu0 0
  %1432 = vmatpush1.bf16.msra.mxu0 0
  %1433 = vmatprep.subr.bf16.mxu0 0
  %1434 = vmatpush1.bf16.msra.mxu0 0
  %1435 = vmatprep.subr.bf16.mxu0 0
  %1436 = vmatpush1.bf16.msra.mxu0 %v1417
  %1437 = vmatprep.subr.bf16.mxu0 0
  %1438 = vmatpush1.bf16.msra.mxu0 %v1416
  %1439 = vmatprep.subr.bf16.mxu0 0
  %1440 = vmatpush2.bf16.msra.mxu0 0
  %1441 = vmatprep.subr.bf16.mxu0 0
  %1442 = vmatpush2.bf16.msra.mxu0 0
  %1443 = vmatprep.subr.bf16.mxu0 0
  %1444 = vmatpush2.bf16.msra.mxu0 0
  %1445 = vmatprep.subr.bf16.mxu0 0
  %1446 = vmatpush2.bf16.msra.mxu0 0
  %1447 = vmatprep.subr.bf16.mxu0 0
  %1448 = vmatpush2.bf16.msra.mxu0 0
  %1449 = vmatprep.subr.bf16.mxu0 0
  %1450 = vmatpush2.bf16.msra.mxu0 0
  %1451 = vmatprep.subr.bf16.mxu0 0
  %1452 = vmatpush2.bf16.msra.mxu0 0
  %1453 = vmatprep.subr.bf16.mxu0 0
  %1454 = vmatpush2.bf16.msra.mxu0 0
  %1455 = vmatprep.mubr.bf16.mxu0 0
  %1456 = vmatmul.mubr.bf16.gmra.mxu0 %v1421
  %v1457 = vpop.f32.mrf.mxu0
  %v1458 = vadd.f32 0.0, %v1457
  %v1459 = vpop.f32.mrf.mxu0
  %v1460 = vpop.f32.mrf.mxu0
  %v1461 = vadd.f32 0.0, %v1460
  %v1462 = vpop.f32.mrf.mxu0
  %1463 = vdwg.mxu0
  %v1464 = vadd.f32 %v1405, %v1458
  %v1465 = vadd.f32 %v1406, %v1461
  %v1466 = vxor.u32 %v1464, 2147483648
  %v1467 = vxor.u32 %v1465, 2147483648
  %v1468 = vmul.f32 %v1466, 1.442695
  %v1469 = vpow.pop %v1468
  %v1470 = vmul.f32 %v1467, 1.442695
  %v1471 = vpow.pop %v1470
  %v1472 = vadd.f32 %v1469, 1.0
  %v1473 = vadd.f32 %v1471, 1.0
  %v1474 = vrcp.pop %v1472
  %v1475 = vmul.f32 1.0, %v1474
  %v1476 = vrcp.pop %v1473
  %v1477 = vmul.f32 1.0, %v1476
  %v1478 = vtanh.pop %v1464
  %v1479 = vtanh.pop %v1465
  %1482 = vrot.lane.b32.xlu0 %v1403, 32
  %v1483 = vpop.permute.xlu0 %1482
  %1484 = vrot.lane.b32.xlu0 %v1404, 32
  %v1485 = vpop.permute.xlu0 %1484
  %v1488 = vmul.f32 %v1475, %v1483
  %v1489 = vmul.f32 %v1477, %v1485
  %1492 = vrot.lane.b32.xlu0 %v1478, 32
  %v1493 = vpop.permute.xlu0 %1492
  %1494 = vrot.lane.b32.xlu0 %v1479, 32
  %v1495 = vpop.permute.xlu0 %1494
  %v1498 = vmul.f32 %v1475, %v1493
  %v1499 = vmul.f32 %v1477, %v1495
  %1502 = vrot.lane.b32.xlu0 %v1498, 32
  %v1503 = vpop.permute.xlu0 %1502
  %1504 = vrot.lane.b32.xlu0 %v1499, 32
  %v1505 = vpop.permute.xlu0 %1504
  %v1508 = vadd.f32 %v1488, %v1503
  %v1509 = vadd.f32 %v1489, %v1505
  %v1510 = vtanh.pop %v1508
  %v1511 = vtanh.pop %v1509
  %1514 = vrot.lane.b32.xlu0 %v1510, 32
  %v1515 = vpop.permute.xlu0 %1514
  %1516 = vrot.lane.b32.xlu0 %v1511, 32
  %v1517 = vpop.permute.xlu0 %1516
  %v1520 = vmul.f32 %v1475, %v1515
  %v1521 = vmul.f32 %v1477, %v1517
  %v1522 = vld [vmem:[%s415] sm:$0xff]
  %v1523 = vld [vmem:[%s415 + $0x8] sm:$0xff]
  %v1524 = vpack.c.bf16 %v1521, %v1520
  %1526 = vrot.lane.b32.xlu0 %v1524, 64
  %v1527 = vpop.permute.xlu0 %1526
  %v1529 = vsel %vm146, %v1527, 0
  %1531 = vmatprep.subr.bf16.mxu0 0
  %1532 = vmatpush1.bf16.msra.mxu0 0
  %1533 = vmatprep.subr.bf16.mxu0 0
  %1534 = vmatpush1.bf16.msra.mxu0 0
  %1535 = vmatprep.subr.bf16.mxu0 0
  %1536 = vmatpush1.bf16.msra.mxu0 0
  %1537 = vmatprep.subr.bf16.mxu0 0
  %1538 = vmatpush1.bf16.msra.mxu0 0
  %1539 = vmatprep.subr.bf16.mxu0 0
  %1540 = vmatpush1.bf16.msra.mxu0 0
  %1541 = vmatprep.subr.bf16.mxu0 0
  %1542 = vmatpush1.bf16.msra.mxu0 0
  %1543 = vmatprep.subr.bf16.mxu0 0
  %1544 = vmatpush1.bf16.msra.mxu0 %v1417
  %1545 = vmatprep.subr.bf16.mxu0 0
  %1546 = vmatpush1.bf16.msra.mxu0 %v1416
  %1547 = vmatprep.subr.bf16.mxu0 0
  %1548 = vmatpush2.bf16.msra.mxu0 0
  %1549 = vmatprep.subr.bf16.mxu0 0
  %1550 = vmatpush2.bf16.msra.mxu0 0
  %1551 = vmatprep.subr.bf16.mxu0 0
  %1552 = vmatpush2.bf16.msra.mxu0 0
  %1553 = vmatprep.subr.bf16.mxu0 0
  %1554 = vmatpush2.bf16.msra.mxu0 0
  %1555 = vmatprep.subr.bf16.mxu0 0
  %1556 = vmatpush2.bf16.msra.mxu0 0
  %1557 = vmatprep.subr.bf16.mxu0 0
  %1558 = vmatpush2.bf16.msra.mxu0 0
  %1559 = vmatprep.subr.bf16.mxu0 0
  %1560 = vmatpush2.bf16.msra.mxu0 0
  %1561 = vmatprep.subr.bf16.mxu0 0
  %1562 = vmatpush2.bf16.msra.mxu0 0
  %1563 = vmatprep.mubr.bf16.mxu0 0
  %1564 = vmatmul.mubr.bf16.gmra.mxu0 %v1529
  %v1565 = vpop.f32.mrf.mxu0
  %v1566 = vadd.f32 0.0, %v1565
  %v1567 = vpop.f32.mrf.mxu0
  %v1568 = vpop.f32.mrf.mxu0
  %v1569 = vadd.f32 0.0, %v1568
  %v1570 = vpop.f32.mrf.mxu0
  %1571 = vdwg.mxu0
  %v1572 = vadd.f32 %v1522, %v1566
  %v1573 = vadd.f32 %v1523, %v1569
  %v1574 = vxor.u32 %v1572, 2147483648
  %v1575 = vxor.u32 %v1573, 2147483648
  %v1576 = vmul.f32 %v1574, 1.442695
  %v1577 = vpow.pop %v1576
  %v1578 = vmul.f32 %v1575, 1.442695
  %v1579 = vpow.pop %v1578
  %v1580 = vadd.f32 %v1577, 1.0
  %v1581 = vadd.f32 %v1579, 1.0
  %v1582 = vrcp.pop %v1580
  %v1583 = vmul.f32 1.0, %v1582
  %v1584 = vrcp.pop %v1581
  %v1585 = vmul.f32 1.0, %v1584
  %v1586 = vtanh.pop %v1572
  %v1587 = vtanh.pop %v1573
  %v1588 = vmul.f32 %v1583, %v1508
  %v1589 = vmul.f32 %v1585, %v1509
  %1592 = vrot.lane.b32.xlu0 %v1586, 32
  %v1593 = vpop.permute.xlu0 %1592
  %1594 = vrot.lane.b32.xlu0 %v1587, 32
  %v1595 = vpop.permute.xlu0 %1594
  %v1598 = vmul.f32 %v1583, %v1593
  %v1599 = vmul.f32 %v1585, %v1595
  %1602 = vrot.lane.b32.xlu0 %v1598, 32
  %v1603 = vpop.permute.xlu0 %1602
  %1604 = vrot.lane.b32.xlu0 %v1599, 32
  %v1605 = vpop.permute.xlu0 %1604
  %v1608 = vadd.f32 %v1588, %v1603
  %v1609 = vadd.f32 %v1589, %v1605
  %v1610 = vtanh.pop %v1608
  %v1611 = vtanh.pop %v1609
  %1614 = vrot.lane.b32.xlu0 %v1610, 32
  %v1615 = vpop.permute.xlu0 %1614
  %1616 = vrot.lane.b32.xlu0 %v1611, 32
  %v1617 = vpop.permute.xlu0 %1616
  %v1620 = vmul.f32 %v1583, %v1615
  %v1621 = vmul.f32 %v1585, %v1617
  %v1622 = vld [vmem:[%s527] sm:$0xff]
  %v1623 = vld [vmem:[%s527 + $0x8] sm:$0xff]
  %v1624 = vpack.c.bf16 %v1621, %v1620
  %1626 = vrot.lane.b32.xlu0 %v1624, 64
  %v1627 = vpop.permute.xlu0 %1626
  %v1629 = vsel %vm146, %v1627, 0
  %1631 = vmatprep.subr.bf16.mxu0 0
  %1632 = vmatpush1.bf16.msra.mxu0 0
  %1633 = vmatprep.subr.bf16.mxu0 0
  %1634 = vmatpush1.bf16.msra.mxu0 0
  %1635 = vmatprep.subr.bf16.mxu0 0
  %1636 = vmatpush1.bf16.msra.mxu0 0
  %1637 = vmatprep.subr.bf16.mxu0 0
  %1638 = vmatpush1.bf16.msra.mxu0 0
  %1639 = vmatprep.subr.bf16.mxu0 0
  %1640 = vmatpush1.bf16.msra.mxu0 0
  %1641 = vmatprep.subr.bf16.mxu0 0
  %1642 = vmatpush1.bf16.msra.mxu0 0
  %1643 = vmatprep.subr.bf16.mxu0 0
  %1644 = vmatpush1.bf16.msra.mxu0 %v1417
  %1645 = vmatprep.subr.bf16.mxu0 0
  %1646 = vmatpush1.bf16.msra.mxu0 %v1416
  %1647 = vmatprep.subr.bf16.mxu0 0
  %1648 = vmatpush2.bf16.msra.mxu0 0
  %1649 = vmatprep.subr.bf16.mxu0 0
  %1650 = vmatpush2.bf16.msra.mxu0 0
  %1651 = vmatprep.subr.bf16.mxu0 0
  %1652 = vmatpush2.bf16.msra.mxu0 0
  %1653 = vmatprep.subr.bf16.mxu0 0
  %1654 = vmatpush2.bf16.msra.mxu0 0
  %1655 = vmatprep.subr.bf16.mxu0 0
  %1656 = vmatpush2.bf16.msra.mxu0 0
  %1657 = vmatprep.subr.bf16.mxu0 0
  %1658 = vmatpush2.bf16.msra.mxu0 0
  %1659 = vmatprep.subr.bf16.mxu0 0
  %1660 = vmatpush2.bf16.msra.mxu0 0
  %1661 = vmatprep.subr.bf16.mxu0 0
  %1662 = vmatpush2.bf16.msra.mxu0 0
  %1663 = vmatprep.mubr.bf16.mxu0 0
  %1664 = vmatmul.mubr.bf16.gmra.mxu0 %v1629
  %v1665 = vpop.f32.mrf.mxu0
  %v1666 = vadd.f32 0.0, %v1665
  %v1667 = vpop.f32.mrf.mxu0
  %v1668 = vpop.f32.mrf.mxu0
  %v1669 = vadd.f32 0.0, %v1668
  %v1670 = vpop.f32.mrf.mxu0
  %1671 = vdwg.mxu0
  %v1672 = vadd.f32 %v1622, %v1666
  %v1673 = vadd.f32 %v1623, %v1669
  %v1674 = vxor.u32 %v1672, 2147483648
  %v1675 = vxor.u32 %v1673, 2147483648
  %v1676 = vmul.f32 %v1674, 1.442695
  %v1677 = vpow.pop %v1676
  %v1678 = vmul.f32 %v1675, 1.442695
  %v1679 = vpow.pop %v1678
  %v1680 = vadd.f32 %v1677, 1.0
  %v1681 = vadd.f32 %v1679, 1.0
  %v1682 = vrcp.pop %v1680
  %v1683 = vmul.f32 1.0, %v1682
  %v1684 = vrcp.pop %v1681
  %v1685 = vmul.f32 1.0, %v1684
  %v1686 = vtanh.pop %v1672
  %v1687 = vtanh.pop %v1673
  %v1688 = vmul.f32 %v1683, %v1608
  %v1689 = vmul.f32 %v1685, %v1609
  %1692 = vrot.lane.b32.xlu0 %v1686, 32
  %v1693 = vpop.permute.xlu0 %1692
  %1694 = vrot.lane.b32.xlu0 %v1687, 32
  %v1695 = vpop.permute.xlu0 %1694
  %v1698 = vmul.f32 %v1683, %v1693
  %v1699 = vmul.f32 %v1685, %v1695
  %1702 = vrot.lane.b32.xlu0 %v1698, 32
  %v1703 = vpop.permute.xlu0 %1702
  %1704 = vrot.lane.b32.xlu0 %v1699, 32
  %v1705 = vpop.permute.xlu0 %1704
  %v1708 = vadd.f32 %v1688, %v1703
  %v1709 = vadd.f32 %v1689, %v1705
  %v1710 = vtanh.pop %v1708
  %v1711 = vtanh.pop %v1709
  %1714 = vrot.lane.b32.xlu0 %v1710, 32
  %v1715 = vpop.permute.xlu0 %1714
  %1716 = vrot.lane.b32.xlu0 %v1711, 32
  %v1717 = vpop.permute.xlu0 %1716
  %v1720 = vmul.f32 %v1683, %v1715
  %v1721 = vmul.f32 %v1685, %v1717
  %v1722 = vld [vmem:[%s639] sm:$0xff]
  %v1723 = vld [vmem:[%s639 + $0x8] sm:$0xff]
  %v1724 = vpack.c.bf16 %v1721, %v1720
  %1726 = vrot.lane.b32.xlu0 %v1724, 64
  %v1727 = vpop.permute.xlu0 %1726
  %v1729 = vsel %vm146, %v1727, 0
  %1731 = vmatprep.subr.bf16.mxu0 0
  %1732 = vmatpush1.bf16.msra.mxu0 0
  %1733 = vmatprep.subr.bf16.mxu0 0
  %1734 = vmatpush1.bf16.msra.mxu0 0
  %1735 = vmatprep.subr.bf16.mxu0 0
  %1736 = vmatpush1.bf16.msra.mxu0 0
  %1737 = vmatprep.subr.bf16.mxu0 0
  %1738 = vmatpush1.bf16.msra.mxu0 0
  %1739 = vmatprep.subr.bf16.mxu0 0
  %1740 = vmatpush1.bf16.msra.mxu0 0
  %1741 = vmatprep.subr.bf16.mxu0 0
  %1742 = vmatpush1.bf16.msra.mxu0 0
  %1743 = vmatprep.subr.bf16.mxu0 0
  %1744 = vmatpush1.bf16.msra.mxu0 %v1417
  %1745 = vmatprep.subr.bf16.mxu0 0
  %1746 = vmatpush1.bf16.msra.mxu0 %v1416
  %1747 = vmatprep.subr.bf16.mxu0 0
  %1748 = vmatpush2.bf16.msra.mxu0 0
  %1749 = vmatprep.subr.bf16.mxu0 0
  %1750 = vmatpush2.bf16.msra.mxu0 0
  %1751 = vmatprep.subr.bf16.mxu0 0
  %1752 = vmatpush2.bf16.msra.mxu0 0
  %1753 = vmatprep.subr.bf16.mxu0 0
  %1754 = vmatpush2.bf16.msra.mxu0 0
  %1755 = vmatprep.subr.bf16.mxu0 0
  %1756 = vmatpush2.bf16.msra.mxu0 0
  %1757 = vmatprep.subr.bf16.mxu0 0
  %1758 = vmatpush2.bf16.msra.mxu0 0
  %1759 = vmatprep.subr.bf16.mxu0 0
  %1760 = vmatpush2.bf16.msra.mxu0 0
  %1761 = vmatprep.subr.bf16.mxu0 0
  %1762 = vmatpush2.bf16.msra.mxu0 0
  %1763 = vmatprep.mubr.bf16.mxu0 0
  %1764 = vmatmul.mubr.bf16.gmra.mxu0 %v1729
  %v1765 = vpop.f32.mrf.mxu0
  %v1766 = vadd.f32 0.0, %v1765
  %v1767 = vpop.f32.mrf.mxu0
  %v1768 = vpop.f32.mrf.mxu0
  %v1769 = vadd.f32 0.0, %v1768
  %v1770 = vpop.f32.mrf.mxu0
  %1771 = vdwg.mxu0
  %v1772 = vadd.f32 %v1722, %v1766
  %v1773 = vadd.f32 %v1723, %v1769
  %v1774 = vxor.u32 %v1772, 2147483648
  %v1775 = vxor.u32 %v1773, 2147483648
  %v1776 = vmul.f32 %v1774, 1.442695
  %v1777 = vpow.pop %v1776
  %v1778 = vmul.f32 %v1775, 1.442695
  %v1779 = vpow.pop %v1778
  %v1780 = vadd.f32 %v1777, 1.0
  %v1781 = vadd.f32 %v1779, 1.0
  %v1782 = vrcp.pop %v1780
  %v1783 = vmul.f32 1.0, %v1782
  %v1784 = vrcp.pop %v1781
  %v1785 = vmul.f32 1.0, %v1784
  %v1786 = vtanh.pop %v1772
  %v1787 = vtanh.pop %v1773
  %v1788 = vmul.f32 %v1783, %v1708
  %v1789 = vmul.f32 %v1785, %v1709
  %1792 = vrot.lane.b32.xlu0 %v1786, 32
  %v1793 = vpop.permute.xlu0 %1792
  %1794 = vrot.lane.b32.xlu0 %v1787, 32
  %v1795 = vpop.permute.xlu0 %1794
  %v1798 = vmul.f32 %v1783, %v1793
  %v1799 = vmul.f32 %v1785, %v1795
  %1802 = vrot.lane.b32.xlu0 %v1798, 32
  %v1803 = vpop.permute.xlu0 %1802
  %1804 = vrot.lane.b32.xlu0 %v1799, 32
  %v1805 = vpop.permute.xlu0 %1804
  %v1808 = vadd.f32 %v1788, %v1803
  %v1809 = vadd.f32 %v1789, %v1805
  %v1810 = vtanh.pop %v1808
  %v1811 = vtanh.pop %v1809
  %1814 = vrot.lane.b32.xlu0 %v1810, 32
  %v1815 = vpop.permute.xlu0 %1814
  %1816 = vrot.lane.b32.xlu0 %v1811, 32
  %v1817 = vpop.permute.xlu0 %1816
  %v1820 = vmul.f32 %v1783, %v1815
  %v1821 = vmul.f32 %v1785, %v1817
  %v1822 = vld [vmem:[%s751] sm:$0xff]
  %v1823 = vld [vmem:[%s751 + $0x8] sm:$0xff]
  %v1824 = vpack.c.bf16 %v1821, %v1820
  %1826 = vrot.lane.b32.xlu0 %v1824, 64
  %v1827 = vpop.permute.xlu0 %1826
  %v1829 = vsel %vm146, %v1827, 0
  %1831 = vmatprep.subr.bf16.mxu0 0
  %1832 = vmatpush1.bf16.msra.mxu0 0
  %1833 = vmatprep.subr.bf16.mxu0 0
  %1834 = vmatpush1.bf16.msra.mxu0 0
  %1835 = vmatprep.subr.bf16.mxu0 0
  %1836 = vmatpush1.bf16.msra.mxu0 0
  %1837 = vmatprep.subr.bf16.mxu0 0
  %1838 = vmatpush1.bf16.msra.mxu0 0
  %1839 = vmatprep.subr.bf16.mxu0 0
  %1840 = vmatpush1.bf16.msra.mxu0 0
  %1841 = vmatprep.subr.bf16.mxu0 0
  %1842 = vmatpush1.bf16.msra.mxu0 0
  %1843 = vmatprep.subr.bf16.mxu0 0
  %1844 = vmatpush1.bf16.msra.mxu0 %v1417
  %1845 = vmatprep.subr.bf16.mxu0 0
  %1846 = vmatpush1.bf16.msra.mxu0 %v1416
  %1847 = vmatprep.subr.bf16.mxu0 0
  %1848 = vmatpush2.bf16.msra.mxu0 0
  %1849 = vmatprep.subr.bf16.mxu0 0
  %1850 = vmatpush2.bf16.msra.mxu0 0
  %1851 = vmatprep.subr.bf16.mxu0 0
  %1852 = vmatpush2.bf16.msra.mxu0 0
  %1853 = vmatprep.subr.bf16.mxu0 0
  %1854 = vmatpush2.bf16.msra.mxu0 0
  %1855 = vmatprep.subr.bf16.mxu0 0
  %1856 = vmatpush2.bf16.msra.mxu0 0
  %1857 = vmatprep.subr.bf16.mxu0 0
  %1858 = vmatpush2.bf16.msra.mxu0 0
  %1859 = vmatprep.subr.bf16.mxu0 0
  %1860 = vmatpush2.bf16.msra.mxu0 0
  %1861 = vmatprep.subr.bf16.mxu0 0
  %1862 = vmatpush2.bf16.msra.mxu0 0
  %1863 = vmatprep.mubr.bf16.mxu0 0
  %1864 = vmatmul.mubr.bf16.gmra.mxu0 %v1829
  %v1865 = vpop.f32.mrf.mxu0
  %v1866 = vadd.f32 0.0, %v1865
  %v1867 = vpop.f32.mrf.mxu0
  %v1868 = vpop.f32.mrf.mxu0
  %v1869 = vadd.f32 0.0, %v1868
  %v1870 = vpop.f32.mrf.mxu0
  %1871 = vdwg.mxu0
  %v1872 = vadd.f32 %v1822, %v1866
  %v1873 = vadd.f32 %v1823, %v1869
  %v1874 = vxor.u32 %v1872, 2147483648
  %v1875 = vxor.u32 %v1873, 2147483648
  %v1876 = vmul.f32 %v1874, 1.442695
  %v1877 = vpow.pop %v1876
  %v1878 = vmul.f32 %v1875, 1.442695
  %v1879 = vpow.pop %v1878
  %v1880 = vadd.f32 %v1877, 1.0
  %v1881 = vadd.f32 %v1879, 1.0
  %v1882 = vrcp.pop %v1880
  %v1883 = vmul.f32 1.0, %v1882
  %v1884 = vrcp.pop %v1881
  %v1885 = vmul.f32 1.0, %v1884
  %v1886 = vtanh.pop %v1872
  %v1887 = vtanh.pop %v1873
  %v1888 = vmul.f32 %v1883, %v1808
  %v1889 = vmul.f32 %v1885, %v1809
  %1892 = vrot.lane.b32.xlu0 %v1886, 32
  %v1893 = vpop.permute.xlu0 %1892
  %1894 = vrot.lane.b32.xlu0 %v1887, 32
  %v1895 = vpop.permute.xlu0 %1894
  %v1898 = vmul.f32 %v1883, %v1893
  %v1899 = vmul.f32 %v1885, %v1895
  %1902 = vrot.lane.b32.xlu0 %v1898, 32
  %v1903 = vpop.permute.xlu0 %1902
  %1904 = vrot.lane.b32.xlu0 %v1899, 32
  %v1905 = vpop.permute.xlu0 %1904
  %v1908 = vadd.f32 %v1888, %v1903
  %v1909 = vadd.f32 %v1889, %v1905
  %v1910 = vtanh.pop %v1908
  %v1911 = vtanh.pop %v1909
  %1914 = vrot.lane.b32.xlu0 %v1910, 32
  %v1915 = vpop.permute.xlu0 %1914
  %1916 = vrot.lane.b32.xlu0 %v1911, 32
  %v1917 = vpop.permute.xlu0 %1916
  %v1920 = vmul.f32 %v1883, %v1915
  %v1921 = vmul.f32 %v1885, %v1917
  %v1922 = vld [vmem:[%s863] sm:$0xff]
  %v1923 = vld [vmem:[%s863 + $0x8] sm:$0xff]
  %v1924 = vpack.c.bf16 %v1921, %v1920
  %1926 = vrot.lane.b32.xlu0 %v1924, 64
  %v1927 = vpop.permute.xlu0 %1926
  %v1929 = vsel %vm146, %v1927, 0
  %1931 = vmatprep.subr.bf16.mxu0 0
  %1932 = vmatpush1.bf16.msra.mxu0 0
  %1933 = vmatprep.subr.bf16.mxu0 0
  %1934 = vmatpush1.bf16.msra.mxu0 0
  %1935 = vmatprep.subr.bf16.mxu0 0
  %1936 = vmatpush1.bf16.msra.mxu0 0
  %1937 = vmatprep.subr.bf16.mxu0 0
  %1938 = vmatpush1.bf16.msra.mxu0 0
  %1939 = vmatprep.subr.bf16.mxu0 0
  %1940 = vmatpush1.bf16.msra.mxu0 0
  %1941 = vmatprep.subr.bf16.mxu0 0
  %1942 = vmatpush1.bf16.msra.mxu0 0
  %1943 = vmatprep.subr.bf16.mxu0 0
  %1944 = vmatpush1.bf16.msra.mxu0 %v1417
  %1945 = vmatprep.subr.bf16.mxu0 0
  %1946 = vmatpush1.bf16.msra.mxu0 %v1416
  %1947 = vmatprep.subr.bf16.mxu0 0
  %1948 = vmatpush2.bf16.msra.mxu0 0
  %1949 = vmatprep.subr.bf16.mxu0 0
  %1950 = vmatpush2.bf16.msra.mxu0 0
  %1951 = vmatprep.subr.bf16.mxu0 0
  %1952 = vmatpush2.bf16.msra.mxu0 0
  %1953 = vmatprep.subr.bf16.mxu0 0
  %1954 = vmatpush2.bf16.msra.mxu0 0
  %1955 = vmatprep.subr.bf16.mxu0 0
  %1956 = vmatpush2.bf16.msra.mxu0 0
  %1957 = vmatprep.subr.bf16.mxu0 0
  %1958 = vmatpush2.bf16.msra.mxu0 0
  %1959 = vmatprep.subr.bf16.mxu0 0
  %1960 = vmatpush2.bf16.msra.mxu0 0
  %1961 = vmatprep.subr.bf16.mxu0 0
  %1962 = vmatpush2.bf16.msra.mxu0 0
  %1963 = vmatprep.mubr.bf16.mxu0 0
  %1964 = vmatmul.mubr.bf16.gmra.mxu0 %v1929
  %v1965 = vpop.f32.mrf.mxu0
  %v1966 = vadd.f32 0.0, %v1965
  %v1967 = vpop.f32.mrf.mxu0
  %v1968 = vpop.f32.mrf.mxu0
  %v1969 = vadd.f32 0.0, %v1968
  %v1970 = vpop.f32.mrf.mxu0
  %1971 = vdwg.mxu0
  %v1972 = vadd.f32 %v1922, %v1966
  %v1973 = vadd.f32 %v1923, %v1969
  %v1974 = vxor.u32 %v1972, 2147483648
  %v1975 = vxor.u32 %v1973, 2147483648
  %v1976 = vmul.f32 %v1974, 1.442695
  %v1977 = vpow.pop %v1976
  %v1978 = vmul.f32 %v1975, 1.442695
  %v1979 = vpow.pop %v1978
  %v1980 = vadd.f32 %v1977, 1.0
  %v1981 = vadd.f32 %v1979, 1.0
  %v1982 = vrcp.pop %v1980
  %v1983 = vmul.f32 1.0, %v1982
  %v1984 = vrcp.pop %v1981
  %v1985 = vmul.f32 1.0, %v1984
  %v1986 = vtanh.pop %v1972
  %v1987 = vtanh.pop %v1973
  %v1988 = vmul.f32 %v1983, %v1908
  %v1989 = vmul.f32 %v1985, %v1909
  %1992 = vrot.lane.b32.xlu0 %v1986, 32
  %v1993 = vpop.permute.xlu0 %1992
  %1994 = vrot.lane.b32.xlu0 %v1987, 32
  %v1995 = vpop.permute.xlu0 %1994
  %v1998 = vmul.f32 %v1983, %v1993
  %v1999 = vmul.f32 %v1985, %v1995
  %2002 = vrot.lane.b32.xlu0 %v1998, 32
  %v2003 = vpop.permute.xlu0 %2002
  %2004 = vrot.lane.b32.xlu0 %v1999, 32
  %v2005 = vpop.permute.xlu0 %2004
  %v2008 = vadd.f32 %v1988, %v2003
  %v2009 = vadd.f32 %v1989, %v2005
  %v2010 = vtanh.pop %v2008
  %v2011 = vtanh.pop %v2009
  %2014 = vrot.lane.b32.xlu0 %v2010, 32
  %v2015 = vpop.permute.xlu0 %2014
  %2016 = vrot.lane.b32.xlu0 %v2011, 32
  %v2017 = vpop.permute.xlu0 %2016
  %v2020 = vmul.f32 %v1983, %v2015
  %v2021 = vmul.f32 %v1985, %v2017
  %v2022 = vld [vmem:[%s975] sm:$0xff]
  %v2023 = vld [vmem:[%s975 + $0x8] sm:$0xff]
  %v2024 = vpack.c.bf16 %v2021, %v2020
  %2026 = vrot.lane.b32.xlu0 %v2024, 64
  %v2027 = vpop.permute.xlu0 %2026
  %v2029 = vsel %vm146, %v2027, 0
  %2031 = vmatprep.subr.bf16.mxu0 0
  %2032 = vmatpush1.bf16.msra.mxu0 0
  %2033 = vmatprep.subr.bf16.mxu0 0
  %2034 = vmatpush1.bf16.msra.mxu0 0
  %2035 = vmatprep.subr.bf16.mxu0 0
  %2036 = vmatpush1.bf16.msra.mxu0 0
  %2037 = vmatprep.subr.bf16.mxu0 0
  %2038 = vmatpush1.bf16.msra.mxu0 0
  %2039 = vmatprep.subr.bf16.mxu0 0
  %2040 = vmatpush1.bf16.msra.mxu0 0
  %2041 = vmatprep.subr.bf16.mxu0 0
  %2042 = vmatpush1.bf16.msra.mxu0 0
  %2043 = vmatprep.subr.bf16.mxu0 0
  %2044 = vmatpush1.bf16.msra.mxu0 %v1417
  %2045 = vmatprep.subr.bf16.mxu0 0
  %2046 = vmatpush1.bf16.msra.mxu0 %v1416
  %2047 = vmatprep.subr.bf16.mxu0 0
  %2048 = vmatpush2.bf16.msra.mxu0 0
  %2049 = vmatprep.subr.bf16.mxu0 0
  %2050 = vmatpush2.bf16.msra.mxu0 0
  %2051 = vmatprep.subr.bf16.mxu0 0
  %2052 = vmatpush2.bf16.msra.mxu0 0
  %2053 = vmatprep.subr.bf16.mxu0 0
  %2054 = vmatpush2.bf16.msra.mxu0 0
  %2055 = vmatprep.subr.bf16.mxu0 0
  %2056 = vmatpush2.bf16.msra.mxu0 0
  %2057 = vmatprep.subr.bf16.mxu0 0
  %2058 = vmatpush2.bf16.msra.mxu0 0
  %2059 = vmatprep.subr.bf16.mxu0 0
  %2060 = vmatpush2.bf16.msra.mxu0 0
  %2061 = vmatprep.subr.bf16.mxu0 0
  %2062 = vmatpush2.bf16.msra.mxu0 0
  %2063 = vmatprep.mubr.bf16.mxu0 0
  %2064 = vmatmul.mubr.bf16.gmra.mxu0 %v2029
  %v2065 = vpop.f32.mrf.mxu0
  %v2066 = vadd.f32 0.0, %v2065
  %v2067 = vpop.f32.mrf.mxu0
  %v2068 = vpop.f32.mrf.mxu0
  %v2069 = vadd.f32 0.0, %v2068
  %v2070 = vpop.f32.mrf.mxu0
  %2071 = vdwg.mxu0
  %v2072 = vadd.f32 %v2022, %v2066
  %v2073 = vadd.f32 %v2023, %v2069
  %v2074 = vxor.u32 %v2072, 2147483648
  %v2075 = vxor.u32 %v2073, 2147483648
  %v2076 = vmul.f32 %v2074, 1.442695
  %v2077 = vpow.pop %v2076
  %v2078 = vmul.f32 %v2075, 1.442695
  %v2079 = vpow.pop %v2078
  %v2080 = vadd.f32 %v2077, 1.0
  %v2081 = vadd.f32 %v2079, 1.0
  %v2082 = vrcp.pop %v2080
  %v2083 = vmul.f32 1.0, %v2082
  %v2084 = vrcp.pop %v2081
  %v2085 = vmul.f32 1.0, %v2084
  %v2086 = vtanh.pop %v2072
  %v2087 = vtanh.pop %v2073
  %v2088 = vmul.f32 %v2083, %v2008
  %v2089 = vmul.f32 %v2085, %v2009
  %2092 = vrot.lane.b32.xlu0 %v2086, 32
  %v2093 = vpop.permute.xlu0 %2092
  %2094 = vrot.lane.b32.xlu0 %v2087, 32
  %v2095 = vpop.permute.xlu0 %2094
  %v2098 = vmul.f32 %v2083, %v2093
  %v2099 = vmul.f32 %v2085, %v2095
  %2102 = vrot.lane.b32.xlu0 %v2098, 32
  %v2103 = vpop.permute.xlu0 %2102
  %2104 = vrot.lane.b32.xlu0 %v2099, 32
  %v2105 = vpop.permute.xlu0 %2104
  %v2108 = vadd.f32 %v2088, %v2103
  %v2109 = vadd.f32 %v2089, %v2105
  %v2110 = vtanh.pop %v2108
  %v2111 = vtanh.pop %v2109
  %2114 = vrot.lane.b32.xlu0 %v2110, 32
  %v2115 = vpop.permute.xlu0 %2114
  %2116 = vrot.lane.b32.xlu0 %v2111, 32
  %v2117 = vpop.permute.xlu0 %2116
  %v2120 = vmul.f32 %v2083, %v2115
  %v2121 = vmul.f32 %v2085, %v2117
  %v2122 = vld [vmem:[%s1087] sm:$0xff]
  %v2123 = vld [vmem:[%s1087 + $0x8] sm:$0xff]
  %v2124 = vpack.c.bf16 %v2121, %v2120
  %2126 = vrot.lane.b32.xlu0 %v2124, 64
  %v2127 = vpop.permute.xlu0 %2126
  %v2129 = vsel %vm146, %v2127, 0
  %2131 = vmatprep.subr.bf16.mxu0 0
  %2132 = vmatpush1.bf16.msra.mxu0 0
  %2133 = vmatprep.subr.bf16.mxu0 0
  %2134 = vmatpush1.bf16.msra.mxu0 0
  %2135 = vmatprep.subr.bf16.mxu0 0
  %2136 = vmatpush1.bf16.msra.mxu0 0
  %2137 = vmatprep.subr.bf16.mxu0 0
  %2138 = vmatpush1.bf16.msra.mxu0 0
  %2139 = vmatprep.subr.bf16.mxu0 0
  %2140 = vmatpush1.bf16.msra.mxu0 0
  %2141 = vmatprep.subr.bf16.mxu0 0
  %2142 = vmatpush1.bf16.msra.mxu0 0
  %2143 = vmatprep.subr.bf16.mxu0 0
  %2144 = vmatpush1.bf16.msra.mxu0 %v1417
  %2145 = vmatprep.subr.bf16.mxu0 0
  %2146 = vmatpush1.bf16.msra.mxu0 %v1416
  %2147 = vmatprep.subr.bf16.mxu0 0
  %2148 = vmatpush2.bf16.msra.mxu0 0
  %2149 = vmatprep.subr.bf16.mxu0 0
  %2150 = vmatpush2.bf16.msra.mxu0 0
  %2151 = vmatprep.subr.bf16.mxu0 0
  %2152 = vmatpush2.bf16.msra.mxu0 0
  %2153 = vmatprep.subr.bf16.mxu0 0
  %2154 = vmatpush2.bf16.msra.mxu0 0
  %2155 = vmatprep.subr.bf16.mxu0 0
  %2156 = vmatpush2.bf16.msra.mxu0 0
  %2157 = vmatprep.subr.bf16.mxu0 0
  %2158 = vmatpush2.bf16.msra.mxu0 0
  %2159 = vmatprep.subr.bf16.mxu0 0
  %2160 = vmatpush2.bf16.msra.mxu0 0
  %2161 = vmatprep.subr.bf16.mxu0 0
  %2162 = vmatpush2.bf16.msra.mxu0 0
  %2163 = vmatprep.mubr.bf16.mxu0 0
  %2164 = vmatmul.mubr.bf16.gmra.mxu0 %v2129
  %v2165 = vpop.f32.mrf.mxu0
  %v2166 = vadd.f32 0.0, %v2165
  %v2167 = vpop.f32.mrf.mxu0
  %v2168 = vpop.f32.mrf.mxu0
  %v2169 = vadd.f32 0.0, %v2168
  %v2170 = vpop.f32.mrf.mxu0
  %2171 = vdwg.mxu0
  %v2172 = vadd.f32 %v2122, %v2166
  %v2173 = vadd.f32 %v2123, %v2169
  %v2174 = vxor.u32 %v2172, 2147483648
  %v2175 = vxor.u32 %v2173, 2147483648
  %v2176 = vmul.f32 %v2174, 1.442695
  %v2177 = vpow.pop %v2176
  %v2178 = vmul.f32 %v2175, 1.442695
  %v2179 = vpow.pop %v2178
  %v2180 = vadd.f32 %v2177, 1.0
  %v2181 = vadd.f32 %v2179, 1.0
  %v2182 = vrcp.pop %v2180
  %v2183 = vmul.f32 1.0, %v2182
  %v2184 = vrcp.pop %v2181
  %v2185 = vmul.f32 1.0, %v2184
  %v2186 = vtanh.pop %v2172
  %v2187 = vtanh.pop %v2173
  %v2188 = vmul.f32 %v2183, %v2108
  %v2189 = vmul.f32 %v2185, %v2109
  %2192 = vrot.lane.b32.xlu0 %v2186, 32
  %v2193 = vpop.permute.xlu0 %2192
  %2194 = vrot.lane.b32.xlu0 %v2187, 32
  %v2195 = vpop.permute.xlu0 %2194
  %v2198 = vmul.f32 %v2183, %v2193
  %v2199 = vmul.f32 %v2185, %v2195
  %2202 = vrot.lane.b32.xlu0 %v2198, 32
  %v2203 = vpop.permute.xlu0 %2202
  %2204 = vrot.lane.b32.xlu0 %v2199, 32
  %v2205 = vpop.permute.xlu0 %2204
  %v2208 = vadd.f32 %v2188, %v2203
  %v2209 = vadd.f32 %v2189, %v2205
  %v2210 = vtanh.pop %v2208
  %v2211 = vtanh.pop %v2209
  %2214 = vrot.lane.b32.xlu0 %v2210, 32
  %v2215 = vpop.permute.xlu0 %2214
  %2216 = vrot.lane.b32.xlu0 %v2211, 32
  %v2217 = vpop.permute.xlu0 %2216
  %v2220 = vmul.f32 %v2183, %v2215
  %v2221 = vmul.f32 %v2185, %v2217
  %2224 = vrot.lane.b32.xlu0 %v2220, 64
  %v2225 = vpop.permute.xlu0 %2224
  %2226 = vrot.lane.b32.xlu0 %v2221, 64
  %v2227 = vpop.permute.xlu0 %2226
  %2230 = vst.msk [vmem:[%s1399] sm:$0xff] %vm146, %v2225
  %2231 = vst.msk [vmem:[%s1399 + $0x8] sm:$0xff] %vm146, %v2227
  %2234 = vrot.lane.b32.xlu0 %v2208, 96
  %v2235 = vpop.permute.xlu0 %2234
  %2236 = vrot.lane.b32.xlu0 %v2209, 96
  %v2237 = vpop.permute.xlu0 %2236
  %2240 = vst.msk [vmem:[%s1402] sm:$0xff] %vm146, %v2235
  %2241 = vst.msk [vmem:[%s1402 + $0x8] sm:$0xff] %vm146, %v2237
  // Predicated region
  $region50: #{sentiment_rnn_forward.1} parent=0 // pred_check
    %p2242 = pneg %p42
  $region51: #{sentiment_rnn_forward.1} parent=0 // pred_check_branch
    %2244 = sbr.rel (%p2242) target = $region53
  $region52: #{sentiment_rnn_forward.1} parent=0 // pred_region
    %v2245 = vld [vmem:[#allocation2] sm:$0xff]
    %v2246 = vld [vmem:[#allocation2 + $0x8] sm:$0xff]
    %v2247 = vld [vmem:[#allocation2 + $0x10] sm:$0xff]
    %v2248 = vld [vmem:[#allocation2 + $0x18] sm:$0xff]
    %2249 = vst.msk [vmem:[%s12] sm:$0xff] %vm146, %v2245
    %2250 = vst.msk [vmem:[%s12 + $0x8] sm:$0xff] %vm146, %v2246
    %2251 = vst.msk [vmem:[%s12 + $0x10] sm:$0xff] %vm146, %v2247
    %2252 = vst.msk [vmem:[%s12 + $0x18] sm:$0xff] %vm146, %v2248
    %v2253 = vld [vmem:[#allocation3] sm:$0xff]
    %v2254 = vld [vmem:[#allocation3 + $0x8] sm:$0xff]
    %v2255 = vld [vmem:[#allocation3 + $0x10] sm:$0xff]
    %v2256 = vld [vmem:[#allocation3 + $0x18] sm:$0xff]
    %2257 = vst.msk [vmem:[%s13] sm:$0xff] %vm146, %v2253
    %2258 = vst.msk [vmem:[%s13 + $0x8] sm:$0xff] %vm146, %v2254
    %2259 = vst.msk [vmem:[%s13 + $0x10] sm:$0xff] %vm146, %v2255
    %2260 = vst.msk [vmem:[%s13 + $0x18] sm:$0xff] %vm146, %v2256
    %v2261 = vld [vmem:[%s1399] sm:$0xff]
    %v2262 = vld [vmem:[%s1399 + $0x8] sm:$0xff]
    %v2263 = vpack.c.bf16 %v2262, %v2261
    %v2264 = vld [vmem:[%s9] sm:$0xf]
    %v2265 = vld [vmem:[%s9 + $0x4] sm:$0xf]
    %v2266 = vld [vmem:[%s9 + $0x8] sm:$0xf]
    %v2267 = vld [vmem:[%s9 + $0xc] sm:$0xf]
    %v2268 = vld [vmem:[%s10] sm:$0x1]
    %v2270 = vlaneseq
    %v2271 = vshrl.u32 %v2270, 7
    %v2272 = vsub.s32 0, %v2271
    %v2273 = vrot.slane %v2268, %v2272
    %v2279 = vunpack.c.l.b16 %v2264
    %v2280 = vunpack.c.l.b16 %v2265
    %v2281 = vunpack.c.l.b16 %v2266
    %v2282 = vunpack.c.l.b16 %v2267
    %v2283 = vpack.c.b16 %v2280, %v2279
    %v2284 = vpack.c.b16 %v2282, %v2281
    %v2288 = vsel %vm146, %v2263, 0
    %2290 = vmatprep.subr.bf16.mxu0 0
    %2291 = vmatpush1.bf16.msra.mxu0 0
    %2292 = vmatprep.subr.bf16.mxu0 0
    %2293 = vmatpush1.bf16.msra.mxu0 0
    %2294 = vmatprep.subr.bf16.mxu0 0
    %2295 = vmatpush1.bf16.msra.mxu0 0
    %2296 = vmatprep.subr.bf16.mxu0 0
    %2297 = vmatpush1.bf16.msra.mxu0 0
    %2298 = vmatprep.subr.bf16.mxu0 0
    %2299 = vmatpush1.bf16.msra.mxu0 0
    %2300 = vmatprep.subr.bf16.mxu0 0
    %2301 = vmatpush1.bf16.msra.mxu0 0
    %2302 = vmatprep.subr.bf16.mxu0 0
    %2303 = vmatpush1.bf16.msra.mxu0 %v2284
    %2304 = vmatprep.subr.bf16.mxu0 0
    %2305 = vmatpush1.bf16.msra.mxu0 %v2283
    %2306 = vmatprep.subr.bf16.mxu0 0
    %2307 = vmatpush2.bf16.msra.mxu0 0
    %2308 = vmatprep.subr.bf16.mxu0 0
    %2309 = vmatpush2.bf16.msra.mxu0 0
    %2310 = vmatprep.subr.bf16.mxu0 0
    %2311 = vmatpush2.bf16.msra.mxu0 0
    %2312 = vmatprep.subr.bf16.mxu0 0
    %2313 = vmatpush2.bf16.msra.mxu0 0
    %2314 = vmatprep.subr.bf16.mxu0 0
    %2315 = vmatpush2.bf16.msra.mxu0 0
    %2316 = vmatprep.subr.bf16.mxu0 0
    %2317 = vmatpush2.bf16.msra.mxu0 0
    %2318 = vmatprep.subr.bf16.mxu0 0
    %2319 = vmatpush2.bf16.msra.mxu0 0
    %2320 = vmatprep.subr.bf16.mxu0 0
    %2321 = vmatpush2.bf16.msra.mxu0 0
    %2322 = vmatprep.mubr.bf16.mxu0 0
    %2323 = vmatmul.mubr.bf16.gmra.mxu0 %v2288
    %v2324 = vpop.f32.mrf.mxu0
    %v2325 = vadd.f32 %v2273, %v2324
    %v2326 = vpop.f32.mrf.mxu0
    %v2327 = vpop.f32.mrf.mxu0
    %v2328 = vadd.f32 %v2273, %v2327
    %v2329 = vpop.f32.mrf.mxu0
    %2330 = vdwg.mxu0
    %v2331 = vxor.u32 %v2325, 2147483648
    %v2332 = vxor.u32 %v2328, 2147483648
    %v2333 = vmul.f32 %v2331, 1.442695
    %v2334 = vpow.pop %v2333
    %v2335 = vmul.f32 %v2332, 1.442695
    %v2336 = vpow.pop %v2335
    %v2337 = vadd.f32 %v2334, 1.0
    %v2338 = vadd.f32 %v2336, 1.0
    %v2339 = vrcp.pop %v2337
    %v2340 = vmul.f32 1.0, %v2339
    %v2341 = vrcp.pop %v2338
    %v2342 = vmul.f32 1.0, %v2341
    %2343 = vst [vmem:[%s11] sm:$0xff] %v2340
    %2344 = vst [vmem:[%s11 + $0x8] sm:$0xff] %v2342
  $region53: #{sentiment_rnn_forward.1} parent=0 // pred_fallthru
    _
  // Predicated region
  $region54: #{sentiment_rnn_forward.1} parent=0 // pred_check
    _
  $region55: #{sentiment_rnn_forward.1} parent=0 // pred_check_branch
    %2346 = sbr.rel (0) target = $region57
  $region56: #{sentiment_rnn_forward.1} parent=0 // pred_region
    _
  $region57: #{sentiment_rnn_forward.1} parent=0 // pred_fallthru
    _
  // Predicated region
  $region58: #{sentiment_rnn_forward.1} parent=0 // pred_check
    _
  $region59: #{sentiment_rnn_forward.1} parent=0 // pred_check_branch
    %2348 = sbr.rel (0) target = $region61
  $region60: #{sentiment_rnn_forward.1} parent=0 // pred_region
    _
  $region61: #{sentiment_rnn_forward.1} parent=0 // pred_fallthru
    _
  // Predicated region
  $region62: #{sentiment_rnn_forward.1} parent=0 // pred_check
    _
  $region63: #{sentiment_rnn_forward.1} parent=0 // pred_check_branch
    %2350 = sbr.rel (0) target = $region65
  $region64: #{sentiment_rnn_forward.1} parent=0 // pred_region
    _
  $region65: #{sentiment_rnn_forward.1} parent=0 // pred_fallthru
    _
  // Predicated region
  $region66: #{sentiment_rnn_forward.1} parent=0 // pred_check
    _
  $region67: #{sentiment_rnn_forward.1} parent=0 // pred_check_branch
    %2352 = sbr.rel (0) target = $region69
  $region68: #{sentiment_rnn_forward.1} parent=0 // pred_region
    _
  $region69: #{sentiment_rnn_forward.1} parent=0 // pred_fallthru
    _
  // Predicated region
  $region70: #{sentiment_rnn_forward.1} parent=0 // pred_check
    _
  $region71: #{sentiment_rnn_forward.1} parent=0 // pred_check_branch
    %2354 = sbr.rel (0) target = $region73
  $region72: #{sentiment_rnn_forward.1} parent=0 // pred_region
    _
  $region73: #{sentiment_rnn_forward.1} parent=0 // pred_fallthru
    _
  // Predicated region
  $region74: #{sentiment_rnn_forward.1} parent=0 // pred_check
    _
  $region75: #{sentiment_rnn_forward.1} parent=0 // pred_check_branch
    %2356 = sbr.rel (0) target = $region77
  $region76: #{sentiment_rnn_forward.1} parent=0 // pred_region
    _
  $region77: #{sentiment_rnn_forward.1} parent=0 // pred_fallthru
    _

</llo_original>
